<compile_context>
chip_gen: v5e
topology: v5e:2x2
jax: 0.10.0
libtpu: 0.0.40
codegen_flags: <defaults>
</compile_context>

<pallas_src>
import jax
import jax.numpy as jnp
from jax.experimental import pallas as pl
from jax.experimental.pallas import tpu as pltpu


def _cdiv(a, b):
    return (a + b - 1) // b


def _round_up(n, m):
    return ((n + m - 1) // m) * m


def _elu(v):
    # F.elu with alpha=1.0: v if v > 0 else exp(v) - 1.
    return jnp.where(v > 0, v, jnp.exp(v) - 1.0)


def decoder_fc_kernel(x_ref,
                      w1_ref, b1_ref,
                      w2_ref, b2_ref,
                      w3_ref, b3_ref,
                      w4_ref, b4_ref,
                      o_ref):
    # Layers 1-3: MXU matmuls with f32 accumulation, ELU on VPU/EUP.
    h = jnp.dot(x_ref[...], w1_ref[...],
                preferred_element_type=jnp.float32) + b1_ref[...]
    h = _elu(h)
    h = jnp.dot(h.astype(w2_ref.dtype), w2_ref[...],
                preferred_element_type=jnp.float32) + b2_ref[...]
    h = _elu(h)
    h = jnp.dot(h.astype(w3_ref.dtype), w3_ref[...],
                preferred_element_type=jnp.float32) + b3_ref[...]
    h = _elu(h)
    # Layer 4 (out_dim == 1): an N=1 MXU matmul would waste a full MXU pass for
    # one column, so do a VPU multiply + lane reduction instead.
    # w4_ref is a (1, 64) f32 row, b4_ref is (1, 1).
    logit = jnp.sum(h * w4_ref[...], axis=-1, keepdims=True) + b4_ref[...]
    # Sigmoid (output_dim == 1).  Store the (TB, 1) column directly: 4 B/row of
    # HBM writeback instead of a 128-lane replicated slab.
    o_ref[...] = 1.0 / (1.0 + jnp.exp(-logit))


def decoder_fc(x, params, *, compute_dtype=jnp.bfloat16, max_batch_tile=1024):
    """Fused DecoderFC forward (eval mode: dropout = identity).

    x: (B, input_dim). params: w1..w3 as (in, out), b1..b3 as (1, out),
    w4 as (64, 1), b4 as (1, 1).
    compute_dtype: dtype for x / w1..w3 on the MXU (default bf16); accumulation,
    biases and layer 4 stay f32.  Pass jnp.float32 for the full-accuracy path.
    """
    B, in_dim = x.shape
    cd = jnp.dtype(compute_dtype)
    itemsize = cd.itemsize
    # Sublane multiple for the packed compute dtype (keeps vld/vst unmasked).
    sublane_mult = {4: 8, 2: 16, 1: 32}.get(itemsize, 8)

    # --- Batch tiling: derive tb from B. ---------------------------------
    # Target 512-1024 rows per step (amortizes the ~0.35us per-grid-step
    # overhead and reaches ~85% of HBM roofline), but keep >=2 (even) grid
    # steps whenever B >= 256 so the "parallel" batch axis can feed both
    # TensorCores on v7x; pad B only up to the derived tile multiple.
    if B < 2 * 128:
        n_steps = 1
    else:
        n_steps = max(2, _cdiv(B, max_batch_tile))
        if n_steps % 2:
            n_steps += 1          # even step count: balanced megacore split
    tb = _round_up(_cdiv(B, n_steps), sublane_mult)
    b_pad = tb * n_steps
    if b_pad != B:
        x = jnp.pad(x, ((0, b_pad - B), (0, 0)))

    x_in = x.astype(cd)
    w1 = params["w1"].astype(cd)
    w2 = params["w2"].astype(cd)
    w3 = params["w3"].astype(cd)
    b1 = params["b1"].astype(jnp.float32)
    b2 = params["b2"].astype(jnp.float32)
    b3 = params["b3"].astype(jnp.float32)
    # Final layer is tiny: keep it f32 and reshape to a (1, 64) row for the
    # in-kernel VPU reduction.
    w4_row = params["w4"].reshape(1, -1).astype(jnp.float32)
    b4 = params["b4"].reshape(1, 1).astype(jnp.float32)

    h1, h2, h3 = w1.shape[1], w2.shape[1], w3.shape[1]
    grid = (n_steps,)

    def const(shape):
        # Same block every grid step -> array stays resident in VMEM.
        return pl.BlockSpec(shape, lambda i: (0,) * len(shape))

    # --- VMEM budget scaled with tile size / dtype. -----------------------
    weight_bytes = ((w1.size + w2.size + w3.size) * itemsize
                    + (b1.size + b2.size + b3.size
                       + w4_row.size + b4.size) * 4)
    vmem_bytes = (
        2 * tb * in_dim * itemsize        # double-buffered x tiles
        + 2 * weight_bytes                # resident weights (worst case 2x)
        + 2 * tb * 128 * 4                # (tb,1) out blocks, lane-padded, 2x
        + 3 * tb * max(h1, h2) * 4        # f32 activation / spill headroom
        + (4 << 20))                      # compiler scratch slack
    vmem_limit = min(max(_round_up(vmem_bytes, 1 << 20), 16 << 20), 48 << 20)

    cost = pl.CostEstimate(
        flops=2 * b_pad * (in_dim * h1 + h1 * h2 + h2 * h3 + h3),
        transcendentals=b_pad * (h1 + h2 + h3 + 1),
        bytes_accessed=(b_pad * in_dim * itemsize
                        + weight_bytes
                        + b_pad * 4),
    )

    out = pl.pallas_call(
        decoder_fc_kernel,
        out_shape=jax.ShapeDtypeStruct((b_pad, 1), jnp.float32),
        grid=grid,
        in_specs=[
            pl.BlockSpec((tb, in_dim), lambda i: (i, 0)),   # batch-tiled input
            const(w1.shape), const(b1.shape),
            const(w2.shape), const(b2.shape),
            const(w3.shape), const(b3.shape),
            const(w4_row.shape), const(b4.shape),
        ],
        out_specs=pl.BlockSpec((tb, 1), lambda i: (i, 0)),
        compiler_params=pltpu.CompilerParams(
            # Batch tiles are independent -> shard across v7x's 2 TensorCores.
            dimension_semantics=("parallel",),
            vmem_limit_bytes=int(vmem_limit),
        ),
        cost_estimate=cost,
    )(x_in, w1, b1, w2, b2, w3, b3, w4_row, b4)

    # Slice real batch rows back out (output is already a single column).
    return out[:B]


def init_params(key, input_dim=3 * 512, layer_nodes=(256, 256, 64), output_dim=1):
    """Deterministic init mimicking nn.Linear's U(-1/sqrt(fan_in), 1/sqrt(fan_in)).

    Weights stored transposed as (in_dim, out_dim); biases as (1, out_dim)."""
    dims = [input_dim, *layer_nodes, output_dim]
    params = {}
    for i in range(4):
        fan_in, fan_out = dims[i], dims[i + 1]
        key, kw, kb = jax.random.split(key, 3)
        bound = 1.0 / jnp.sqrt(float(fan_in))
        params[f"w{i+1}"] = jax.random.uniform(
            kw, (fan_in, fan_out), jnp.float32, -bound, bound)
        params[f"b{i+1}"] = jax.random.uniform(
            kb, (1, fan_out), jnp.float32, -bound, bound)
    return params


def decoder_fc_ref(x, params):
    """Pure-JAX reference of the same forward pass (dropout = identity)."""
    h = x
    for i in (1, 2, 3):
        h = h @ params[f"w{i}"] + params[f"b{i}"]
        h = jax.nn.elu(h)
    logit = jnp.sum(h * params["w4"].reshape(1, -1), axis=-1, keepdims=True)
    logit = logit + params["b4"].reshape(1, 1)
    return jax.nn.sigmoid(logit)


if __name__ == "__main__":
    key = jax.random.PRNGKey(0)
    k_params, k_x = jax.random.split(key)

    input_dim = 3 * 512          # module default: 1536
    batch = 300                  # not a tile multiple: exercises padding + 2-step grid

    params = init_params(k_params, input_dim=input_dim)
    x = jax.random.normal(k_x, (batch, input_dim), jnp.float32)
    ref = decoder_fc_ref(x, params)

    # Default bf16 compute path (half the DMA bytes / 2x MXU rate): loose tol.
    out_bf16 = jax.block_until_ready(decoder_fc(x, params))
    assert out_bf16.shape == (batch, 1)
    assert jnp.allclose(out_bf16, ref, atol=2e-2), "bf16 mismatch vs reference"

    # Explicit f32 accuracy path: must match the pure-JAX reference tightly.
    out_f32 = jax.block_until_ready(
        decoder_fc(x, params, compute_dtype=jnp.float32))
    assert out_f32.shape == (batch, 1)
    assert jnp.allclose(out_f32, ref, atol=2e-5, rtol=2e-5), "f32 mismatch vs reference"

    print("KERNEL_OK")
</pallas_src>

<mosaic_0001>
module attributes {stable_mosaic.version = 11 : i64} {
  func.func @decoder_fc_kernel(%arg0: i32, %arg1: memref<160x1536xbf16, #tpu.memory_space<vmem>>, %arg2: memref<1536x256xbf16, #tpu.memory_space<vmem>>, %arg3: memref<1x256xf32, #tpu.memory_space<vmem>>, %arg4: memref<256x256xbf16, #tpu.memory_space<vmem>>, %arg5: memref<1x256xf32, #tpu.memory_space<vmem>>, %arg6: memref<256x64xbf16, #tpu.memory_space<vmem>>, %arg7: memref<1x64xf32, #tpu.memory_space<vmem>>, %arg8: memref<1x64xf32, #tpu.memory_space<vmem>>, %arg9: memref<1x1xf32, #tpu.memory_space<vmem>>, %arg10: memref<160x1xf32, #tpu.memory_space<vmem>>) attributes {dimension_semantics = [#tpu.dimension_semantics<parallel>], iteration_bounds = array<i64: 2>, scalar_prefetch = 0 : i64, scratch_operands = 0 : i64, tpu.core_type = #tpu.core_type<tc>, window_params = [{transform_indices = @transform_0, window_bounds = array<i64: 160, 1536>}, {pipeline_mode = #tpu.pipeline_mode<synchronous>, transform_indices = @transform_1, window_bounds = array<i64: 1536, 256>}, {pipeline_mode = #tpu.pipeline_mode<synchronous>, transform_indices = @transform_2, window_bounds = array<i64: 1, 256>}, {pipeline_mode = #tpu.pipeline_mode<synchronous>, transform_indices = @transform_3, window_bounds = array<i64: 256, 256>}, {pipeline_mode = #tpu.pipeline_mode<synchronous>, transform_indices = @transform_4, window_bounds = array<i64: 1, 256>}, {pipeline_mode = #tpu.pipeline_mode<synchronous>, transform_indices = @transform_5, window_bounds = array<i64: 256, 64>}, {pipeline_mode = #tpu.pipeline_mode<synchronous>, transform_indices = @transform_6, window_bounds = array<i64: 1, 64>}, {pipeline_mode = #tpu.pipeline_mode<synchronous>, transform_indices = @transform_7, window_bounds = array<i64: 1, 64>}, {pipeline_mode = #tpu.pipeline_mode<synchronous>, transform_indices = @transform_8, window_bounds = array<i64: 1, 1>}, {transform_indices = @transform_9, window_bounds = array<i64: 160, 1>}]} {
    %c0 = arith.constant 0 : index
    %c0_0 = arith.constant 0 : index
    %0 = vector.load %arg1[%c0, %c0_0] : memref<160x1536xbf16, #tpu.memory_space<vmem>>, vector<160x1536xbf16>
    %c0_1 = arith.constant 0 : index
    %c0_2 = arith.constant 0 : index
    %1 = vector.load %arg2[%c0_1, %c0_2] : memref<1536x256xbf16, #tpu.memory_space<vmem>>, vector<1536x256xbf16>
    %cst = arith.constant dense<0.000000e+00> : vector<160x256xf32>
    %2 = tpu.matmul %0, %1, %cst {dimension_numbers = #tpu.dot_dimension_numbers<[1], [0], [0], [1], [0, 0, 1, 1], [], []>} : vector<160x1536xbf16>, vector<1536x256xbf16>, vector<160x256xf32> -> vector<160x256xf32>
    %c0_3 = arith.constant 0 : index
    %c0_4 = arith.constant 0 : index
    %3 = vector.load %arg3[%c0_3, %c0_4] : memref<1x256xf32, #tpu.memory_space<vmem>>, vector<1x256xf32>
    %4 = vector.broadcast %3 : vector<1x256xf32> to vector<160x256xf32>
    %5 = arith.addf %2, %4 : vector<160x256xf32>
    %cst_5 = arith.constant 0.000000e+00 : f32
    %6 = vector.broadcast %cst_5 : f32 to vector<160x256xf32>
    %7 = arith.cmpf ogt, %5, %6 : vector<160x256xf32>
    %8 = math.exp %5 : vector<160x256xf32>
    %cst_6 = arith.constant 1.000000e+00 : f32
    %9 = vector.broadcast %cst_6 : f32 to vector<160x256xf32>
    %10 = arith.subf %8, %9 : vector<160x256xf32>
    %11 = arith.select %7, %5, %10 : vector<160x256xi1>, vector<160x256xf32>
    %12 = arith.truncf %11 : vector<160x256xf32> to vector<160x256xbf16>
    %c0_7 = arith.constant 0 : index
    %c0_8 = arith.constant 0 : index
    %13 = vector.load %arg4[%c0_7, %c0_8] : memref<256x256xbf16, #tpu.memory_space<vmem>>, vector<256x256xbf16>
    %cst_9 = arith.constant dense<0.000000e+00> : vector<160x256xf32>
    %14 = tpu.matmul %12, %13, %cst_9 {dimension_numbers = #tpu.dot_dimension_numbers<[1], [0], [0], [1], [0, 0, 1, 1], [], []>} : vector<160x256xbf16>, vector<256x256xbf16>, vector<160x256xf32> -> vector<160x256xf32>
    %c0_10 = arith.constant 0 : index
    %c0_11 = arith.constant 0 : index
    %15 = vector.load %arg5[%c0_10, %c0_11] : memref<1x256xf32, #tpu.memory_space<vmem>>, vector<1x256xf32>
    %16 = vector.broadcast %15 : vector<1x256xf32> to vector<160x256xf32>
    %17 = arith.addf %14, %16 : vector<160x256xf32>
    %cst_12 = arith.constant 0.000000e+00 : f32
    %18 = vector.broadcast %cst_12 : f32 to vector<160x256xf32>
    %19 = arith.cmpf ogt, %17, %18 : vector<160x256xf32>
    %20 = math.exp %17 : vector<160x256xf32>
    %cst_13 = arith.constant 1.000000e+00 : f32
    %21 = vector.broadcast %cst_13 : f32 to vector<160x256xf32>
    %22 = arith.subf %20, %21 : vector<160x256xf32>
    %23 = arith.select %19, %17, %22 : vector<160x256xi1>, vector<160x256xf32>
    %24 = arith.truncf %23 : vector<160x256xf32> to vector<160x256xbf16>
    %c0_14 = arith.constant 0 : index
    %c0_15 = arith.constant 0 : index
    %25 = vector.load %arg6[%c0_14, %c0_15] : memref<256x64xbf16, #tpu.memory_space<vmem>>, vector<256x64xbf16>
    %cst_16 = arith.constant dense<0.000000e+00> : vector<160x64xf32>
    %26 = tpu.matmul %24, %25, %cst_16 {dimension_numbers = #tpu.dot_dimension_numbers<[1], [0], [0], [1], [0, 0, 1, 1], [], []>} : vector<160x256xbf16>, vector<256x64xbf16>, vector<160x64xf32> -> vector<160x64xf32>
    %c0_17 = arith.constant 0 : index
    %c0_18 = arith.constant 0 : index
    %27 = vector.load %arg7[%c0_17, %c0_18] : memref<1x64xf32, #tpu.memory_space<vmem>>, vector<1x64xf32>
    %28 = vector.broadcast %27 : vector<1x64xf32> to vector<160x64xf32>
    %29 = arith.addf %26, %28 : vector<160x64xf32>
    %cst_19 = arith.constant 0.000000e+00 : f32
    %30 = vector.broadcast %cst_19 : f32 to vector<160x64xf32>
    %31 = arith.cmpf ogt, %29, %30 : vector<160x64xf32>
    %32 = math.exp %29 : vector<160x64xf32>
    %cst_20 = arith.constant 1.000000e+00 : f32
    %33 = vector.broadcast %cst_20 : f32 to vector<160x64xf32>
    %34 = arith.subf %32, %33 : vector<160x64xf32>
    %35 = arith.select %31, %29, %34 : vector<160x64xi1>, vector<160x64xf32>
    %c0_21 = arith.constant 0 : index
    %c0_22 = arith.constant 0 : index
    %36 = vector.load %arg8[%c0_21, %c0_22] : memref<1x64xf32, #tpu.memory_space<vmem>>, vector<1x64xf32>
    %37 = vector.broadcast %36 : vector<1x64xf32> to vector<160x64xf32>
    %38 = arith.mulf %35, %37 : vector<160x64xf32>
    %cst_23 = arith.constant dense<0.000000e+00> : vector<160xf32>
    %39 = vector.multi_reduction <add>, %38, %cst_23 [1] : vector<160x64xf32> to vector<160xf32>
    %40 = vector.shape_cast %39 : vector<160xf32> to vector<160x1xf32>
    %c0_24 = arith.constant 0 : index
    %c0_25 = arith.constant 0 : index
    %41 = vector.load %arg9[%c0_24, %c0_25] : memref<1x1xf32, #tpu.memory_space<vmem>>, vector<1x1xf32>
    %42 = vector.broadcast %41 : vector<1x1xf32> to vector<160x1xf32>
    %43 = arith.addf %40, %42 : vector<160x1xf32>
    %cst_26 = arith.constant 0.000000e+00 : f32
    %44 = vector.broadcast %cst_26 : f32 to vector<160x1xf32>
    %45 = arith.subf %44, %43 : vector<160x1xf32>
    %46 = math.exp %45 : vector<160x1xf32>
    %cst_27 = arith.constant 1.000000e+00 : f32
    %47 = vector.broadcast %cst_27 : f32 to vector<160x1xf32>
    %48 = arith.addf %47, %46 : vector<160x1xf32>
    %cst_28 = arith.constant 1.000000e+00 : f32
    %49 = vector.broadcast %cst_28 : f32 to vector<160x1xf32>
    %50 = arith.divf %49, %48 : vector<160x1xf32>
    %c0_29 = arith.constant 0 : index
    %c0_30 = arith.constant 0 : index
    %51 = vector.load %arg10[%c0_29, %c0_30] : memref<160x1xf32, #tpu.memory_space<vmem>>, vector<160x1xf32>
    tpu.vector_store %arg10[%c0_29, %c0_30], %50 {strides = array<i32>} : memref<160x1xf32, #tpu.memory_space<vmem>>, vector<160x1xf32>,
    return
  }
  func.func @transform_0(%arg0: i32) -> (i32, i32) {
    %c0_i32 = arith.constant 0 : i32
    %c0_i32_0 = arith.constant 0 : i32
    return %arg0, %c0_i32 : i32, i32
  }
  func.func @transform_1(%arg0: i32) -> (i32, i32) {
    %c0_i32 = arith.constant 0 : i32
    %c0_i32_0 = arith.constant 0 : i32
    %c0_i32_1 = arith.constant 0 : i32
    return %c0_i32, %c0_i32_0 : i32, i32
  }
  func.func @transform_2(%arg0: i32) -> (i32, i32) {
    %c0_i32 = arith.constant 0 : i32
    %c0_i32_0 = arith.constant 0 : i32
    %c0_i32_1 = arith.constant 0 : i32
    return %c0_i32, %c0_i32_0 : i32, i32
  }
  func.func @transform_3(%arg0: i32) -> (i32, i32) {
    %c0_i32 = arith.constant 0 : i32
    %c0_i32_0 = arith.constant 0 : i32
    %c0_i32_1 = arith.constant 0 : i32
    return %c0_i32, %c0_i32_0 : i32, i32
  }
  func.func @transform_4(%arg0: i32) -> (i32, i32) {
    %c0_i32 = arith.constant 0 : i32
    %c0_i32_0 = arith.constant 0 : i32
    %c0_i32_1 = arith.constant 0 : i32
    return %c0_i32, %c0_i32_0 : i32, i32
  }
  func.func @transform_5(%arg0: i32) -> (i32, i32) {
    %c0_i32 = arith.constant 0 : i32
    %c0_i32_0 = arith.constant 0 : i32
    %c0_i32_1 = arith.constant 0 : i32
    return %c0_i32, %c0_i32_0 : i32, i32
  }
  func.func @transform_6(%arg0: i32) -> (i32, i32) {
    %c0_i32 = arith.constant 0 : i32
    %c0_i32_0 = arith.constant 0 : i32
    %c0_i32_1 = arith.constant 0 : i32
    return %c0_i32, %c0_i32_0 : i32, i32
  }
  func.func @transform_7(%arg0: i32) -> (i32, i32) {
    %c0_i32 = arith.constant 0 : i32
    %c0_i32_0 = arith.constant 0 : i32
    %c0_i32_1 = arith.constant 0 : i32
    return %c0_i32, %c0_i32_0 : i32, i32
  }
  func.func @transform_8(%arg0: i32) -> (i32, i32) {
    %c0_i32 = arith.constant 0 : i32
    %c0_i32_0 = arith.constant 0 : i32
    %c0_i32_1 = arith.constant 0 : i32
    return %c0_i32, %c0_i32_0 : i32, i32
  }
  func.func @transform_9(%arg0: i32) -> (i32, i32) {
    %c0_i32 = arith.constant 0 : i32
    %c0_i32_0 = arith.constant 0 : i32
    return %arg0, %c0_i32 : i32, i32
  }
}

</mosaic_0001>

<llo_original>
// kernel: tpu_custom_call.1
$region0: #{tpu_custom_call.1}
  #allocation0 [shape = 'u32[]', space=smem, size = 0x4, offset = 0x4, fixed_abs, tag = 'smem constant byte address 0x4 - core index']
  #allocation1 [shape = 'u32[72,128]{1,0:T(1,128)}', space=vmem, size = 0x9000, scoped, tag = 'internal scratch']
  #allocation2 [shape = 'f32[1,1]{1,0:T(1,128)S(1)}', space=vmem, size = 0x200, scoped, tag = 'scoped memory for tpu_custom_call.1']
  %s0 = inlined_call_operand.hbm [shape: bf16[320,1536], index: 0, kind: input, shape index: {}]
  %s1 = inlined_call_operand.hbm [shape: bf16[1536,256], index: 1, kind: input, shape index: {}]
  %s2 = inlined_call_operand.vmem [shape: f32[1,256], index: 2, kind: input, shape index: {}]
  %s3 = inlined_call_operand.hbm [shape: bf16[256,256], index: 3, kind: input, shape index: {}]
  %s4 = inlined_call_operand.vmem [shape: f32[1,256], index: 4, kind: input, shape index: {}]
  %s5 = inlined_call_operand.vmem [shape: bf16[256,64], index: 5, kind: input, shape index: {}]
  %s6 = inlined_call_operand.vmem [shape: f32[1,64], index: 6, kind: input, shape index: {}]
  %s7 = inlined_call_operand.vmem [shape: f32[1,64], index: 7, kind: input, shape index: {}]
  %s8 = inlined_call_operand.<no memory space> [shape: f32[1,1], index: 8, kind: input, shape index: {}]
  %s9 = inlined_call_operand.vmem [shape: f32[320,1], index: 9, kind: output, shape index: {}]
  %s10 = sld [smem:[#allocation0]]
  $region81: #{tpu_custom_call.1} parent=0
    _
  %s12 = ssub.s32 1, %s10
  %s13 = scalar_select 0, %s12, %s10
  %v14 = vstv %s8
  %15 = vst [vmem:[#allocation2] sm:$0x1] %v14
  $region1: #{tpu_custom_call.1} parent=0
    #allocation3 [shape = 'u8[983040]{0}', space=vmem, size = 0xf0000, scoped, tag = 'input window, operand 0']
    #allocation4 [shape = 's32[2]{0}', space=sflag, size = 0x8, scoped, tag = 'scoped memory for tpu_custom_call.1']
    #allocation5 [shape = 'u8[786432]{0}', space=vmem, size = 0xc0000, scoped, tag = 'input window, operand 1, single buffered']
    #allocation6 [shape = 's32[1]{0}', space=sflag, size = 0x4, scoped, tag = 'scoped memory for tpu_custom_call.1']
    #allocation7 [shape = 'u8[131072]{0}', space=vmem, size = 0x20000, scoped, tag = 'input window, operand 3, single buffered']
    %16 = vsyncpa [#allocation4], 0
    %s17 = scalar_lea.sflag [#allocation4], 1
    %18 = vsyncpa %s17, 0
    %19 = vsyncpa [#allocation6], 0
    loop: start=0, step=1, limit=4
    $region2: #{tpu_custom_call.1} parent=1 // loop_pre_header
      _
    $region3: #{tpu_custom_call.1} parent=1 // loop_header
      %s21 = sphi 0, %s25
      %p22 = scmp.ge.s32.totalorder %s21, 4
      %s31 = sphi 0, %s33
      %s34 = sphi 0, %s31
      %s35 = sphi 0, %s34
      %s51 = sphi 0, %s35
      %s55 = sphi 0, %s55
      %s57 = sphi 0, %s55
      %s58 = sphi 0, %s57
      %s72 = sphi 0, %s58
      %s76 = sphi 0, %s76
      %s78 = sphi 0, %s76
      %s79 = sphi 0, %s78
      %s93 = sphi 0, %s79
      %s97 = sphi 0, %s97
      %s99 = sphi 0, %s97
      %s100 = sphi 0, %s99
      %s114 = sphi 0, %s100
      %s118 = sphi 0, %s118
      %s120 = sphi 0, %s118
      %s121 = sphi 0, %s120
      %s135 = sphi 0, %s121
      %s139 = sphi 0, %s139
      %s141 = sphi 0, %s139
      %s142 = sphi 0, %s141
      %s156 = sphi 0, %s142
      %s160 = sphi 0, %s160
      %s162 = sphi 0, %s160
      %s163 = sphi 0, %s162
      %s177 = sphi 0, %s163
      %s181 = sphi 0, %s181
      %s183 = sphi 0, %s181
      %s184 = sphi 0, %s183
      %s198 = sphi 0, %s184
      %s202 = sphi 0, %s202
      %s204 = sphi 0, %s202
      %s205 = sphi 0, %s204
      %s219 = sphi 0, %s205
      %s225 = sphi 0, %s227
      %s228 = sphi 0, %s225
      %s229 = sphi 0, %s228
      %s245 = sphi 0, %s229
    $region4: #{tpu_custom_call.1} parent=1 // loop_header_branch
      %24 = sbr.rel (%p22) target = $region8
    $region5: #{tpu_custom_call.1} parent=1 // loop_body
      %s26 = ssub.s32 %s21, 1
      %s27 = ssub.s32 %s21, 2
      %s28 = sadd.s32 %s21, 1
      %s29 = ssub.s32 %s21, %s28
      %p30 = scmp.eq.s32.totalorder %s29, 0
      %s32 = sadd.s32 %s31, 1
      %s33 = scalar_select %p30, %s31, %s32
      %p36 = pneg %p30
      %p37 = scmp.eq.s32.totalorder %s21, 1
      %p38 = por %p36, %p37
      %p39 = scmp.ne.s32.totalorder %s31, %s34
      %p40 = scmp.eq.s32.totalorder %s21, 0
      %p41 = por %p39, %p40
      %p42 = scmp.ne.s32.totalorder %s31, %s34
      %p43 = scmp.eq.s32.totalorder %s26, 1
      %p44 = por %p42, %p43
      %p45 = scmp.ne.s32.totalorder %s34, %s35
      %p46 = scmp.eq.s32.totalorder %s26, 0
      %p47 = por %p45, %p46
      %p48 = scmp.ne.s32.totalorder %s34, %s35
      %p49 = scmp.eq.s32.totalorder %s27, 1
      %p50 = por %p48, %p49
      %p52 = scmp.ne.s32.totalorder %s35, %s51
      %p53 = scmp.eq.s32.totalorder %s27, 0
      %p54 = por %p52, %p53
      %s56 = sadd.s32 %s55, 1
      %p59 = scmp.eq.s32.totalorder %s21, 1
      %p60 = scmp.ne.s32.totalorder %s55, %s57
      %p61 = scmp.eq.s32.totalorder %s21, 0
      %p62 = por %p60, %p61
      %p63 = scmp.ne.s32.totalorder %s55, %s57
      %p64 = scmp.eq.s32.totalorder %s26, 1
      %p65 = por %p63, %p64
      %p66 = scmp.ne.s32.totalorder %s57, %s58
      %p67 = scmp.eq.s32.totalorder %s26, 0
      %p68 = por %p66, %p67
      %p69 = scmp.ne.s32.totalorder %s57, %s58
      %p70 = scmp.eq.s32.totalorder %s27, 1
      %p71 = por %p69, %p70
      %p73 = scmp.ne.s32.totalorder %s58, %s72
      %p74 = scmp.eq.s32.totalorder %s27, 0
      %p75 = por %p73, %p74
      %s77 = sadd.s32 %s76, 1
      %p80 = scmp.eq.s32.totalorder %s21, 1
      %p81 = scmp.ne.s32.totalorder %s76, %s78
      %p82 = scmp.eq.s32.totalorder %s21, 0
      %p83 = por %p81, %p82
      %p84 = scmp.ne.s32.totalorder %s76, %s78
      %p85 = scmp.eq.s32.totalorder %s26, 1
      %p86 = por %p84, %p85
      %p87 = scmp.ne.s32.totalorder %s78, %s79
      %p88 = scmp.eq.s32.totalorder %s26, 0
      %p89 = por %p87, %p88
      %p90 = scmp.ne.s32.totalorder %s78, %s79
      %p91 = scmp.eq.s32.totalorder %s27, 1
      %p92 = por %p90, %p91
      %p94 = scmp.ne.s32.totalorder %s79, %s93
      %p95 = scmp.eq.s32.totalorder %s27, 0
      %p96 = por %p94, %p95
      %s98 = sadd.s32 %s97, 1
      %p101 = scmp.eq.s32.totalorder %s21, 1
      %p102 = scmp.ne.s32.totalorder %s97, %s99
      %p103 = scmp.eq.s32.totalorder %s21, 0
      %p104 = por %p102, %p103
      %p105 = scmp.ne.s32.totalorder %s97, %s99
      %p106 = scmp.eq.s32.totalorder %s26, 1
      %p107 = por %p105, %p106
      %p108 = scmp.ne.s32.totalorder %s99, %s100
      %p109 = scmp.eq.s32.totalorder %s26, 0
      %p110 = por %p108, %p109
      %p111 = scmp.ne.s32.totalorder %s99, %s100
      %p112 = scmp.eq.s32.totalorder %s27, 1
      %p113 = por %p111, %p112
      %p115 = scmp.ne.s32.totalorder %s100, %s114
      %p116 = scmp.eq.s32.totalorder %s27, 0
      %p117 = por %p115, %p116
      %s119 = sadd.s32 %s118, 1
      %p122 = scmp.eq.s32.totalorder %s21, 1
      %p123 = scmp.ne.s32.totalorder %s118, %s120
      %p124 = scmp.eq.s32.totalorder %s21, 0
      %p125 = por %p123, %p124
      %p126 = scmp.ne.s32.totalorder %s118, %s120
      %p127 = scmp.eq.s32.totalorder %s26, 1
      %p128 = por %p126, %p127
      %p129 = scmp.ne.s32.totalorder %s120, %s121
      %p130 = scmp.eq.s32.totalorder %s26, 0
      %p131 = por %p129, %p130
      %p132 = scmp.ne.s32.totalorder %s120, %s121
      %p133 = scmp.eq.s32.totalorder %s27, 1
      %p134 = por %p132, %p133
      %p136 = scmp.ne.s32.totalorder %s121, %s135
      %p137 = scmp.eq.s32.totalorder %s27, 0
      %p138 = por %p136, %p137
      %s140 = sadd.s32 %s139, 1
      %p143 = scmp.eq.s32.totalorder %s21, 1
      %p144 = scmp.ne.s32.totalorder %s139, %s141
      %p145 = scmp.eq.s32.totalorder %s21, 0
      %p146 = por %p144, %p145
      %p147 = scmp.ne.s32.totalorder %s139, %s141
      %p148 = scmp.eq.s32.totalorder %s26, 1
      %p149 = por %p147, %p148
      %p150 = scmp.ne.s32.totalorder %s141, %s142
      %p151 = scmp.eq.s32.totalorder %s26, 0
      %p152 = por %p150, %p151
      %p153 = scmp.ne.s32.totalorder %s141, %s142
      %p154 = scmp.eq.s32.totalorder %s27, 1
      %p155 = por %p153, %p154
      %p157 = scmp.ne.s32.totalorder %s142, %s156
      %p158 = scmp.eq.s32.totalorder %s27, 0
      %p159 = por %p157, %p158
      %s161 = sadd.s32 %s160, 1
      %p164 = scmp.eq.s32.totalorder %s21, 1
      %p165 = scmp.ne.s32.totalorder %s160, %s162
      %p166 = scmp.eq.s32.totalorder %s21, 0
      %p167 = por %p165, %p166
      %p168 = scmp.ne.s32.totalorder %s160, %s162
      %p169 = scmp.eq.s32.totalorder %s26, 1
      %p170 = por %p168, %p169
      %p171 = scmp.ne.s32.totalorder %s162, %s163
      %p172 = scmp.eq.s32.totalorder %s26, 0
      %p173 = por %p171, %p172
      %p174 = scmp.ne.s32.totalorder %s162, %s163
      %p175 = scmp.eq.s32.totalorder %s27, 1
      %p176 = por %p174, %p175
      %p178 = scmp.ne.s32.totalorder %s163, %s177
      %p179 = scmp.eq.s32.totalorder %s27, 0
      %p180 = por %p178, %p179
      %s182 = sadd.s32 %s181, 1
      %p185 = scmp.eq.s32.totalorder %s21, 1
      %p186 = scmp.ne.s32.totalorder %s181, %s183
      %p187 = scmp.eq.s32.totalorder %s21, 0
      %p188 = por %p186, %p187
      %p189 = scmp.ne.s32.totalorder %s181, %s183
      %p190 = scmp.eq.s32.totalorder %s26, 1
      %p191 = por %p189, %p190
      %p192 = scmp.ne.s32.totalorder %s183, %s184
      %p193 = scmp.eq.s32.totalorder %s26, 0
      %p194 = por %p192, %p193
      %p195 = scmp.ne.s32.totalorder %s183, %s184
      %p196 = scmp.eq.s32.totalorder %s27, 1
      %p197 = por %p195, %p196
      %p199 = scmp.ne.s32.totalorder %s184, %s198
      %p200 = scmp.eq.s32.totalorder %s27, 0
      %p201 = por %p199, %p200
      %s203 = sadd.s32 %s202, 1
      %p206 = scmp.eq.s32.totalorder %s21, 1
      %p207 = scmp.ne.s32.totalorder %s202, %s204
      %p208 = scmp.eq.s32.totalorder %s21, 0
      %p209 = por %p207, %p208
      %p210 = scmp.ne.s32.totalorder %s202, %s204
      %p211 = scmp.eq.s32.totalorder %s26, 1
      %p212 = por %p210, %p211
      %p213 = scmp.ne.s32.totalorder %s204, %s205
      %p214 = scmp.eq.s32.totalorder %s26, 0
      %p215 = por %p213, %p214
      %p216 = scmp.ne.s32.totalorder %s204, %s205
      %p217 = scmp.eq.s32.totalorder %s27, 1
      %p218 = por %p216, %p217
      %p220 = scmp.ne.s32.totalorder %s205, %s219
      %p221 = scmp.eq.s32.totalorder %s27, 0
      %p222 = por %p220, %p221
      %s223 = ssub.s32 %s21, %s28
      %p224 = scmp.eq.s32.totalorder %s223, 0
      %s226 = sadd.s32 %s225, 1
      %s227 = scalar_select %p224, %s225, %s226
      %p230 = pneg %p224
      %p231 = scmp.eq.s32.totalorder %s21, 1
      %p232 = por %p230, %p231
      %p233 = scmp.ne.s32.totalorder %s225, %s228
      %p234 = scmp.eq.s32.totalorder %s21, 0
      %p235 = por %p233, %p234
      %p236 = scmp.ne.s32.totalorder %s225, %s228
      %p237 = scmp.eq.s32.totalorder %s26, 1
      %p238 = por %p236, %p237
      %p239 = scmp.ne.s32.totalorder %s228, %s229
      %p240 = scmp.eq.s32.totalorder %s26, 0
      %p241 = por %p239, %p240
      %p242 = scmp.ne.s32.totalorder %s228, %s229
      %p243 = scmp.eq.s32.totalorder %s27, 1
      %p244 = por %p242, %p243
      %p246 = scmp.ne.s32.totalorder %s229, %s245
      %p247 = scmp.eq.s32.totalorder %s27, 0
      %p248 = por %p246, %p247
      %p249 = scmp.le.s32.totalorder 1, %s21
      %p250 = scmp.lt.s32.totalorder %s21, 3
      %p251 = pnand %p249, %p250
      %p252 = pneg %p251
      // Predicated region
      $region9: #{tpu_custom_call.1} parent=5 // pred_check
        _
      $region10: #{tpu_custom_call.1} parent=5 // pred_check_branch
        %254 = sbr.rel (%p251) target = $region12
      $region11: #{tpu_custom_call.1} parent=5 // pred_region
        %s255 = ssub.s32 %s21, 1
        // Predicated region
        $region13: #{tpu_custom_call.1} parent=11 // pred_check
          %p256 = pneg %p68
        $region14: #{tpu_custom_call.1} parent=11 // pred_check_branch
          %258 = sbr.rel (%p256) target = $region16
        $region15: #{tpu_custom_call.1} parent=11 // pred_region
          %260 = vsyncadd [#allocation6], 0
          %s261 = sshll.u32 %s1, 4
          %s262 = int_to_ptr.hbm [resolvable:$true] %s261
          %s263 = sshll.u32 [#allocation5], 4
          %s264 = int_to_ptr.vmem [resolvable:$true] %s263
          %269 = dma.hbm_to_vmem [thread:$0]  %s262, 24576, %s264, [#allocation6], 128, 128, 8
        $region16: #{tpu_custom_call.1} parent=11 // pred_fallthru
          _
        // Predicated region
        $region17: #{tpu_custom_call.1} parent=11 // pred_check
          %p270 = pneg %p89
        $region18: #{tpu_custom_call.1} parent=11 // pred_check_branch
          %272 = sbr.rel (%p270) target = $region20
        $region19: #{tpu_custom_call.1} parent=11 // pred_region
          _
        $region20: #{tpu_custom_call.1} parent=11 // pred_fallthru
          _
        // Predicated region
        $region21: #{tpu_custom_call.1} parent=11 // pred_check
          %p273 = pneg %p110
        $region22: #{tpu_custom_call.1} parent=11 // pred_check_branch
          %275 = sbr.rel (%p273) target = $region24
        $region23: #{tpu_custom_call.1} parent=11 // pred_region
          %277 = vsyncadd [#allocation6], 0
          %s278 = sshll.u32 %s3, 4
          %s279 = int_to_ptr.hbm [resolvable:$true] %s278
          %s280 = sshll.u32 [#allocation7], 4
          %s281 = int_to_ptr.vmem [resolvable:$true] %s280
          %286 = dma.hbm_to_vmem [thread:$0]  %s279, 4096, %s281, [#allocation6], 128, 128, 8
        $region24: #{tpu_custom_call.1} parent=11 // pred_fallthru
          _
        // Predicated region
        $region25: #{tpu_custom_call.1} parent=11 // pred_check
          %p287 = pneg %p131
        $region26: #{tpu_custom_call.1} parent=11 // pred_check_branch
          %289 = sbr.rel (%p287) target = $region28
        $region27: #{tpu_custom_call.1} parent=11 // pred_region
          _
        $region28: #{tpu_custom_call.1} parent=11 // pred_fallthru
          _
        // Predicated region
        $region29: #{tpu_custom_call.1} parent=11 // pred_check
          %p290 = pneg %p152
        $region30: #{tpu_custom_call.1} parent=11 // pred_check_branch
          %292 = sbr.rel (%p290) target = $region32
        $region31: #{tpu_custom_call.1} parent=11 // pred_region
          _
        $region32: #{tpu_custom_call.1} parent=11 // pred_fallthru
          _
        // Predicated region
        $region33: #{tpu_custom_call.1} parent=11 // pred_check
          %p293 = pneg %p173
        $region34: #{tpu_custom_call.1} parent=11 // pred_check_branch
          %295 = sbr.rel (%p293) target = $region36
        $region35: #{tpu_custom_call.1} parent=11 // pred_region
          _
        $region36: #{tpu_custom_call.1} parent=11 // pred_fallthru
          _
        // Predicated region
        $region37: #{tpu_custom_call.1} parent=11 // pred_check
          %p296 = pneg %p194
        $region38: #{tpu_custom_call.1} parent=11 // pred_check_branch
          %298 = sbr.rel (%p296) target = $region40
        $region39: #{tpu_custom_call.1} parent=11 // pred_region
          _
        $region40: #{tpu_custom_call.1} parent=11 // pred_fallthru
          _
        // Predicated region
        $region41: #{tpu_custom_call.1} parent=11 // pred_check
          %p299 = pneg %p215
        $region42: #{tpu_custom_call.1} parent=11 // pred_check_branch
          %301 = sbr.rel (%p299) target = $region44
        $region43: #{tpu_custom_call.1} parent=11 // pred_region
          _
        $region44: #{tpu_custom_call.1} parent=11 // pred_fallthru
          _
      $region12: #{tpu_custom_call.1} parent=5 // pred_fallthru
        _
      %p302 = scmp.lt.s32.totalorder %s21, 2
      // Predicated region
      $region45: #{tpu_custom_call.1} parent=5 // pred_check
        %p303 = pneg %p302
      $region46: #{tpu_custom_call.1} parent=5 // pred_check_branch
        %305 = sbr.rel (%p303) target = $region48
      $region47: #{tpu_custom_call.1} parent=5 // pred_region
        // Predicated region
        $region49: #{tpu_custom_call.1} parent=47 // pred_check
          %p306 = pneg %p41
        $region50: #{tpu_custom_call.1} parent=47 // pred_check_branch
          %308 = sbr.rel (%p306) target = $region52
        $region51: #{tpu_custom_call.1} parent=47 // pred_region
          %s309 = sand.u32 %s31, 1
          %s310 = scalar_lea.sflag [#allocation4], %s309
          %s311 = sand.u32 %s31, 1
          %s312 = smul.addr %s311, 960
          %s313 = scalar_lea.vmem [#allocation3], %s312
          %s314 = smul.u32 20, %s21
          %316 = vsyncadd %s310, 0
          %s317 = smul.addr %s314, 12
          %s318 = smul.addr %s317, 4
          %s319 = scalar_lea.hbm %s0, %s318
          %s320 = sshll.u32 %s319, 4
          %s321 = int_to_ptr.hbm [resolvable:$true] %s320
          %s322 = sshll.u32 %s313, 4
          %s323 = int_to_ptr.vmem [resolvable:$true] %s322
          %328 = dma.hbm_to_vmem [thread:$0]  %s321, 15360, %s323, %s310, 768, 768, 48
        $region52: #{tpu_custom_call.1} parent=47 // pred_fallthru
          _
      $region48: #{tpu_custom_call.1} parent=5 // pred_fallthru
        _
      %p329 = scmp.le.s32.totalorder 1, %s21
      %p330 = scmp.lt.s32.totalorder %s21, 3
      %p331 = pnand %p329, %p330
      %p332 = pneg %p331
      // Predicated region
      $region53: #{tpu_custom_call.1} parent=5 // pred_check
        _
      $region54: #{tpu_custom_call.1} parent=5 // pred_check_branch
        %334 = sbr.rel (%p331) target = $region56
      $region55: #{tpu_custom_call.1} parent=5 // pred_region
        %s335 = ssub.s32 %s21, 1
        %s336 = sand.u32 %s34, 1
        %s337 = scalar_lea.sflag [#allocation4], %s336
        %s338 = sand.u32 %s34, 1
        %s339 = smul.addr %s338, 960
        %s340 = scalar_lea.vmem [#allocation3], %s339
        // Predicated region
        $region57: #{tpu_custom_call.1} parent=55 // pred_check
          %p341 = pneg %p47
        $region58: #{tpu_custom_call.1} parent=55 // pred_check_branch
          %343 = sbr.rel (%p341) target = $region60
        $region59: #{tpu_custom_call.1} parent=55 // pred_region
          %345 = dma.done %s337, 15360
        $region60: #{tpu_custom_call.1} parent=55 // pred_fallthru
          _
        // Predicated region
        $region61: #{tpu_custom_call.1} parent=55 // pred_check
          %p346 = pneg %p68
        $region62: #{tpu_custom_call.1} parent=55 // pred_check_branch
          %348 = sbr.rel (%p346) target = $region64
        $region63: #{tpu_custom_call.1} parent=55 // pred_region
          %350 = dma.done [#allocation6], 24576
        $region64: #{tpu_custom_call.1} parent=55 // pred_fallthru
          _
        // Predicated region
        $region65: #{tpu_custom_call.1} parent=55 // pred_check
          %p351 = pneg %p110
        $region66: #{tpu_custom_call.1} parent=55 // pred_check_branch
          %353 = sbr.rel (%p351) target = $region68
        $region67: #{tpu_custom_call.1} parent=55 // pred_region
          %355 = dma.done [#allocation6], 4096
        $region68: #{tpu_custom_call.1} parent=55 // pred_fallthru
          _
        %s356 = sand.u32 %s34, 1
        %s357 = scalar_lea.sflag [#allocation4], %s356
        %s358 = sand.u32 %s34, 1
        %s359 = smul.addr %s358, 960
        %s360 = scalar_lea.vmem [#allocation3], %s359
        %p361 = pneg %p47
        %p362 = pneg %p44
        %p363 = pneg %p68
        %p364 = pneg %p65
        %p365 = pneg %p89
        %p366 = pneg %p86
        %p367 = pneg %p110
        %p368 = pneg %p107
        %p369 = pneg %p131
        %p370 = pneg %p128
        %p371 = pneg %p152
        %p372 = pneg %p149
        %p373 = pneg %p173
        %p374 = pneg %p170
        %p375 = pneg %p194
        %p376 = pneg %p191
        %p377 = pneg %p215
        %p378 = pneg %p212
        %p379 = pneg %p241
        %p380 = pneg %p238
        %s381 = smul.u32 20, %s26
        %p382 = scmp.lt.s32.totalorder %s381, 39
        %s383 = scalar_select %p382, %s381, 39
        %s384 = smul.addr %s383, 8
        %s385 = scalar_lea.vmem %s9, %s384
        %s386 = smul.u32 20, %s26
        %s387 = smul.u32 20, %s26
        %p388 = scmp.lt.s32.totalorder %s387, 39
        %s389 = scalar_select %p388, %s387, 39
        %s390 = smul.addr %s389, 8
        %s391 = scalar_lea.vmem %s9, %s390
        %s392 = smul.u32 20, %s26
        %v393 = vld [vmem:[%s340] sm:$0xff]
        %v394 = vld [vmem:[%s340 + $0x8] sm:$0xff]
        %v395 = vld [vmem:[%s340 + $0x10] sm:$0xff]
        %v396 = vld [vmem:[%s340 + $0x18] sm:$0xff]
        %v397 = vld [vmem:[%s340 + $0x20] sm:$0xff]
        %v398 = vld [vmem:[%s340 + $0x28] sm:$0xff]
        %v399 = vld [vmem:[%s340 + $0x30] sm:$0xff]
        %v400 = vld [vmem:[%s340 + $0x38] sm:$0xff]
        %v401 = vld [vmem:[%s340 + $0x40] sm:$0xff]
        %v402 = vld [vmem:[%s340 + $0x48] sm:$0xff]
        %v403 = vld [vmem:[%s340 + $0x50] sm:$0xff]
        %v404 = vld [vmem:[%s340 + $0x58] sm:$0xff]
        %v405 = vld [vmem:[%s340 + $0x60] sm:$0xff]
        %v406 = vld [vmem:[%s340 + $0x68] sm:$0xff]
        %v407 = vld [vmem:[%s340 + $0x70] sm:$0xff]
        %v408 = vld [vmem:[%s340 + $0x78] sm:$0xff]
        %v409 = vld [vmem:[%s340 + $0x80] sm:$0xff]
        %v410 = vld [vmem:[%s340 + $0x88] sm:$0xff]
        %v411 = vld [vmem:[%s340 + $0x90] sm:$0xff]
        %v412 = vld [vmem:[%s340 + $0x98] sm:$0xff]
        %v413 = vld [vmem:[%s340 + $0xa0] sm:$0xff]
        %v414 = vld [vmem:[%s340 + $0xa8] sm:$0xff]
        %v415 = vld [vmem:[%s340 + $0xb0] sm:$0xff]
        %v416 = vld [vmem:[%s340 + $0xb8] sm:$0xff]
        %v417 = vld [vmem:[%s340 + $0xc0] sm:$0xff]
        %v418 = vld [vmem:[%s340 + $0xc8] sm:$0xff]
        %v419 = vld [vmem:[%s340 + $0xd0] sm:$0xff]
        %v420 = vld [vmem:[%s340 + $0xd8] sm:$0xff]
        %v421 = vld [vmem:[%s340 + $0xe0] sm:$0xff]
        %v422 = vld [vmem:[%s340 + $0xe8] sm:$0xff]
        %v423 = vld [vmem:[%s340 + $0xf0] sm:$0xff]
        %v424 = vld [vmem:[%s340 + $0xf8] sm:$0xff]
        %v425 = vld [vmem:[%s340 + $0x100] sm:$0xff]
        %v426 = vld [vmem:[%s340 + $0x108] sm:$0xff]
        %v427 = vld [vmem:[%s340 + $0x110] sm:$0xff]
        %v428 = vld [vmem:[%s340 + $0x118] sm:$0xff]
        %v429 = vld [vmem:[%s340 + $0x120] sm:$0xff]
        %v430 = vld [vmem:[%s340 + $0x128] sm:$0xff]
        %v431 = vld [vmem:[%s340 + $0x130] sm:$0xff]
        %v432 = vld [vmem:[%s340 + $0x138] sm:$0xff]
        %v433 = vld [vmem:[%s340 + $0x140] sm:$0xff]
        %v434 = vld [vmem:[%s340 + $0x148] sm:$0xff]
        %v435 = vld [vmem:[%s340 + $0x150] sm:$0xff]
        %v436 = vld [vmem:[%s340 + $0x158] sm:$0xff]
        %v437 = vld [vmem:[%s340 + $0x160] sm:$0xff]
        %v438 = vld [vmem:[%s340 + $0x168] sm:$0xff]
        %v439 = vld [vmem:[%s340 + $0x170] sm:$0xff]
        %v440 = vld [vmem:[%s340 + $0x178] sm:$0xff]
        %v441 = vld [vmem:[%s340 + $0x180] sm:$0xff]
        %v442 = vld [vmem:[%s340 + $0x188] sm:$0xff]
        %v443 = vld [vmem:[%s340 + $0x190] sm:$0xff]
        %v444 = vld [vmem:[%s340 + $0x198] sm:$0xff]
        %v445 = vld [vmem:[%s340 + $0x1a0] sm:$0xff]
        %v446 = vld [vmem:[%s340 + $0x1a8] sm:$0xff]
        %v447 = vld [vmem:[%s340 + $0x1b0] sm:$0xff]
        %v448 = vld [vmem:[%s340 + $0x1b8] sm:$0xff]
        %v449 = vld [vmem:[%s340 + $0x1c0] sm:$0xff]
        %v450 = vld [vmem:[%s340 + $0x1c8] sm:$0xff]
        %v451 = vld [vmem:[%s340 + $0x1d0] sm:$0xff]
        %v452 = vld [vmem:[%s340 + $0x1d8] sm:$0xff]
        %v453 = vld [vmem:[%s340 + $0x1e0] sm:$0xff]
        %v454 = vld [vmem:[%s340 + $0x1e8] sm:$0xff]
        %v455 = vld [vmem:[%s340 + $0x1f0] sm:$0xff]
        %v456 = vld [vmem:[%s340 + $0x1f8] sm:$0xff]
        %v457 = vld [vmem:[%s340 + $0x200] sm:$0xff]
        %v458 = vld [vmem:[%s340 + $0x208] sm:$0xff]
        %v459 = vld [vmem:[%s340 + $0x210] sm:$0xff]
        %v460 = vld [vmem:[%s340 + $0x218] sm:$0xff]
        %v461 = vld [vmem:[%s340 + $0x220] sm:$0xff]
        %v462 = vld [vmem:[%s340 + $0x228] sm:$0xff]
        %v463 = vld [vmem:[%s340 + $0x230] sm:$0xff]
        %v464 = vld [vmem:[%s340 + $0x238] sm:$0xff]
        %v465 = vld [vmem:[%s340 + $0x240] sm:$0xff]
        %v466 = vld [vmem:[%s340 + $0x248] sm:$0xff]
        %v467 = vld [vmem:[%s340 + $0x250] sm:$0xff]
        %v468 = vld [vmem:[%s340 + $0x258] sm:$0xff]
        %v469 = vld [vmem:[%s340 + $0x260] sm:$0xff]
        %v470 = vld [vmem:[%s340 + $0x268] sm:$0xff]
        %v471 = vld [vmem:[%s340 + $0x270] sm:$0xff]
        %v472 = vld [vmem:[%s340 + $0x278] sm:$0xff]
        %v473 = vld [vmem:[%s340 + $0x280] sm:$0xff]
        %v474 = vld [vmem:[%s340 + $0x288] sm:$0xff]
        %v475 = vld [vmem:[%s340 + $0x290] sm:$0xff]
        %v476 = vld [vmem:[%s340 + $0x298] sm:$0xff]
        %v477 = vld [vmem:[%s340 + $0x2a0] sm:$0xff]
        %v478 = vld [vmem:[%s340 + $0x2a8] sm:$0xff]
        %v479 = vld [vmem:[%s340 + $0x2b0] sm:$0xff]
        %v480 = vld [vmem:[%s340 + $0x2b8] sm:$0xff]
        %v481 = vld [vmem:[%s340 + $0x2c0] sm:$0xff]
        %v482 = vld [vmem:[%s340 + $0x2c8] sm:$0xff]
        %v483 = vld [vmem:[%s340 + $0x2d0] sm:$0xff]
        %v484 = vld [vmem:[%s340 + $0x2d8] sm:$0xff]
        %v485 = vld [vmem:[%s340 + $0x2e0] sm:$0xff]
        %v486 = vld [vmem:[%s340 + $0x2e8] sm:$0xff]
        %v487 = vld [vmem:[%s340 + $0x2f0] sm:$0xff]
        %v488 = vld [vmem:[%s340 + $0x2f8] sm:$0xff]
        %v489 = vld [vmem:[%s340 + $0x300] sm:$0xff]
        %v490 = vld [vmem:[%s340 + $0x308] sm:$0xff]
        %v491 = vld [vmem:[%s340 + $0x310] sm:$0xff]
        %v492 = vld [vmem:[%s340 + $0x318] sm:$0xff]
        %v493 = vld [vmem:[%s340 + $0x320] sm:$0xff]
        %v494 = vld [vmem:[%s340 + $0x328] sm:$0xff]
        %v495 = vld [vmem:[%s340 + $0x330] sm:$0xff]
        %v496 = vld [vmem:[%s340 + $0x338] sm:$0xff]
        %v497 = vld [vmem:[%s340 + $0x340] sm:$0xff]
        %v498 = vld [vmem:[%s340 + $0x348] sm:$0xff]
        %v499 = vld [vmem:[%s340 + $0x350] sm:$0xff]
        %v500 = vld [vmem:[%s340 + $0x358] sm:$0xff]
        %v501 = vld [vmem:[%s340 + $0x360] sm:$0xff]
        %v502 = vld [vmem:[%s340 + $0x368] sm:$0xff]
        %v503 = vld [vmem:[%s340 + $0x370] sm:$0xff]
        %v504 = vld [vmem:[%s340 + $0x378] sm:$0xff]
        %v505 = vld [vmem:[%s340 + $0x380] sm:$0xff]
        %v506 = vld [vmem:[%s340 + $0x388] sm:$0xff]
        %v507 = vld [vmem:[%s340 + $0x390] sm:$0xff]
        %v508 = vld [vmem:[%s340 + $0x398] sm:$0xff]
        %v509 = vld [vmem:[%s340 + $0x3a0] sm:$0xff]
        %v510 = vld [vmem:[%s340 + $0x3a8] sm:$0xff]
        %v511 = vld [vmem:[%s340 + $0x3b0] sm:$0xff]
        %v512 = vld [vmem:[%s340 + $0x3b8] sm:$0xff]
        %v513 = vld [vmem:[#allocation5] sm:$0xff]
        %v514 = vld [vmem:[#allocation5 + $0x8] sm:$0xff]
        %v515 = vld [vmem:[#allocation5 + $0x10] sm:$0xff]
        %v516 = vld [vmem:[#allocation5 + $0x18] sm:$0xff]
        %v517 = vld [vmem:[#allocation5 + $0x20] sm:$0xff]
        %v518 = vld [vmem:[#allocation5 + $0x28] sm:$0xff]
        %v519 = vld [vmem:[#allocation5 + $0x30] sm:$0xff]
        %v520 = vld [vmem:[#allocation5 + $0x38] sm:$0xff]
        %v521 = vld [vmem:[#allocation5 + $0x40] sm:$0xff]
        %v522 = vld [vmem:[#allocation5 + $0x48] sm:$0xff]
        %v523 = vld [vmem:[#allocation5 + $0x50] sm:$0xff]
        %v524 = vld [vmem:[#allocation5 + $0x58] sm:$0xff]
        %v525 = vld [vmem:[#allocation5 + $0x60] sm:$0xff]
        %v526 = vld [vmem:[#allocation5 + $0x68] sm:$0xff]
        %v527 = vld [vmem:[#allocation5 + $0x70] sm:$0xff]
        %v528 = vld [vmem:[#allocation5 + $0x78] sm:$0xff]
        %v529 = vld [vmem:[#allocation5 + $0x80] sm:$0xff]
        %v530 = vld [vmem:[#allocation5 + $0x88] sm:$0xff]
        %v531 = vld [vmem:[#allocation5 + $0x90] sm:$0xff]
        %v532 = vld [vmem:[#allocation5 + $0x98] sm:$0xff]
        %v533 = vld [vmem:[#allocation5 + $0xa0] sm:$0xff]
        %v534 = vld [vmem:[#allocation5 + $0xa8] sm:$0xff]
        %v535 = vld [vmem:[#allocation5 + $0xb0] sm:$0xff]
        %v536 = vld [vmem:[#allocation5 + $0xb8] sm:$0xff]
        %v537 = vld [vmem:[#allocation5 + $0xc0] sm:$0xff]
        %v538 = vld [vmem:[#allocation5 + $0xc8] sm:$0xff]
        %v539 = vld [vmem:[#allocation5 + $0xd0] sm:$0xff]
        %v540 = vld [vmem:[#allocation5 + $0xd8] sm:$0xff]
        %v541 = vld [vmem:[#allocation5 + $0xe0] sm:$0xff]
        %v542 = vld [vmem:[#allocation5 + $0xe8] sm:$0xff]
        %v543 = vld [vmem:[#allocation5 + $0xf0] sm:$0xff]
        %v544 = vld [vmem:[#allocation5 + $0xf8] sm:$0xff]
        %v545 = vld [vmem:[#allocation5 + $0x100] sm:$0xff]
        %v546 = vld [vmem:[#allocation5 + $0x108] sm:$0xff]
        %v547 = vld [vmem:[#allocation5 + $0x110] sm:$0xff]
        %v548 = vld [vmem:[#allocation5 + $0x118] sm:$0xff]
        %v549 = vld [vmem:[#allocation5 + $0x120] sm:$0xff]
        %v550 = vld [vmem:[#allocation5 + $0x128] sm:$0xff]
        %v551 = vld [vmem:[#allocation5 + $0x130] sm:$0xff]
        %v552 = vld [vmem:[#allocation5 + $0x138] sm:$0xff]
        %v553 = vld [vmem:[#allocation5 + $0x140] sm:$0xff]
        %v554 = vld [vmem:[#allocation5 + $0x148] sm:$0xff]
        %v555 = vld [vmem:[#allocation5 + $0x150] sm:$0xff]
        %v556 = vld [vmem:[#allocation5 + $0x158] sm:$0xff]
        %v557 = vld [vmem:[#allocation5 + $0x160] sm:$0xff]
        %v558 = vld [vmem:[#allocation5 + $0x168] sm:$0xff]
        %v559 = vld [vmem:[#allocation5 + $0x170] sm:$0xff]
        %v560 = vld [vmem:[#allocation5 + $0x178] sm:$0xff]
        %v561 = vld [vmem:[#allocation5 + $0x180] sm:$0xff]
        %v562 = vld [vmem:[#allocation5 + $0x188] sm:$0xff]
        %v563 = vld [vmem:[#allocation5 + $0x190] sm:$0xff]
        %v564 = vld [vmem:[#allocation5 + $0x198] sm:$0xff]
        %v565 = vld [vmem:[#allocation5 + $0x1a0] sm:$0xff]
        %v566 = vld [vmem:[#allocation5 + $0x1a8] sm:$0xff]
        %v567 = vld [vmem:[#allocation5 + $0x1b0] sm:$0xff]
        %v568 = vld [vmem:[#allocation5 + $0x1b8] sm:$0xff]
        %v569 = vld [vmem:[#allocation5 + $0x1c0] sm:$0xff]
        %v570 = vld [vmem:[#allocation5 + $0x1c8] sm:$0xff]
        %v571 = vld [vmem:[#allocation5 + $0x1d0] sm:$0xff]
        %v572 = vld [vmem:[#allocation5 + $0x1d8] sm:$0xff]
        %v573 = vld [vmem:[#allocation5 + $0x1e0] sm:$0xff]
        %v574 = vld [vmem:[#allocation5 + $0x1e8] sm:$0xff]
        %v575 = vld [vmem:[#allocation5 + $0x1f0] sm:$0xff]
        %v576 = vld [vmem:[#allocation5 + $0x1f8] sm:$0xff]
        %v577 = vld [vmem:[#allocation5 + $0x200] sm:$0xff]
        %v578 = vld [vmem:[#allocation5 + $0x208] sm:$0xff]
        %v579 = vld [vmem:[#allocation5 + $0x210] sm:$0xff]
        %v580 = vld [vmem:[#allocation5 + $0x218] sm:$0xff]
        %v581 = vld [vmem:[#allocation5 + $0x220] sm:$0xff]
        %v582 = vld [vmem:[#allocation5 + $0x228] sm:$0xff]
        %v583 = vld [vmem:[#allocation5 + $0x230] sm:$0xff]
        %v584 = vld [vmem:[#allocation5 + $0x238] sm:$0xff]
        %v585 = vld [vmem:[#allocation5 + $0x240] sm:$0xff]
        %v586 = vld [vmem:[#allocation5 + $0x248] sm:$0xff]
        %v587 = vld [vmem:[#allocation5 + $0x250] sm:$0xff]
        %v588 = vld [vmem:[#allocation5 + $0x258] sm:$0xff]
        %v589 = vld [vmem:[#allocation5 + $0x260] sm:$0xff]
        %v590 = vld [vmem:[#allocation5 + $0x268] sm:$0xff]
        %v591 = vld [vmem:[#allocation5 + $0x270] sm:$0xff]
        %v592 = vld [vmem:[#allocation5 + $0x278] sm:$0xff]
        %v593 = vld [vmem:[#allocation5 + $0x280] sm:$0xff]
        %v594 = vld [vmem:[#allocation5 + $0x288] sm:$0xff]
        %v595 = vld [vmem:[#allocation5 + $0x290] sm:$0xff]
        %v596 = vld [vmem:[#allocation5 + $0x298] sm:$0xff]
        %v597 = vld [vmem:[#allocation5 + $0x2a0] sm:$0xff]
        %v598 = vld [vmem:[#allocation5 + $0x2a8] sm:$0xff]
        %v599 = vld [vmem:[#allocation5 + $0x2b0] sm:$0xff]
        %v600 = vld [vmem:[#allocation5 + $0x2b8] sm:$0xff]
        %v601 = vld [vmem:[#allocation5 + $0x2c0] sm:$0xff]
        %v602 = vld [vmem:[#allocation5 + $0x2c8] sm:$0xff]
        %v603 = vld [vmem:[#allocation5 + $0x2d0] sm:$0xff]
        %v604 = vld [vmem:[#allocation5 + $0x2d8] sm:$0xff]
        %v605 = vld [vmem:[#allocation5 + $0x2e0] sm:$0xff]
        %v606 = vld [vmem:[#allocation5 + $0x2e8] sm:$0xff]
        %v607 = vld [vmem:[#allocation5 + $0x2f0] sm:$0xff]
        %v608 = vld [vmem:[#allocation5 + $0x2f8] sm:$0xff]
        %v609 = vld [vmem:[#allocation5 + $0x300] sm:$0xff]
        %v610 = vld [vmem:[#allocation5 + $0x308] sm:$0xff]
        %v611 = vld [vmem:[#allocation5 + $0x310] sm:$0xff]
        %v612 = vld [vmem:[#allocation5 + $0x318] sm:$0xff]
        %v613 = vld [vmem:[#allocation5 + $0x320] sm:$0xff]
        %v614 = vld [vmem:[#allocation5 + $0x328] sm:$0xff]
        %v615 = vld [vmem:[#allocation5 + $0x330] sm:$0xff]
        %v616 = vld [vmem:[#allocation5 + $0x338] sm:$0xff]
        %v617 = vld [vmem:[#allocation5 + $0x340] sm:$0xff]
        %v618 = vld [vmem:[#allocation5 + $0x348] sm:$0xff]
        %v619 = vld [vmem:[#allocation5 + $0x350] sm:$0xff]
        %v620 = vld [vmem:[#allocation5 + $0x358] sm:$0xff]
        %v621 = vld [vmem:[#allocation5 + $0x360] sm:$0xff]
        %v622 = vld [vmem:[#allocation5 + $0x368] sm:$0xff]
        %v623 = vld [vmem:[#allocation5 + $0x370] sm:$0xff]
        %v624 = vld [vmem:[#allocation5 + $0x378] sm:$0xff]
        %v625 = vld [vmem:[#allocation5 + $0x380] sm:$0xff]
        %v626 = vld [vmem:[#allocation5 + $0x388] sm:$0xff]
        %v627 = vld [vmem:[#allocation5 + $0x390] sm:$0xff]
        %v628 = vld [vmem:[#allocation5 + $0x398] sm:$0xff]
        %v629 = vld [vmem:[#allocation5 + $0x3a0] sm:$0xff]
        %v630 = vld [vmem:[#allocation5 + $0x3a8] sm:$0xff]
        %v631 = vld [vmem:[#allocation5 + $0x3b0] sm:$0xff]
        %v632 = vld [vmem:[#allocation5 + $0x3b8] sm:$0xff]
        %v633 = vld [vmem:[#allocation5 + $0x3c0] sm:$0xff]
        %v634 = vld [vmem:[#allocation5 + $0x3c8] sm:$0xff]
        %v635 = vld [vmem:[#allocation5 + $0x3d0] sm:$0xff]
        %v636 = vld [vmem:[#allocation5 + $0x3d8] sm:$0xff]
        %v637 = vld [vmem:[#allocation5 + $0x3e0] sm:$0xff]
        %v638 = vld [vmem:[#allocation5 + $0x3e8] sm:$0xff]
        %v639 = vld [vmem:[#allocation5 + $0x3f0] sm:$0xff]
        %v640 = vld [vmem:[#allocation5 + $0x3f8] sm:$0xff]
        %v641 = vld [vmem:[#allocation5 + $0x400] sm:$0xff]
        %v642 = vld [vmem:[#allocation5 + $0x408] sm:$0xff]
        %v643 = vld [vmem:[#allocation5 + $0x410] sm:$0xff]
        %v644 = vld [vmem:[#allocation5 + $0x418] sm:$0xff]
        %v645 = vld [vmem:[#allocation5 + $0x420] sm:$0xff]
        %v646 = vld [vmem:[#allocation5 + $0x428] sm:$0xff]
        %v647 = vld [vmem:[#allocation5 + $0x430] sm:$0xff]
        %v648 = vld [vmem:[#allocation5 + $0x438] sm:$0xff]
        %v649 = vld [vmem:[#allocation5 + $0x440] sm:$0xff]
        %v650 = vld [vmem:[#allocation5 + $0x448] sm:$0xff]
        %v651 = vld [vmem:[#allocation5 + $0x450] sm:$0xff]
        %v652 = vld [vmem:[#allocation5 + $0x458] sm:$0xff]
        %v653 = vld [vmem:[#allocation5 + $0x460] sm:$0xff]
        %v654 = vld [vmem:[#allocation5 + $0x468] sm:$0xff]
        %v655 = vld [vmem:[#allocation5 + $0x470] sm:$0xff]
        %v656 = vld [vmem:[#allocation5 + $0x478] sm:$0xff]
        %v657 = vld [vmem:[#allocation5 + $0x480] sm:$0xff]
        %v658 = vld [vmem:[#allocation5 + $0x488] sm:$0xff]
        %v659 = vld [vmem:[#allocation5 + $0x490] sm:$0xff]
        %v660 = vld [vmem:[#allocation5 + $0x498] sm:$0xff]
        %v661 = vld [vmem:[#allocation5 + $0x4a0] sm:$0xff]
        %v662 = vld [vmem:[#allocation5 + $0x4a8] sm:$0xff]
        %v663 = vld [vmem:[#allocation5 + $0x4b0] sm:$0xff]
        %v664 = vld [vmem:[#allocation5 + $0x4b8] sm:$0xff]
        %v665 = vld [vmem:[#allocation5 + $0x4c0] sm:$0xff]
        %v666 = vld [vmem:[#allocation5 + $0x4c8] sm:$0xff]
        %v667 = vld [vmem:[#allocation5 + $0x4d0] sm:$0xff]
        %v668 = vld [vmem:[#allocation5 + $0x4d8] sm:$0xff]
        %v669 = vld [vmem:[#allocation5 + $0x4e0] sm:$0xff]
        %v670 = vld [vmem:[#allocation5 + $0x4e8] sm:$0xff]
        %v671 = vld [vmem:[#allocation5 + $0x4f0] sm:$0xff]
        %v672 = vld [vmem:[#allocation5 + $0x4f8] sm:$0xff]
        %v673 = vld [vmem:[#allocation5 + $0x500] sm:$0xff]
        %v674 = vld [vmem:[#allocation5 + $0x508] sm:$0xff]
        %v675 = vld [vmem:[#allocation5 + $0x510] sm:$0xff]
        %v676 = vld [vmem:[#allocation5 + $0x518] sm:$0xff]
        %v677 = vld [vmem:[#allocation5 + $0x520] sm:$0xff]
        %v678 = vld [vmem:[#allocation5 + $0x528] sm:$0xff]
        %v679 = vld [vmem:[#allocation5 + $0x530] sm:$0xff]
        %v680 = vld [vmem:[#allocation5 + $0x538] sm:$0xff]
        %v681 = vld [vmem:[#allocation5 + $0x540] sm:$0xff]
        %v682 = vld [vmem:[#allocation5 + $0x548] sm:$0xff]
        %v683 = vld [vmem:[#allocation5 + $0x550] sm:$0xff]
        %v684 = vld [vmem:[#allocation5 + $0x558] sm:$0xff]
        %v685 = vld [vmem:[#allocation5 + $0x560] sm:$0xff]
        %v686 = vld [vmem:[#allocation5 + $0x568] sm:$0xff]
        %v687 = vld [vmem:[#allocation5 + $0x570] sm:$0xff]
        %v688 = vld [vmem:[#allocation5 + $0x578] sm:$0xff]
        %v689 = vld [vmem:[#allocation5 + $0x580] sm:$0xff]
        %v690 = vld [vmem:[#allocation5 + $0x588] sm:$0xff]
        %v691 = vld [vmem:[#allocation5 + $0x590] sm:$0xff]
        %v692 = vld [vmem:[#allocation5 + $0x598] sm:$0xff]
        %v693 = vld [vmem:[#allocation5 + $0x5a0] sm:$0xff]
        %v694 = vld [vmem:[#allocation5 + $0x5a8] sm:$0xff]
        %v695 = vld [vmem:[#allocation5 + $0x5b0] sm:$0xff]
        %v696 = vld [vmem:[#allocation5 + $0x5b8] sm:$0xff]
        %v697 = vld [vmem:[#allocation5 + $0x5c0] sm:$0xff]
        %v698 = vld [vmem:[#allocation5 + $0x5c8] sm:$0xff]
        %v699 = vld [vmem:[#allocation5 + $0x5d0] sm:$0xff]
        %v700 = vld [vmem:[#allocation5 + $0x5d8] sm:$0xff]
        %v701 = vld [vmem:[#allocation5 + $0x5e0] sm:$0xff]
        %v702 = vld [vmem:[#allocation5 + $0x5e8] sm:$0xff]
        %v703 = vld [vmem:[#allocation5 + $0x5f0] sm:$0xff]
        %v704 = vld [vmem:[#allocation5 + $0x5f8] sm:$0xff]
        %v705 = vld [vmem:[%s2] sm:$0x3]
        %v707 = vperm.slane %v705, 0
        %v708 = vperm.slane %v705, 1
        %v831 = vunpack.c.l.b16 %v393
        %v832 = vunpack.c.h.b16 %v393
        %v833 = vunpack.c.l.b16 %v394
        %v834 = vunpack.c.h.b16 %v394
        %v835 = vunpack.c.l.b16 %v395
        %v836 = vunpack.c.h.b16 %v395
        %v837 = vunpack.c.l.b16 %v396
        %v838 = vunpack.c.h.b16 %v396
        %v839 = vunpack.c.l.b16 %v397
        %v840 = vunpack.c.h.b16 %v397
        %v841 = vunpack.c.l.b16 %v398
        %v842 = vunpack.c.h.b16 %v398
        %v843 = vunpack.c.l.b16 %v399
        %v844 = vunpack.c.h.b16 %v399
        %v845 = vunpack.c.l.b16 %v400
        %v846 = vunpack.c.h.b16 %v400
        %v847 = vunpack.c.l.b16 %v401
        %v848 = vunpack.c.h.b16 %v401
        %v849 = vunpack.c.l.b16 %v402
        %v850 = vunpack.c.h.b16 %v402
        %v851 = vunpack.c.l.b16 %v403
        %v852 = vunpack.c.h.b16 %v403
        %v853 = vunpack.c.l.b16 %v404
        %v854 = vunpack.c.h.b16 %v404
        %v855 = vunpack.c.l.b16 %v405
        %v856 = vunpack.c.h.b16 %v405
        %v857 = vunpack.c.l.b16 %v406
        %v858 = vunpack.c.h.b16 %v406
        %v859 = vunpack.c.l.b16 %v407
        %v860 = vunpack.c.h.b16 %v407
        %v861 = vunpack.c.l.b16 %v408
        %v862 = vunpack.c.h.b16 %v408
        %v863 = vunpack.c.l.b16 %v409
        %v864 = vunpack.c.h.b16 %v409
        %v865 = vunpack.c.l.b16 %v410
        %v866 = vunpack.c.h.b16 %v410
        %v867 = vunpack.c.l.b16 %v411
        %v868 = vunpack.c.h.b16 %v411
        %v869 = vunpack.c.l.b16 %v412
        %v870 = vunpack.c.h.b16 %v412
        %v871 = vunpack.c.l.b16 %v413
        %v872 = vunpack.c.h.b16 %v413
        %v873 = vunpack.c.l.b16 %v414
        %v874 = vunpack.c.h.b16 %v414
        %v875 = vunpack.c.l.b16 %v415
        %v876 = vunpack.c.h.b16 %v415
        %v877 = vunpack.c.l.b16 %v416
        %v878 = vunpack.c.h.b16 %v416
        %v879 = vunpack.c.l.b16 %v417
        %v880 = vunpack.c.h.b16 %v417
        %v881 = vunpack.c.l.b16 %v418
        %v882 = vunpack.c.h.b16 %v418
        %v883 = vunpack.c.l.b16 %v419
        %v884 = vunpack.c.h.b16 %v419
        %v885 = vunpack.c.l.b16 %v420
        %v886 = vunpack.c.h.b16 %v420
        %v887 = vunpack.c.l.b16 %v421
        %v888 = vunpack.c.h.b16 %v421
        %v889 = vunpack.c.l.b16 %v422
        %v890 = vunpack.c.h.b16 %v422
        %v891 = vunpack.c.l.b16 %v423
        %v892 = vunpack.c.h.b16 %v423
        %v893 = vunpack.c.l.b16 %v424
        %v894 = vunpack.c.h.b16 %v424
        %v895 = vunpack.c.l.b16 %v425
        %v896 = vunpack.c.h.b16 %v425
        %v897 = vunpack.c.l.b16 %v426
        %v898 = vunpack.c.h.b16 %v426
        %v899 = vunpack.c.l.b16 %v427
        %v900 = vunpack.c.h.b16 %v427
        %v901 = vunpack.c.l.b16 %v428
        %v902 = vunpack.c.h.b16 %v428
        %v903 = vunpack.c.l.b16 %v429
        %v904 = vunpack.c.h.b16 %v429
        %v905 = vunpack.c.l.b16 %v430
        %v906 = vunpack.c.h.b16 %v430
        %v907 = vunpack.c.l.b16 %v431
        %v908 = vunpack.c.h.b16 %v431
        %v909 = vunpack.c.l.b16 %v432
        %v910 = vunpack.c.h.b16 %v432
        %v911 = vunpack.c.l.b16 %v433
        %v912 = vunpack.c.h.b16 %v433
        %v913 = vunpack.c.l.b16 %v434
        %v914 = vunpack.c.h.b16 %v434
        %v915 = vunpack.c.l.b16 %v435
        %v916 = vunpack.c.h.b16 %v435
        %v917 = vunpack.c.l.b16 %v436
        %v918 = vunpack.c.h.b16 %v436
        %v919 = vunpack.c.l.b16 %v437
        %v920 = vunpack.c.h.b16 %v437
        %v921 = vunpack.c.l.b16 %v438
        %v922 = vunpack.c.h.b16 %v438
        %v923 = vunpack.c.l.b16 %v439
        %v924 = vunpack.c.h.b16 %v439
        %v925 = vunpack.c.l.b16 %v440
        %v926 = vunpack.c.h.b16 %v440
        %v927 = vunpack.c.l.b16 %v441
        %v928 = vunpack.c.h.b16 %v441
        %v929 = vunpack.c.l.b16 %v442
        %v930 = vunpack.c.h.b16 %v442
        %v931 = vunpack.c.l.b16 %v443
        %v932 = vunpack.c.h.b16 %v443
        %v933 = vunpack.c.l.b16 %v444
        %v934 = vunpack.c.h.b16 %v444
        %v935 = vunpack.c.l.b16 %v445
        %v936 = vunpack.c.h.b16 %v445
        %v937 = vunpack.c.l.b16 %v446
        %v938 = vunpack.c.h.b16 %v446
        %v939 = vunpack.c.l.b16 %v447
        %v940 = vunpack.c.h.b16 %v447
        %v941 = vunpack.c.l.b16 %v448
        %v942 = vunpack.c.h.b16 %v448
        %v943 = vunpack.c.l.b16 %v449
        %v944 = vunpack.c.h.b16 %v449
        %v945 = vunpack.c.l.b16 %v450
        %v946 = vunpack.c.h.b16 %v450
        %v947 = vunpack.c.l.b16 %v451
        %v948 = vunpack.c.h.b16 %v451
        %v949 = vunpack.c.l.b16 %v452
        %v950 = vunpack.c.h.b16 %v452
        %v951 = vunpack.c.l.b16 %v453
        %v952 = vunpack.c.h.b16 %v453
        %v953 = vunpack.c.l.b16 %v454
        %v954 = vunpack.c.h.b16 %v454
        %v955 = vunpack.c.l.b16 %v455
        %v956 = vunpack.c.h.b16 %v455
        %v957 = vunpack.c.l.b16 %v456
        %v958 = vunpack.c.h.b16 %v456
        %v959 = vunpack.c.l.b16 %v457
        %v960 = vunpack.c.h.b16 %v457
        %v961 = vunpack.c.l.b16 %v458
        %v962 = vunpack.c.h.b16 %v458
        %v963 = vunpack.c.l.b16 %v459
        %v964 = vunpack.c.h.b16 %v459
        %v965 = vunpack.c.l.b16 %v460
        %v966 = vunpack.c.h.b16 %v460
        %v967 = vunpack.c.l.b16 %v461
        %v968 = vunpack.c.h.b16 %v461
        %v969 = vunpack.c.l.b16 %v462
        %v970 = vunpack.c.h.b16 %v462
        %v971 = vunpack.c.l.b16 %v463
        %v972 = vunpack.c.h.b16 %v463
        %v973 = vunpack.c.l.b16 %v464
        %v974 = vunpack.c.h.b16 %v464
        %v975 = vunpack.c.l.b16 %v465
        %v976 = vunpack.c.h.b16 %v465
        %v977 = vunpack.c.l.b16 %v466
        %v978 = vunpack.c.h.b16 %v466
        %v979 = vunpack.c.l.b16 %v467
        %v980 = vunpack.c.h.b16 %v467
        %v981 = vunpack.c.l.b16 %v468
        %v982 = vunpack.c.h.b16 %v468
        %v983 = vunpack.c.l.b16 %v469
        %v984 = vunpack.c.h.b16 %v469
        %v985 = vunpack.c.l.b16 %v470
        %v986 = vunpack.c.h.b16 %v470
        %v987 = vunpack.c.l.b16 %v471
        %v988 = vunpack.c.h.b16 %v471
        %v989 = vunpack.c.l.b16 %v472
        %v990 = vunpack.c.h.b16 %v472
        %v991 = vunpack.c.l.b16 %v473
        %v992 = vunpack.c.h.b16 %v473
        %v993 = vunpack.c.l.b16 %v474
        %v994 = vunpack.c.h.b16 %v474
        %v995 = vunpack.c.l.b16 %v475
        %v996 = vunpack.c.h.b16 %v475
        %v997 = vunpack.c.l.b16 %v476
        %v998 = vunpack.c.h.b16 %v476
        %v999 = vunpack.c.l.b16 %v477
        %v1000 = vunpack.c.h.b16 %v477
        %v1001 = vunpack.c.l.b16 %v478
        %v1002 = vunpack.c.h.b16 %v478
        %v1003 = vunpack.c.l.b16 %v479
        %v1004 = vunpack.c.h.b16 %v479
        %v1005 = vunpack.c.l.b16 %v480
        %v1006 = vunpack.c.h.b16 %v480
        %v1007 = vunpack.c.l.b16 %v481
        %v1008 = vunpack.c.h.b16 %v481
        %v1009 = vunpack.c.l.b16 %v482
        %v1010 = vunpack.c.h.b16 %v482
        %v1011 = vunpack.c.l.b16 %v483
        %v1012 = vunpack.c.h.b16 %v483
        %v1013 = vunpack.c.l.b16 %v484
        %v1014 = vunpack.c.h.b16 %v484
        %v1015 = vunpack.c.l.b16 %v485
        %v1016 = vunpack.c.h.b16 %v485
        %v1017 = vunpack.c.l.b16 %v486
        %v1018 = vunpack.c.h.b16 %v486
        %v1019 = vunpack.c.l.b16 %v487
        %v1020 = vunpack.c.h.b16 %v487
        %v1021 = vunpack.c.l.b16 %v488
        %v1022 = vunpack.c.h.b16 %v488
        %v1023 = vunpack.c.l.b16 %v489
        %v1024 = vunpack.c.h.b16 %v489
        %v1025 = vunpack.c.l.b16 %v490
        %v1026 = vunpack.c.h.b16 %v490
        %v1027 = vunpack.c.l.b16 %v491
        %v1028 = vunpack.c.h.b16 %v491
        %v1029 = vunpack.c.l.b16 %v492
        %v1030 = vunpack.c.h.b16 %v492
        %v1031 = vunpack.c.l.b16 %v493
        %v1032 = vunpack.c.h.b16 %v493
        %v1033 = vunpack.c.l.b16 %v494
        %v1034 = vunpack.c.h.b16 %v494
        %v1035 = vunpack.c.l.b16 %v495
        %v1036 = vunpack.c.h.b16 %v495
        %v1037 = vunpack.c.l.b16 %v496
        %v1038 = vunpack.c.h.b16 %v496
        %v1039 = vunpack.c.l.b16 %v497
        %v1040 = vunpack.c.h.b16 %v497
        %v1041 = vunpack.c.l.b16 %v498
        %v1042 = vunpack.c.h.b16 %v498
        %v1043 = vunpack.c.l.b16 %v499
        %v1044 = vunpack.c.h.b16 %v499
        %v1045 = vunpack.c.l.b16 %v500
        %v1046 = vunpack.c.h.b16 %v500
        %v1047 = vunpack.c.l.b16 %v501
        %v1048 = vunpack.c.h.b16 %v501
        %v1049 = vunpack.c.l.b16 %v502
        %v1050 = vunpack.c.h.b16 %v502
        %v1051 = vunpack.c.l.b16 %v503
        %v1052 = vunpack.c.h.b16 %v503
        %v1053 = vunpack.c.l.b16 %v504
        %v1054 = vunpack.c.h.b16 %v504
        %v1055 = vunpack.c.l.b16 %v505
        %v1056 = vunpack.c.h.b16 %v505
        %v1057 = vunpack.c.l.b16 %v506
        %v1058 = vunpack.c.h.b16 %v506
        %v1059 = vunpack.c.l.b16 %v507
        %v1060 = vunpack.c.h.b16 %v507
        %v1061 = vunpack.c.l.b16 %v508
        %v1062 = vunpack.c.h.b16 %v508
        %v1063 = vunpack.c.l.b16 %v509
        %v1064 = vunpack.c.h.b16 %v509
        %v1065 = vunpack.c.l.b16 %v510
        %v1066 = vunpack.c.h.b16 %v510
        %v1067 = vunpack.c.l.b16 %v511
        %v1068 = vunpack.c.h.b16 %v511
        %v1069 = vunpack.c.l.b16 %v512
        %v1070 = vunpack.c.h.b16 %v512
        %v1071 = vpack.c.b16 %v843, %v831
        %v1072 = vpack.c.b16 %v844, %v832
        %v1073 = vpack.c.b16 %v845, %v833
        %v1074 = vpack.c.b16 %v846, %v834
        %v1075 = vpack.c.b16 %v847, %v835
        %v1076 = vpack.c.b16 %v848, %v836
        %v1077 = vpack.c.b16 %v849, %v837
        %v1078 = vpack.c.b16 %v850, %v838
        %v1079 = vpack.c.b16 %v851, %v839
        %v1080 = vpack.c.b16 %v852, %v840
        %v1081 = vpack.c.b16 %v853, %v841
        %v1082 = vpack.c.b16 %v854, %v842
        %v1083 = vpack.c.b16 %v867, %v855
        %v1084 = vpack.c.b16 %v868, %v856
        %v1085 = vpack.c.b16 %v869, %v857
        %v1086 = vpack.c.b16 %v870, %v858
        %v1087 = vpack.c.b16 %v871, %v859
        %v1088 = vpack.c.b16 %v872, %v860
        %v1089 = vpack.c.b16 %v873, %v861
        %v1090 = vpack.c.b16 %v874, %v862
        %v1091 = vpack.c.b16 %v875, %v863
        %v1092 = vpack.c.b16 %v876, %v864
        %v1093 = vpack.c.b16 %v877, %v865
        %v1094 = vpack.c.b16 %v878, %v866
        %v1095 = vpack.c.b16 %v891, %v879
        %v1096 = vpack.c.b16 %v892, %v880
        %v1097 = vpack.c.b16 %v893, %v881
        %v1098 = vpack.c.b16 %v894, %v882
        %v1099 = vpack.c.b16 %v895, %v883
        %v1100 = vpack.c.b16 %v896, %v884
        %v1101 = vpack.c.b16 %v897, %v885
        %v1102 = vpack.c.b16 %v898, %v886
        %v1103 = vpack.c.b16 %v899, %v887
        %v1104 = vpack.c.b16 %v900, %v888
        %v1105 = vpack.c.b16 %v901, %v889
        %v1106 = vpack.c.b16 %v902, %v890
        %v1107 = vpack.c.b16 %v915, %v903
        %v1108 = vpack.c.b16 %v916, %v904
        %v1109 = vpack.c.b16 %v917, %v905
        %v1110 = vpack.c.b16 %v918, %v906
        %v1111 = vpack.c.b16 %v919, %v907
        %v1112 = vpack.c.b16 %v920, %v908
        %v1113 = vpack.c.b16 %v921, %v909
        %v1114 = vpack.c.b16 %v922, %v910
        %v1115 = vpack.c.b16 %v923, %v911
        %v1116 = vpack.c.b16 %v924, %v912
        %v1117 = vpack.c.b16 %v925, %v913
        %v1118 = vpack.c.b16 %v926, %v914
        %v1119 = vpack.c.b16 %v939, %v927
        %v1120 = vpack.c.b16 %v940, %v928
        %v1121 = vpack.c.b16 %v941, %v929
        %v1122 = vpack.c.b16 %v942, %v930
        %v1123 = vpack.c.b16 %v943, %v931
        %v1124 = vpack.c.b16 %v944, %v932
        %v1125 = vpack.c.b16 %v945, %v933
        %v1126 = vpack.c.b16 %v946, %v934
        %v1127 = vpack.c.b16 %v947, %v935
        %v1128 = vpack.c.b16 %v948, %v936
        %v1129 = vpack.c.b16 %v949, %v937
        %v1130 = vpack.c.b16 %v950, %v938
        %v1131 = vpack.c.b16 %v963, %v951
        %v1132 = vpack.c.b16 %v964, %v952
        %v1133 = vpack.c.b16 %v965, %v953
        %v1134 = vpack.c.b16 %v966, %v954
        %v1135 = vpack.c.b16 %v967, %v955
        %v1136 = vpack.c.b16 %v968, %v956
        %v1137 = vpack.c.b16 %v969, %v957
        %v1138 = vpack.c.b16 %v970, %v958
        %v1139 = vpack.c.b16 %v971, %v959
        %v1140 = vpack.c.b16 %v972, %v960
        %v1141 = vpack.c.b16 %v973, %v961
        %v1142 = vpack.c.b16 %v974, %v962
        %v1143 = vpack.c.b16 %v987, %v975
        %v1144 = vpack.c.b16 %v988, %v976
        %v1145 = vpack.c.b16 %v989, %v977
        %v1146 = vpack.c.b16 %v990, %v978
        %v1147 = vpack.c.b16 %v991, %v979
        %v1148 = vpack.c.b16 %v992, %v980
        %v1149 = vpack.c.b16 %v993, %v981
        %v1150 = vpack.c.b16 %v994, %v982
        %v1151 = vpack.c.b16 %v995, %v983
        %v1152 = vpack.c.b16 %v996, %v984
        %v1153 = vpack.c.b16 %v997, %v985
        %v1154 = vpack.c.b16 %v998, %v986
        %v1155 = vpack.c.b16 %v1011, %v999
        %v1156 = vpack.c.b16 %v1012, %v1000
        %v1157 = vpack.c.b16 %v1013, %v1001
        %v1158 = vpack.c.b16 %v1014, %v1002
        %v1159 = vpack.c.b16 %v1015, %v1003
        %v1160 = vpack.c.b16 %v1016, %v1004
        %v1161 = vpack.c.b16 %v1017, %v1005
        %v1162 = vpack.c.b16 %v1018, %v1006
        %v1163 = vpack.c.b16 %v1019, %v1007
        %v1164 = vpack.c.b16 %v1020, %v1008
        %v1165 = vpack.c.b16 %v1021, %v1009
        %v1166 = vpack.c.b16 %v1022, %v1010
        %v1167 = vpack.c.b16 %v1035, %v1023
        %v1168 = vpack.c.b16 %v1036, %v1024
        %v1169 = vpack.c.b16 %v1037, %v1025
        %v1170 = vpack.c.b16 %v1038, %v1026
        %v1171 = vpack.c.b16 %v1039, %v1027
        %v1172 = vpack.c.b16 %v1040, %v1028
        %v1173 = vpack.c.b16 %v1041, %v1029
        %v1174 = vpack.c.b16 %v1042, %v1030
        %v1175 = vpack.c.b16 %v1043, %v1031
        %v1176 = vpack.c.b16 %v1044, %v1032
        %v1177 = vpack.c.b16 %v1045, %v1033
        %v1178 = vpack.c.b16 %v1046, %v1034
        %v1179 = vpack.c.b16 %v1059, %v1047
        %v1180 = vpack.c.b16 %v1060, %v1048
        %v1181 = vpack.c.b16 %v1061, %v1049
        %v1182 = vpack.c.b16 %v1062, %v1050
        %v1183 = vpack.c.b16 %v1063, %v1051
        %v1184 = vpack.c.b16 %v1064, %v1052
        %v1185 = vpack.c.b16 %v1065, %v1053
        %v1186 = vpack.c.b16 %v1066, %v1054
        %v1187 = vpack.c.b16 %v1067, %v1055
        %v1188 = vpack.c.b16 %v1068, %v1056
        %v1189 = vpack.c.b16 %v1069, %v1057
        %v1190 = vpack.c.b16 %v1070, %v1058
        %v1503 = vunpack.c.l.b16 %v513
        %v1504 = vunpack.c.h.b16 %v513
        %v1505 = vunpack.c.l.b16 %v514
        %v1506 = vunpack.c.h.b16 %v514
        %v1507 = vunpack.c.l.b16 %v515
        %v1508 = vunpack.c.h.b16 %v515
        %v1509 = vunpack.c.l.b16 %v516
        %v1510 = vunpack.c.h.b16 %v516
        %v1511 = vunpack.c.l.b16 %v517
        %v1512 = vunpack.c.h.b16 %v517
        %v1513 = vunpack.c.l.b16 %v518
        %v1514 = vunpack.c.h.b16 %v518
        %v1515 = vunpack.c.l.b16 %v519
        %v1516 = vunpack.c.h.b16 %v519
        %v1517 = vunpack.c.l.b16 %v520
        %v1518 = vunpack.c.h.b16 %v520
        %v1519 = vunpack.c.l.b16 %v521
        %v1520 = vunpack.c.h.b16 %v521
        %v1521 = vunpack.c.l.b16 %v522
        %v1522 = vunpack.c.h.b16 %v522
        %v1523 = vunpack.c.l.b16 %v523
        %v1524 = vunpack.c.h.b16 %v523
        %v1525 = vunpack.c.l.b16 %v524
        %v1526 = vunpack.c.h.b16 %v524
        %v1527 = vunpack.c.l.b16 %v525
        %v1528 = vunpack.c.h.b16 %v525
        %v1529 = vunpack.c.l.b16 %v526
        %v1530 = vunpack.c.h.b16 %v526
        %v1531 = vunpack.c.l.b16 %v527
        %v1532 = vunpack.c.h.b16 %v527
        %v1533 = vunpack.c.l.b16 %v528
        %v1534 = vunpack.c.h.b16 %v528
        %v1535 = vunpack.c.l.b16 %v529
        %v1536 = vunpack.c.h.b16 %v529
        %v1537 = vunpack.c.l.b16 %v530
        %v1538 = vunpack.c.h.b16 %v530
        %v1539 = vunpack.c.l.b16 %v531
        %v1540 = vunpack.c.h.b16 %v531
        %v1541 = vunpack.c.l.b16 %v532
        %v1542 = vunpack.c.h.b16 %v532
        %v1543 = vunpack.c.l.b16 %v533
        %v1544 = vunpack.c.h.b16 %v533
        %v1545 = vunpack.c.l.b16 %v534
        %v1546 = vunpack.c.h.b16 %v534
        %v1547 = vunpack.c.l.b16 %v535
        %v1548 = vunpack.c.h.b16 %v535
        %v1549 = vunpack.c.l.b16 %v536
        %v1550 = vunpack.c.h.b16 %v536
        %v1551 = vunpack.c.l.b16 %v537
        %v1552 = vunpack.c.h.b16 %v537
        %v1553 = vunpack.c.l.b16 %v538
        %v1554 = vunpack.c.h.b16 %v538
        %v1555 = vunpack.c.l.b16 %v539
        %v1556 = vunpack.c.h.b16 %v539
        %v1557 = vunpack.c.l.b16 %v540
        %v1558 = vunpack.c.h.b16 %v540
        %v1559 = vunpack.c.l.b16 %v541
        %v1560 = vunpack.c.h.b16 %v541
        %v1561 = vunpack.c.l.b16 %v542
        %v1562 = vunpack.c.h.b16 %v542
        %v1563 = vunpack.c.l.b16 %v543
        %v1564 = vunpack.c.h.b16 %v543
        %v1565 = vunpack.c.l.b16 %v544
        %v1566 = vunpack.c.h.b16 %v544
        %v1567 = vunpack.c.l.b16 %v545
        %v1568 = vunpack.c.h.b16 %v545
        %v1569 = vunpack.c.l.b16 %v546
        %v1570 = vunpack.c.h.b16 %v546
        %v1571 = vunpack.c.l.b16 %v547
        %v1572 = vunpack.c.h.b16 %v547
        %v1573 = vunpack.c.l.b16 %v548
        %v1574 = vunpack.c.h.b16 %v548
        %v1575 = vunpack.c.l.b16 %v549
        %v1576 = vunpack.c.h.b16 %v549
        %v1577 = vunpack.c.l.b16 %v550
        %v1578 = vunpack.c.h.b16 %v550
        %v1579 = vunpack.c.l.b16 %v551
        %v1580 = vunpack.c.h.b16 %v551
        %v1581 = vunpack.c.l.b16 %v552
        %v1582 = vunpack.c.h.b16 %v552
        %v1583 = vunpack.c.l.b16 %v553
        %v1584 = vunpack.c.h.b16 %v553
        %v1585 = vunpack.c.l.b16 %v554
        %v1586 = vunpack.c.h.b16 %v554
        %v1587 = vunpack.c.l.b16 %v555
        %v1588 = vunpack.c.h.b16 %v555
        %v1589 = vunpack.c.l.b16 %v556
        %v1590 = vunpack.c.h.b16 %v556
        %v1591 = vunpack.c.l.b16 %v557
        %v1592 = vunpack.c.h.b16 %v557
        %v1593 = vunpack.c.l.b16 %v558
        %v1594 = vunpack.c.h.b16 %v558
        %v1595 = vunpack.c.l.b16 %v559
        %v1596 = vunpack.c.h.b16 %v559
        %v1597 = vunpack.c.l.b16 %v560
        %v1598 = vunpack.c.h.b16 %v560
        %v1599 = vunpack.c.l.b16 %v561
        %v1600 = vunpack.c.h.b16 %v561
        %v1601 = vunpack.c.l.b16 %v562
        %v1602 = vunpack.c.h.b16 %v562
        %v1603 = vunpack.c.l.b16 %v563
        %v1604 = vunpack.c.h.b16 %v563
        %v1605 = vunpack.c.l.b16 %v564
        %v1606 = vunpack.c.h.b16 %v564
        %v1607 = vunpack.c.l.b16 %v565
        %v1608 = vunpack.c.h.b16 %v565
        %v1609 = vunpack.c.l.b16 %v566
        %v1610 = vunpack.c.h.b16 %v566
        %v1611 = vunpack.c.l.b16 %v567
        %v1612 = vunpack.c.h.b16 %v567
        %v1613 = vunpack.c.l.b16 %v568
        %v1614 = vunpack.c.h.b16 %v568
        %v1615 = vunpack.c.l.b16 %v569
        %v1616 = vunpack.c.h.b16 %v569
        %v1617 = vunpack.c.l.b16 %v570
        %v1618 = vunpack.c.h.b16 %v570
        %v1619 = vunpack.c.l.b16 %v571
        %v1620 = vunpack.c.h.b16 %v571
        %v1621 = vunpack.c.l.b16 %v572
        %v1622 = vunpack.c.h.b16 %v572
        %v1623 = vunpack.c.l.b16 %v573
        %v1624 = vunpack.c.h.b16 %v573
        %v1625 = vunpack.c.l.b16 %v574
        %v1626 = vunpack.c.h.b16 %v574
        %v1627 = vunpack.c.l.b16 %v575
        %v1628 = vunpack.c.h.b16 %v575
        %v1629 = vunpack.c.l.b16 %v576
        %v1630 = vunpack.c.h.b16 %v576
        %v1631 = vunpack.c.l.b16 %v577
        %v1632 = vunpack.c.h.b16 %v577
        %v1633 = vunpack.c.l.b16 %v578
        %v1634 = vunpack.c.h.b16 %v578
        %v1635 = vunpack.c.l.b16 %v579
        %v1636 = vunpack.c.h.b16 %v579
        %v1637 = vunpack.c.l.b16 %v580
        %v1638 = vunpack.c.h.b16 %v580
        %v1639 = vunpack.c.l.b16 %v581
        %v1640 = vunpack.c.h.b16 %v581
        %v1641 = vunpack.c.l.b16 %v582
        %v1642 = vunpack.c.h.b16 %v582
        %v1643 = vunpack.c.l.b16 %v583
        %v1644 = vunpack.c.h.b16 %v583
        %v1645 = vunpack.c.l.b16 %v584
        %v1646 = vunpack.c.h.b16 %v584
        %v1647 = vunpack.c.l.b16 %v585
        %v1648 = vunpack.c.h.b16 %v585
        %v1649 = vunpack.c.l.b16 %v586
        %v1650 = vunpack.c.h.b16 %v586
        %v1651 = vunpack.c.l.b16 %v587
        %v1652 = vunpack.c.h.b16 %v587
        %v1653 = vunpack.c.l.b16 %v588
        %v1654 = vunpack.c.h.b16 %v588
        %v1655 = vunpack.c.l.b16 %v589
        %v1656 = vunpack.c.h.b16 %v589
        %v1657 = vunpack.c.l.b16 %v590
        %v1658 = vunpack.c.h.b16 %v590
        %v1659 = vunpack.c.l.b16 %v591
        %v1660 = vunpack.c.h.b16 %v591
        %v1661 = vunpack.c.l.b16 %v592
        %v1662 = vunpack.c.h.b16 %v592
        %v1663 = vunpack.c.l.b16 %v593
        %v1664 = vunpack.c.h.b16 %v593
        %v1665 = vunpack.c.l.b16 %v594
        %v1666 = vunpack.c.h.b16 %v594
        %v1667 = vunpack.c.l.b16 %v595
        %v1668 = vunpack.c.h.b16 %v595
        %v1669 = vunpack.c.l.b16 %v596
        %v1670 = vunpack.c.h.b16 %v596
        %v1671 = vunpack.c.l.b16 %v597
        %v1672 = vunpack.c.h.b16 %v597
        %v1673 = vunpack.c.l.b16 %v598
        %v1674 = vunpack.c.h.b16 %v598
        %v1675 = vunpack.c.l.b16 %v599
        %v1676 = vunpack.c.h.b16 %v599
        %v1677 = vunpack.c.l.b16 %v600
        %v1678 = vunpack.c.h.b16 %v600
        %v1679 = vunpack.c.l.b16 %v601
        %v1680 = vunpack.c.h.b16 %v601
        %v1681 = vunpack.c.l.b16 %v602
        %v1682 = vunpack.c.h.b16 %v602
        %v1683 = vunpack.c.l.b16 %v603
        %v1684 = vunpack.c.h.b16 %v603
        %v1685 = vunpack.c.l.b16 %v604
        %v1686 = vunpack.c.h.b16 %v604
        %v1687 = vunpack.c.l.b16 %v605
        %v1688 = vunpack.c.h.b16 %v605
        %v1689 = vunpack.c.l.b16 %v606
        %v1690 = vunpack.c.h.b16 %v606
        %v1691 = vunpack.c.l.b16 %v607
        %v1692 = vunpack.c.h.b16 %v607
        %v1693 = vunpack.c.l.b16 %v608
        %v1694 = vunpack.c.h.b16 %v608
        %v1695 = vunpack.c.l.b16 %v609
        %v1696 = vunpack.c.h.b16 %v609
        %v1697 = vunpack.c.l.b16 %v610
        %v1698 = vunpack.c.h.b16 %v610
        %v1699 = vunpack.c.l.b16 %v611
        %v1700 = vunpack.c.h.b16 %v611
        %v1701 = vunpack.c.l.b16 %v612
        %v1702 = vunpack.c.h.b16 %v612
        %v1703 = vunpack.c.l.b16 %v613
        %v1704 = vunpack.c.h.b16 %v613
        %v1705 = vunpack.c.l.b16 %v614
        %v1706 = vunpack.c.h.b16 %v614
        %v1707 = vunpack.c.l.b16 %v615
        %v1708 = vunpack.c.h.b16 %v615
        %v1709 = vunpack.c.l.b16 %v616
        %v1710 = vunpack.c.h.b16 %v616
        %v1711 = vunpack.c.l.b16 %v617
        %v1712 = vunpack.c.h.b16 %v617
        %v1713 = vunpack.c.l.b16 %v618
        %v1714 = vunpack.c.h.b16 %v618
        %v1715 = vunpack.c.l.b16 %v619
        %v1716 = vunpack.c.h.b16 %v619
        %v1717 = vunpack.c.l.b16 %v620
        %v1718 = vunpack.c.h.b16 %v620
        %v1719 = vunpack.c.l.b16 %v621
        %v1720 = vunpack.c.h.b16 %v621
        %v1721 = vunpack.c.l.b16 %v622
        %v1722 = vunpack.c.h.b16 %v622
        %v1723 = vunpack.c.l.b16 %v623
        %v1724 = vunpack.c.h.b16 %v623
        %v1725 = vunpack.c.l.b16 %v624
        %v1726 = vunpack.c.h.b16 %v624
        %v1727 = vunpack.c.l.b16 %v625
        %v1728 = vunpack.c.h.b16 %v625
        %v1729 = vunpack.c.l.b16 %v626
        %v1730 = vunpack.c.h.b16 %v626
        %v1731 = vunpack.c.l.b16 %v627
        %v1732 = vunpack.c.h.b16 %v627
        %v1733 = vunpack.c.l.b16 %v628
        %v1734 = vunpack.c.h.b16 %v628
        %v1735 = vunpack.c.l.b16 %v629
        %v1736 = vunpack.c.h.b16 %v629
        %v1737 = vunpack.c.l.b16 %v630
        %v1738 = vunpack.c.h.b16 %v630
        %v1739 = vunpack.c.l.b16 %v631
        %v1740 = vunpack.c.h.b16 %v631
        %v1741 = vunpack.c.l.b16 %v632
        %v1742 = vunpack.c.h.b16 %v632
        %v1743 = vunpack.c.l.b16 %v633
        %v1744 = vunpack.c.h.b16 %v633
        %v1745 = vunpack.c.l.b16 %v634
        %v1746 = vunpack.c.h.b16 %v634
        %v1747 = vunpack.c.l.b16 %v635
        %v1748 = vunpack.c.h.b16 %v635
        %v1749 = vunpack.c.l.b16 %v636
        %v1750 = vunpack.c.h.b16 %v636
        %v1751 = vunpack.c.l.b16 %v637
        %v1752 = vunpack.c.h.b16 %v637
        %v1753 = vunpack.c.l.b16 %v638
        %v1754 = vunpack.c.h.b16 %v638
        %v1755 = vunpack.c.l.b16 %v639
        %v1756 = vunpack.c.h.b16 %v639
        %v1757 = vunpack.c.l.b16 %v640
        %v1758 = vunpack.c.h.b16 %v640
        %v1759 = vunpack.c.l.b16 %v641
        %v1760 = vunpack.c.h.b16 %v641
        %v1761 = vunpack.c.l.b16 %v642
        %v1762 = vunpack.c.h.b16 %v642
        %v1763 = vunpack.c.l.b16 %v643
        %v1764 = vunpack.c.h.b16 %v643
        %v1765 = vunpack.c.l.b16 %v644
        %v1766 = vunpack.c.h.b16 %v644
        %v1767 = vunpack.c.l.b16 %v645
        %v1768 = vunpack.c.h.b16 %v645
        %v1769 = vunpack.c.l.b16 %v646
        %v1770 = vunpack.c.h.b16 %v646
        %v1771 = vunpack.c.l.b16 %v647
        %v1772 = vunpack.c.h.b16 %v647
        %v1773 = vunpack.c.l.b16 %v648
        %v1774 = vunpack.c.h.b16 %v648
        %v1775 = vunpack.c.l.b16 %v649
        %v1776 = vunpack.c.h.b16 %v649
        %v1777 = vunpack.c.l.b16 %v650
        %v1778 = vunpack.c.h.b16 %v650
        %v1779 = vunpack.c.l.b16 %v651
        %v1780 = vunpack.c.h.b16 %v651
        %v1781 = vunpack.c.l.b16 %v652
        %v1782 = vunpack.c.h.b16 %v652
        %v1783 = vunpack.c.l.b16 %v653
        %v1784 = vunpack.c.h.b16 %v653
        %v1785 = vunpack.c.l.b16 %v654
        %v1786 = vunpack.c.h.b16 %v654
        %v1787 = vunpack.c.l.b16 %v655
        %v1788 = vunpack.c.h.b16 %v655
        %v1789 = vunpack.c.l.b16 %v656
        %v1790 = vunpack.c.h.b16 %v656
        %v1791 = vunpack.c.l.b16 %v657
        %v1792 = vunpack.c.h.b16 %v657
        %v1793 = vunpack.c.l.b16 %v658
        %v1794 = vunpack.c.h.b16 %v658
        %v1795 = vunpack.c.l.b16 %v659
        %v1796 = vunpack.c.h.b16 %v659
        %v1797 = vunpack.c.l.b16 %v660
        %v1798 = vunpack.c.h.b16 %v660
        %v1799 = vunpack.c.l.b16 %v661
        %v1800 = vunpack.c.h.b16 %v661
        %v1801 = vunpack.c.l.b16 %v662
        %v1802 = vunpack.c.h.b16 %v662
        %v1803 = vunpack.c.l.b16 %v663
        %v1804 = vunpack.c.h.b16 %v663
        %v1805 = vunpack.c.l.b16 %v664
        %v1806 = vunpack.c.h.b16 %v664
        %v1807 = vunpack.c.l.b16 %v665
        %v1808 = vunpack.c.h.b16 %v665
        %v1809 = vunpack.c.l.b16 %v666
        %v1810 = vunpack.c.h.b16 %v666
        %v1811 = vunpack.c.l.b16 %v667
        %v1812 = vunpack.c.h.b16 %v667
        %v1813 = vunpack.c.l.b16 %v668
        %v1814 = vunpack.c.h.b16 %v668
        %v1815 = vunpack.c.l.b16 %v669
        %v1816 = vunpack.c.h.b16 %v669
        %v1817 = vunpack.c.l.b16 %v670
        %v1818 = vunpack.c.h.b16 %v670
        %v1819 = vunpack.c.l.b16 %v671
        %v1820 = vunpack.c.h.b16 %v671
        %v1821 = vunpack.c.l.b16 %v672
        %v1822 = vunpack.c.h.b16 %v672
        %v1823 = vunpack.c.l.b16 %v673
        %v1824 = vunpack.c.h.b16 %v673
        %v1825 = vunpack.c.l.b16 %v674
        %v1826 = vunpack.c.h.b16 %v674
        %v1827 = vunpack.c.l.b16 %v675
        %v1828 = vunpack.c.h.b16 %v675
        %v1829 = vunpack.c.l.b16 %v676
        %v1830 = vunpack.c.h.b16 %v676
        %v1831 = vunpack.c.l.b16 %v677
        %v1832 = vunpack.c.h.b16 %v677
        %v1833 = vunpack.c.l.b16 %v678
        %v1834 = vunpack.c.h.b16 %v678
        %v1835 = vunpack.c.l.b16 %v679
        %v1836 = vunpack.c.h.b16 %v679
        %v1837 = vunpack.c.l.b16 %v680
        %v1838 = vunpack.c.h.b16 %v680
        %v1839 = vunpack.c.l.b16 %v681
        %v1840 = vunpack.c.h.b16 %v681
        %v1841 = vunpack.c.l.b16 %v682
        %v1842 = vunpack.c.h.b16 %v682
        %v1843 = vunpack.c.l.b16 %v683
        %v1844 = vunpack.c.h.b16 %v683
        %v1845 = vunpack.c.l.b16 %v684
        %v1846 = vunpack.c.h.b16 %v684
        %v1847 = vunpack.c.l.b16 %v685
        %v1848 = vunpack.c.h.b16 %v685
        %v1849 = vunpack.c.l.b16 %v686
        %v1850 = vunpack.c.h.b16 %v686
        %v1851 = vunpack.c.l.b16 %v687
        %v1852 = vunpack.c.h.b16 %v687
        %v1853 = vunpack.c.l.b16 %v688
        %v1854 = vunpack.c.h.b16 %v688
        %v1855 = vunpack.c.l.b16 %v689
        %v1856 = vunpack.c.h.b16 %v689
        %v1857 = vunpack.c.l.b16 %v690
        %v1858 = vunpack.c.h.b16 %v690
        %v1859 = vunpack.c.l.b16 %v691
        %v1860 = vunpack.c.h.b16 %v691
        %v1861 = vunpack.c.l.b16 %v692
        %v1862 = vunpack.c.h.b16 %v692
        %v1863 = vunpack.c.l.b16 %v693
        %v1864 = vunpack.c.h.b16 %v693
        %v1865 = vunpack.c.l.b16 %v694
        %v1866 = vunpack.c.h.b16 %v694
        %v1867 = vunpack.c.l.b16 %v695
        %v1868 = vunpack.c.h.b16 %v695
        %v1869 = vunpack.c.l.b16 %v696
        %v1870 = vunpack.c.h.b16 %v696
        %v1871 = vunpack.c.l.b16 %v697
        %v1872 = vunpack.c.h.b16 %v697
        %v1873 = vunpack.c.l.b16 %v698
        %v1874 = vunpack.c.h.b16 %v698
        %v1875 = vunpack.c.l.b16 %v699
        %v1876 = vunpack.c.h.b16 %v699
        %v1877 = vunpack.c.l.b16 %v700
        %v1878 = vunpack.c.h.b16 %v700
        %v1879 = vunpack.c.l.b16 %v701
        %v1880 = vunpack.c.h.b16 %v701
        %v1881 = vunpack.c.l.b16 %v702
        %v1882 = vunpack.c.h.b16 %v702
        %v1883 = vunpack.c.l.b16 %v703
        %v1884 = vunpack.c.h.b16 %v703
        %v1885 = vunpack.c.l.b16 %v704
        %v1886 = vunpack.c.h.b16 %v704
        %v1887 = vpack.c.b16 %v1505, %v1503
        %v1888 = vpack.c.b16 %v1506, %v1504
        %v1889 = vpack.c.b16 %v1509, %v1507
        %v1890 = vpack.c.b16 %v1510, %v1508
        %v1891 = vpack.c.b16 %v1513, %v1511
        %v1892 = vpack.c.b16 %v1514, %v1512
        %v1893 = vpack.c.b16 %v1517, %v1515
        %v1894 = vpack.c.b16 %v1518, %v1516
        %v1895 = vpack.c.b16 %v1521, %v1519
        %v1896 = vpack.c.b16 %v1522, %v1520
        %v1897 = vpack.c.b16 %v1525, %v1523
        %v1898 = vpack.c.b16 %v1526, %v1524
        %v1899 = vpack.c.b16 %v1529, %v1527
        %v1900 = vpack.c.b16 %v1530, %v1528
        %v1901 = vpack.c.b16 %v1533, %v1531
        %v1902 = vpack.c.b16 %v1534, %v1532
        %v1903 = vpack.c.b16 %v1537, %v1535
        %v1904 = vpack.c.b16 %v1538, %v1536
        %v1905 = vpack.c.b16 %v1541, %v1539
        %v1906 = vpack.c.b16 %v1542, %v1540
        %v1907 = vpack.c.b16 %v1545, %v1543
        %v1908 = vpack.c.b16 %v1546, %v1544
        %v1909 = vpack.c.b16 %v1549, %v1547
        %v1910 = vpack.c.b16 %v1550, %v1548
        %v1911 = vpack.c.b16 %v1553, %v1551
        %v1912 = vpack.c.b16 %v1554, %v1552
        %v1913 = vpack.c.b16 %v1557, %v1555
        %v1914 = vpack.c.b16 %v1558, %v1556
        %v1915 = vpack.c.b16 %v1561, %v1559
        %v1916 = vpack.c.b16 %v1562, %v1560
        %v1917 = vpack.c.b16 %v1565, %v1563
        %v1918 = vpack.c.b16 %v1566, %v1564
        %v1919 = vpack.c.b16 %v1569, %v1567
        %v1920 = vpack.c.b16 %v1570, %v1568
        %v1921 = vpack.c.b16 %v1573, %v1571
        %v1922 = vpack.c.b16 %v1574, %v1572
        %v1923 = vpack.c.b16 %v1577, %v1575
        %v1924 = vpack.c.b16 %v1578, %v1576
        %v1925 = vpack.c.b16 %v1581, %v1579
        %v1926 = vpack.c.b16 %v1582, %v1580
        %v1927 = vpack.c.b16 %v1585, %v1583
        %v1928 = vpack.c.b16 %v1586, %v1584
        %v1929 = vpack.c.b16 %v1589, %v1587
        %v1930 = vpack.c.b16 %v1590, %v1588
        %v1931 = vpack.c.b16 %v1593, %v1591
        %v1932 = vpack.c.b16 %v1594, %v1592
        %v1933 = vpack.c.b16 %v1597, %v1595
        %v1934 = vpack.c.b16 %v1598, %v1596
        %v1935 = vpack.c.b16 %v1601, %v1599
        %v1936 = vpack.c.b16 %v1602, %v1600
        %v1937 = vpack.c.b16 %v1605, %v1603
        %v1938 = vpack.c.b16 %v1606, %v1604
        %v1939 = vpack.c.b16 %v1609, %v1607
        %v1940 = vpack.c.b16 %v1610, %v1608
        %v1941 = vpack.c.b16 %v1613, %v1611
        %v1942 = vpack.c.b16 %v1614, %v1612
        %v1943 = vpack.c.b16 %v1617, %v1615
        %v1944 = vpack.c.b16 %v1618, %v1616
        %v1945 = vpack.c.b16 %v1621, %v1619
        %v1946 = vpack.c.b16 %v1622, %v1620
        %v1947 = vpack.c.b16 %v1625, %v1623
        %v1948 = vpack.c.b16 %v1626, %v1624
        %v1949 = vpack.c.b16 %v1629, %v1627
        %v1950 = vpack.c.b16 %v1630, %v1628
        %v1951 = vpack.c.b16 %v1633, %v1631
        %v1952 = vpack.c.b16 %v1634, %v1632
        %v1953 = vpack.c.b16 %v1637, %v1635
        %v1954 = vpack.c.b16 %v1638, %v1636
        %v1955 = vpack.c.b16 %v1641, %v1639
        %v1956 = vpack.c.b16 %v1642, %v1640
        %v1957 = vpack.c.b16 %v1645, %v1643
        %v1958 = vpack.c.b16 %v1646, %v1644
        %v1959 = vpack.c.b16 %v1649, %v1647
        %v1960 = vpack.c.b16 %v1650, %v1648
        %v1961 = vpack.c.b16 %v1653, %v1651
        %v1962 = vpack.c.b16 %v1654, %v1652
        %v1963 = vpack.c.b16 %v1657, %v1655
        %v1964 = vpack.c.b16 %v1658, %v1656
        %v1965 = vpack.c.b16 %v1661, %v1659
        %v1966 = vpack.c.b16 %v1662, %v1660
        %v1967 = vpack.c.b16 %v1665, %v1663
        %v1968 = vpack.c.b16 %v1666, %v1664
        %v1969 = vpack.c.b16 %v1669, %v1667
        %v1970 = vpack.c.b16 %v1670, %v1668
        %v1971 = vpack.c.b16 %v1673, %v1671
        %v1972 = vpack.c.b16 %v1674, %v1672
        %v1973 = vpack.c.b16 %v1677, %v1675
        %v1974 = vpack.c.b16 %v1678, %v1676
        %v1975 = vpack.c.b16 %v1681, %v1679
        %v1976 = vpack.c.b16 %v1682, %v1680
        %v1977 = vpack.c.b16 %v1685, %v1683
        %v1978 = vpack.c.b16 %v1686, %v1684
        %v1979 = vpack.c.b16 %v1689, %v1687
        %v1980 = vpack.c.b16 %v1690, %v1688
        %v1981 = vpack.c.b16 %v1693, %v1691
        %v1982 = vpack.c.b16 %v1694, %v1692
        %v1983 = vpack.c.b16 %v1697, %v1695
        %v1984 = vpack.c.b16 %v1698, %v1696
        %v1985 = vpack.c.b16 %v1701, %v1699
        %v1986 = vpack.c.b16 %v1702, %v1700
        %v1987 = vpack.c.b16 %v1705, %v1703
        %v1988 = vpack.c.b16 %v1706, %v1704
        %v1989 = vpack.c.b16 %v1709, %v1707
        %v1990 = vpack.c.b16 %v1710, %v1708
        %v1991 = vpack.c.b16 %v1713, %v1711
        %v1992 = vpack.c.b16 %v1714, %v1712
        %v1993 = vpack.c.b16 %v1717, %v1715
        %v1994 = vpack.c.b16 %v1718, %v1716
        %v1995 = vpack.c.b16 %v1721, %v1719
        %v1996 = vpack.c.b16 %v1722, %v1720
        %v1997 = vpack.c.b16 %v1725, %v1723
        %v1998 = vpack.c.b16 %v1726, %v1724
        %v1999 = vpack.c.b16 %v1729, %v1727
        %v2000 = vpack.c.b16 %v1730, %v1728
        %v2001 = vpack.c.b16 %v1733, %v1731
        %v2002 = vpack.c.b16 %v1734, %v1732
        %v2003 = vpack.c.b16 %v1737, %v1735
        %v2004 = vpack.c.b16 %v1738, %v1736
        %v2005 = vpack.c.b16 %v1741, %v1739
        %v2006 = vpack.c.b16 %v1742, %v1740
        %v2007 = vpack.c.b16 %v1745, %v1743
        %v2008 = vpack.c.b16 %v1746, %v1744
        %v2009 = vpack.c.b16 %v1749, %v1747
        %v2010 = vpack.c.b16 %v1750, %v1748
        %v2011 = vpack.c.b16 %v1753, %v1751
        %v2012 = vpack.c.b16 %v1754, %v1752
        %v2013 = vpack.c.b16 %v1757, %v1755
        %v2014 = vpack.c.b16 %v1758, %v1756
        %v2015 = vpack.c.b16 %v1761, %v1759
        %v2016 = vpack.c.b16 %v1762, %v1760
        %v2017 = vpack.c.b16 %v1765, %v1763
        %v2018 = vpack.c.b16 %v1766, %v1764
        %v2019 = vpack.c.b16 %v1769, %v1767
        %v2020 = vpack.c.b16 %v1770, %v1768
        %v2021 = vpack.c.b16 %v1773, %v1771
        %v2022 = vpack.c.b16 %v1774, %v1772
        %v2023 = vpack.c.b16 %v1777, %v1775
        %v2024 = vpack.c.b16 %v1778, %v1776
        %v2025 = vpack.c.b16 %v1781, %v1779
        %v2026 = vpack.c.b16 %v1782, %v1780
        %v2027 = vpack.c.b16 %v1785, %v1783
        %v2028 = vpack.c.b16 %v1786, %v1784
        %v2029 = vpack.c.b16 %v1789, %v1787
        %v2030 = vpack.c.b16 %v1790, %v1788
        %v2031 = vpack.c.b16 %v1793, %v1791
        %v2032 = vpack.c.b16 %v1794, %v1792
        %v2033 = vpack.c.b16 %v1797, %v1795
        %v2034 = vpack.c.b16 %v1798, %v1796
        %v2035 = vpack.c.b16 %v1801, %v1799
        %v2036 = vpack.c.b16 %v1802, %v1800
        %v2037 = vpack.c.b16 %v1805, %v1803
        %v2038 = vpack.c.b16 %v1806, %v1804
        %v2039 = vpack.c.b16 %v1809, %v1807
        %v2040 = vpack.c.b16 %v1810, %v1808
        %v2041 = vpack.c.b16 %v1813, %v1811
        %v2042 = vpack.c.b16 %v1814, %v1812
        %v2043 = vpack.c.b16 %v1817, %v1815
        %v2044 = vpack.c.b16 %v1818, %v1816
        %v2045 = vpack.c.b16 %v1821, %v1819
        %v2046 = vpack.c.b16 %v1822, %v1820
        %v2047 = vpack.c.b16 %v1825, %v1823
        %v2048 = vpack.c.b16 %v1826, %v1824
        %v2049 = vpack.c.b16 %v1829, %v1827
        %v2050 = vpack.c.b16 %v1830, %v1828
        %v2051 = vpack.c.b16 %v1833, %v1831
        %v2052 = vpack.c.b16 %v1834, %v1832
        %v2053 = vpack.c.b16 %v1837, %v1835
        %v2054 = vpack.c.b16 %v1838, %v1836
        %v2055 = vpack.c.b16 %v1841, %v1839
        %v2056 = vpack.c.b16 %v1842, %v1840
        %v2057 = vpack.c.b16 %v1845, %v1843
        %v2058 = vpack.c.b16 %v1846, %v1844
        %v2059 = vpack.c.b16 %v1849, %v1847
        %v2060 = vpack.c.b16 %v1850, %v1848
        %v2061 = vpack.c.b16 %v1853, %v1851
        %v2062 = vpack.c.b16 %v1854, %v1852
        %v2063 = vpack.c.b16 %v1857, %v1855
        %v2064 = vpack.c.b16 %v1858, %v1856
        %v2065 = vpack.c.b16 %v1861, %v1859
        %v2066 = vpack.c.b16 %v1862, %v1860
        %v2067 = vpack.c.b16 %v1865, %v1863
        %v2068 = vpack.c.b16 %v1866, %v1864
        %v2069 = vpack.c.b16 %v1869, %v1867
        %v2070 = vpack.c.b16 %v1870, %v1868
        %v2071 = vpack.c.b16 %v1873, %v1871
        %v2072 = vpack.c.b16 %v1874, %v1872
        %v2073 = vpack.c.b16 %v1877, %v1875
        %v2074 = vpack.c.b16 %v1878, %v1876
        %v2075 = vpack.c.b16 %v1881, %v1879
        %v2076 = vpack.c.b16 %v1882, %v1880
        %v2077 = vpack.c.b16 %v1885, %v1883
        %v2078 = vpack.c.b16 %v1886, %v1884
        %2271 = vmatpush.bf16.msra.mxu0 %v1901
        %2272 = vmatpush.bf16.msra.mxu0 %v1899
        %2273 = vmatpush.bf16.msra.mxu0 %v1897
        %2274 = vmatpush.bf16.msra.mxu0 %v1895
        %2275 = vmatpush.bf16.msra.mxu0 %v1893
        %2276 = vmatpush.bf16.msra.mxu0 %v1891
        %2277 = vmatpush.bf16.msra.mxu0 %v1889
        %2278 = vmatpush.bf16.msra.mxu0 %v1887
        %2279 = vmatmul.bf16.gmra.mxu0 %v1071
        %v2280 = vpop.f32.mrf.mxu0
        %v2281 = vadd.f32 %v707, %v2280
        %v2282 = vpop.f32.mrf.mxu0
        %v2283 = vadd.f32 %v707, %v2282
        %2284 = vmatmul.bf16.gmra.mxu0 %v1083
        %v2285 = vpop.f32.mrf.mxu0
        %v2286 = vadd.f32 %v707, %v2285
        %v2287 = vpop.f32.mrf.mxu0
        %v2288 = vadd.f32 %v707, %v2287
        %2289 = vmatmul.bf16.gmra.mxu0 %v1095
        %v2290 = vpop.f32.mrf.mxu0
        %v2291 = vadd.f32 %v707, %v2290
        %v2292 = vpop.f32.mrf.mxu0
        %v2293 = vadd.f32 %v707, %v2292
        %2294 = vmatmul.bf16.gmra.mxu0 %v1107
        %v2295 = vpop.f32.mrf.mxu0
        %v2296 = vadd.f32 %v707, %v2295
        %v2297 = vpop.f32.mrf.mxu0
        %v2298 = vadd.f32 %v707, %v2297
        %2299 = vmatmul.bf16.gmra.mxu0 %v1119
        %v2300 = vpop.f32.mrf.mxu0
        %v2301 = vadd.f32 %v707, %v2300
        %v2302 = vpop.f32.mrf.mxu0
        %v2303 = vadd.f32 %v707, %v2302
        %2304 = vmatmul.bf16.gmra.mxu0 %v1131
        %v2305 = vpop.f32.mrf.mxu0
        %v2306 = vadd.f32 %v707, %v2305
        %v2307 = vpop.f32.mrf.mxu0
        %v2308 = vadd.f32 %v707, %v2307
        %2309 = vmatmul.bf16.gmra.mxu0 %v1143
        %v2310 = vpop.f32.mrf.mxu0
        %v2311 = vadd.f32 %v707, %v2310
        %v2312 = vpop.f32.mrf.mxu0
        %v2313 = vadd.f32 %v707, %v2312
        %2314 = vmatmul.bf16.gmra.mxu0 %v1155
        %v2315 = vpop.f32.mrf.mxu0
        %v2316 = vadd.f32 %v707, %v2315
        %v2317 = vpop.f32.mrf.mxu0
        %v2318 = vadd.f32 %v707, %v2317
        %2319 = vmatmul.bf16.gmra.mxu0 %v1167
        %v2320 = vpop.f32.mrf.mxu0
        %v2321 = vadd.f32 %v707, %v2320
        %v2322 = vpop.f32.mrf.mxu0
        %v2323 = vadd.f32 %v707, %v2322
        %2324 = vmatmul.bf16.gmra.mxu0 %v1179
        %v2325 = vpop.f32.mrf.mxu0
        %v2326 = vadd.f32 %v707, %v2325
        %v2327 = vpop.f32.mrf.mxu0
        %v2328 = vadd.f32 %v707, %v2327
        %2329 = vdwg.mxu0
        %2330 = vmatpush.bf16.msra.mxu0 %v1917
        %2331 = vmatpush.bf16.msra.mxu0 %v1915
        %2332 = vmatpush.bf16.msra.mxu0 %v1913
        %2333 = vmatpush.bf16.msra.mxu0 %v1911
        %2334 = vmatpush.bf16.msra.mxu0 %v1909
        %2335 = vmatpush.bf16.msra.mxu0 %v1907
        %2336 = vmatpush.bf16.msra.mxu0 %v1905
        %2337 = vmatpush.bf16.msra.mxu0 %v1903
        %2338 = vmatmul.bf16.gmra.mxu0 %v1072
        %v2339 = vpop.f32.mrf.mxu0
        %v2340 = vadd.f32 %v2281, %v2339
        %v2341 = vpop.f32.mrf.mxu0
        %v2342 = vadd.f32 %v2283, %v2341
        %2343 = vmatmul.bf16.gmra.mxu0 %v1084
        %v2344 = vpop.f32.mrf.mxu0
        %v2345 = vadd.f32 %v2286, %v2344
        %v2346 = vpop.f32.mrf.mxu0
        %v2347 = vadd.f32 %v2288, %v2346
        %2348 = vmatmul.bf16.gmra.mxu0 %v1096
        %v2349 = vpop.f32.mrf.mxu0
        %v2350 = vadd.f32 %v2291, %v2349
        %v2351 = vpop.f32.mrf.mxu0
        %v2352 = vadd.f32 %v2293, %v2351
        %2353 = vmatmul.bf16.gmra.mxu0 %v1108
        %v2354 = vpop.f32.mrf.mxu0
        %v2355 = vadd.f32 %v2296, %v2354
        %v2356 = vpop.f32.mrf.mxu0
        %v2357 = vadd.f32 %v2298, %v2356
        %2358 = vmatmul.bf16.gmra.mxu0 %v1120
        %v2359 = vpop.f32.mrf.mxu0
        %v2360 = vadd.f32 %v2301, %v2359
        %v2361 = vpop.f32.mrf.mxu0
        %v2362 = vadd.f32 %v2303, %v2361
        %2363 = vmatmul.bf16.gmra.mxu0 %v1132
        %v2364 = vpop.f32.mrf.mxu0
        %v2365 = vadd.f32 %v2306, %v2364
        %v2366 = vpop.f32.mrf.mxu0
        %v2367 = vadd.f32 %v2308, %v2366
        %2368 = vmatmul.bf16.gmra.mxu0 %v1144
        %v2369 = vpop.f32.mrf.mxu0
        %v2370 = vadd.f32 %v2311, %v2369
        %v2371 = vpop.f32.mrf.mxu0
        %v2372 = vadd.f32 %v2313, %v2371
        %2373 = vmatmul.bf16.gmra.mxu0 %v1156
        %v2374 = vpop.f32.mrf.mxu0
        %v2375 = vadd.f32 %v2316, %v2374
        %v2376 = vpop.f32.mrf.mxu0
        %v2377 = vadd.f32 %v2318, %v2376
        %2378 = vmatmul.bf16.gmra.mxu0 %v1168
        %v2379 = vpop.f32.mrf.mxu0
        %v2380 = vadd.f32 %v2321, %v2379
        %v2381 = vpop.f32.mrf.mxu0
        %v2382 = vadd.f32 %v2323, %v2381
        %2383 = vmatmul.bf16.gmra.mxu0 %v1180
        %v2384 = vpop.f32.mrf.mxu0
        %v2385 = vadd.f32 %v2326, %v2384
        %v2386 = vpop.f32.mrf.mxu0
        %v2387 = vadd.f32 %v2328, %v2386
        %2388 = vdwg.mxu0
        %2389 = vmatpush.bf16.msra.mxu0 %v1933
        %2390 = vmatpush.bf16.msra.mxu0 %v1931
        %2391 = vmatpush.bf16.msra.mxu0 %v1929
        %2392 = vmatpush.bf16.msra.mxu0 %v1927
        %2393 = vmatpush.bf16.msra.mxu0 %v1925
        %2394 = vmatpush.bf16.msra.mxu0 %v1923
        %2395 = vmatpush.bf16.msra.mxu0 %v1921
        %2396 = vmatpush.bf16.msra.mxu0 %v1919
        %2397 = vmatmul.bf16.gmra.mxu0 %v1073
        %v2398 = vpop.f32.mrf.mxu0
        %v2399 = vadd.f32 %v2340, %v2398
        %v2400 = vpop.f32.mrf.mxu0
        %v2401 = vadd.f32 %v2342, %v2400
        %2402 = vmatmul.bf16.gmra.mxu0 %v1085
        %v2403 = vpop.f32.mrf.mxu0
        %v2404 = vadd.f32 %v2345, %v2403
        %v2405 = vpop.f32.mrf.mxu0
        %v2406 = vadd.f32 %v2347, %v2405
        %2407 = vmatmul.bf16.gmra.mxu0 %v1097
        %v2408 = vpop.f32.mrf.mxu0
        %v2409 = vadd.f32 %v2350, %v2408
        %v2410 = vpop.f32.mrf.mxu0
        %v2411 = vadd.f32 %v2352, %v2410
        %2412 = vmatmul.bf16.gmra.mxu0 %v1109
        %v2413 = vpop.f32.mrf.mxu0
        %v2414 = vadd.f32 %v2355, %v2413
        %v2415 = vpop.f32.mrf.mxu0
        %v2416 = vadd.f32 %v2357, %v2415
        %2417 = vmatmul.bf16.gmra.mxu0 %v1121
        %v2418 = vpop.f32.mrf.mxu0
        %v2419 = vadd.f32 %v2360, %v2418
        %v2420 = vpop.f32.mrf.mxu0
        %v2421 = vadd.f32 %v2362, %v2420
        %2422 = vmatmul.bf16.gmra.mxu0 %v1133
        %v2423 = vpop.f32.mrf.mxu0
        %v2424 = vadd.f32 %v2365, %v2423
        %v2425 = vpop.f32.mrf.mxu0
        %v2426 = vadd.f32 %v2367, %v2425
        %2427 = vmatmul.bf16.gmra.mxu0 %v1145
        %v2428 = vpop.f32.mrf.mxu0
        %v2429 = vadd.f32 %v2370, %v2428
        %v2430 = vpop.f32.mrf.mxu0
        %v2431 = vadd.f32 %v2372, %v2430
        %2432 = vmatmul.bf16.gmra.mxu0 %v1157
        %v2433 = vpop.f32.mrf.mxu0
        %v2434 = vadd.f32 %v2375, %v2433
        %v2435 = vpop.f32.mrf.mxu0
        %v2436 = vadd.f32 %v2377, %v2435
        %2437 = vmatmul.bf16.gmra.mxu0 %v1169
        %v2438 = vpop.f32.mrf.mxu0
        %v2439 = vadd.f32 %v2380, %v2438
        %v2440 = vpop.f32.mrf.mxu0
        %v2441 = vadd.f32 %v2382, %v2440
        %2442 = vmatmul.bf16.gmra.mxu0 %v1181
        %v2443 = vpop.f32.mrf.mxu0
        %v2444 = vadd.f32 %v2385, %v2443
        %v2445 = vpop.f32.mrf.mxu0
        %v2446 = vadd.f32 %v2387, %v2445
        %2447 = vdwg.mxu0
        %2448 = vmatpush.bf16.msra.mxu0 %v1949
        %2449 = vmatpush.bf16.msra.mxu0 %v1947
        %2450 = vmatpush.bf16.msra.mxu0 %v1945
        %2451 = vmatpush.bf16.msra.mxu0 %v1943
        %2452 = vmatpush.bf16.msra.mxu0 %v1941
        %2453 = vmatpush.bf16.msra.mxu0 %v1939
        %2454 = vmatpush.bf16.msra.mxu0 %v1937
        %2455 = vmatpush.bf16.msra.mxu0 %v1935
        %2456 = vmatmul.bf16.gmra.mxu0 %v1074
        %v2457 = vpop.f32.mrf.mxu0
        %v2458 = vadd.f32 %v2399, %v2457
        %v2459 = vpop.f32.mrf.mxu0
        %v2460 = vadd.f32 %v2401, %v2459
        %2461 = vmatmul.bf16.gmra.mxu0 %v1086
        %v2462 = vpop.f32.mrf.mxu0
        %v2463 = vadd.f32 %v2404, %v2462
        %v2464 = vpop.f32.mrf.mxu0
        %v2465 = vadd.f32 %v2406, %v2464
        %2466 = vmatmul.bf16.gmra.mxu0 %v1098
        %v2467 = vpop.f32.mrf.mxu0
        %v2468 = vadd.f32 %v2409, %v2467
        %v2469 = vpop.f32.mrf.mxu0
        %v2470 = vadd.f32 %v2411, %v2469
        %2471 = vmatmul.bf16.gmra.mxu0 %v1110
        %v2472 = vpop.f32.mrf.mxu0
        %v2473 = vadd.f32 %v2414, %v2472
        %v2474 = vpop.f32.mrf.mxu0
        %v2475 = vadd.f32 %v2416, %v2474
        %2476 = vmatmul.bf16.gmra.mxu0 %v1122
        %v2477 = vpop.f32.mrf.mxu0
        %v2478 = vadd.f32 %v2419, %v2477
        %v2479 = vpop.f32.mrf.mxu0
        %v2480 = vadd.f32 %v2421, %v2479
        %2481 = vmatmul.bf16.gmra.mxu0 %v1134
        %v2482 = vpop.f32.mrf.mxu0
        %v2483 = vadd.f32 %v2424, %v2482
        %v2484 = vpop.f32.mrf.mxu0
        %v2485 = vadd.f32 %v2426, %v2484
        %2486 = vmatmul.bf16.gmra.mxu0 %v1146
        %v2487 = vpop.f32.mrf.mxu0
        %v2488 = vadd.f32 %v2429, %v2487
        %v2489 = vpop.f32.mrf.mxu0
        %v2490 = vadd.f32 %v2431, %v2489
        %2491 = vmatmul.bf16.gmra.mxu0 %v1158
        %v2492 = vpop.f32.mrf.mxu0
        %v2493 = vadd.f32 %v2434, %v2492
        %v2494 = vpop.f32.mrf.mxu0
        %v2495 = vadd.f32 %v2436, %v2494
        %2496 = vmatmul.bf16.gmra.mxu0 %v1170
        %v2497 = vpop.f32.mrf.mxu0
        %v2498 = vadd.f32 %v2439, %v2497
        %v2499 = vpop.f32.mrf.mxu0
        %v2500 = vadd.f32 %v2441, %v2499
        %2501 = vmatmul.bf16.gmra.mxu0 %v1182
        %v2502 = vpop.f32.mrf.mxu0
        %v2503 = vadd.f32 %v2444, %v2502
        %v2504 = vpop.f32.mrf.mxu0
        %v2505 = vadd.f32 %v2446, %v2504
        %2506 = vdwg.mxu0
        %2507 = vmatpush.bf16.msra.mxu0 %v1965
        %2508 = vmatpush.bf16.msra.mxu0 %v1963
        %2509 = vmatpush.bf16.msra.mxu0 %v1961
        %2510 = vmatpush.bf16.msra.mxu0 %v1959
        %2511 = vmatpush.bf16.msra.mxu0 %v1957
        %2512 = vmatpush.bf16.msra.mxu0 %v1955
        %2513 = vmatpush.bf16.msra.mxu0 %v1953
        %2514 = vmatpush.bf16.msra.mxu0 %v1951
        %2515 = vmatmul.bf16.gmra.mxu0 %v1075
        %v2516 = vpop.f32.mrf.mxu0
        %v2517 = vadd.f32 %v2458, %v2516
        %v2518 = vpop.f32.mrf.mxu0
        %v2519 = vadd.f32 %v2460, %v2518
        %2520 = vmatmul.bf16.gmra.mxu0 %v1087
        %v2521 = vpop.f32.mrf.mxu0
        %v2522 = vadd.f32 %v2463, %v2521
        %v2523 = vpop.f32.mrf.mxu0
        %v2524 = vadd.f32 %v2465, %v2523
        %2525 = vmatmul.bf16.gmra.mxu0 %v1099
        %v2526 = vpop.f32.mrf.mxu0
        %v2527 = vadd.f32 %v2468, %v2526
        %v2528 = vpop.f32.mrf.mxu0
        %v2529 = vadd.f32 %v2470, %v2528
        %2530 = vmatmul.bf16.gmra.mxu0 %v1111
        %v2531 = vpop.f32.mrf.mxu0
        %v2532 = vadd.f32 %v2473, %v2531
        %v2533 = vpop.f32.mrf.mxu0
        %v2534 = vadd.f32 %v2475, %v2533
        %2535 = vmatmul.bf16.gmra.mxu0 %v1123
        %v2536 = vpop.f32.mrf.mxu0
        %v2537 = vadd.f32 %v2478, %v2536
        %v2538 = vpop.f32.mrf.mxu0
        %v2539 = vadd.f32 %v2480, %v2538
        %2540 = vmatmul.bf16.gmra.mxu0 %v1135
        %v2541 = vpop.f32.mrf.mxu0
        %v2542 = vadd.f32 %v2483, %v2541
        %v2543 = vpop.f32.mrf.mxu0
        %v2544 = vadd.f32 %v2485, %v2543
        %2545 = vmatmul.bf16.gmra.mxu0 %v1147
        %v2546 = vpop.f32.mrf.mxu0
        %v2547 = vadd.f32 %v2488, %v2546
        %v2548 = vpop.f32.mrf.mxu0
        %v2549 = vadd.f32 %v2490, %v2548
        %2550 = vmatmul.bf16.gmra.mxu0 %v1159
        %v2551 = vpop.f32.mrf.mxu0
        %v2552 = vadd.f32 %v2493, %v2551
        %v2553 = vpop.f32.mrf.mxu0
        %v2554 = vadd.f32 %v2495, %v2553
        %2555 = vmatmul.bf16.gmra.mxu0 %v1171
        %v2556 = vpop.f32.mrf.mxu0
        %v2557 = vadd.f32 %v2498, %v2556
        %v2558 = vpop.f32.mrf.mxu0
        %v2559 = vadd.f32 %v2500, %v2558
        %2560 = vmatmul.bf16.gmra.mxu0 %v1183
        %v2561 = vpop.f32.mrf.mxu0
        %v2562 = vadd.f32 %v2503, %v2561
        %v2563 = vpop.f32.mrf.mxu0
        %v2564 = vadd.f32 %v2505, %v2563
        %2565 = vdwg.mxu0
        %2566 = vmatpush.bf16.msra.mxu0 %v1981
        %2567 = vmatpush.bf16.msra.mxu0 %v1979
        %2568 = vmatpush.bf16.msra.mxu0 %v1977
        %2569 = vmatpush.bf16.msra.mxu0 %v1975
        %2570 = vmatpush.bf16.msra.mxu0 %v1973
        %2571 = vmatpush.bf16.msra.mxu0 %v1971
        %2572 = vmatpush.bf16.msra.mxu0 %v1969
        %2573 = vmatpush.bf16.msra.mxu0 %v1967
        %2574 = vmatmul.bf16.gmra.mxu0 %v1076
        %v2575 = vpop.f32.mrf.mxu0
        %v2576 = vadd.f32 %v2517, %v2575
        %v2577 = vpop.f32.mrf.mxu0
        %v2578 = vadd.f32 %v2519, %v2577
        %2579 = vmatmul.bf16.gmra.mxu0 %v1088
        %v2580 = vpop.f32.mrf.mxu0
        %v2581 = vadd.f32 %v2522, %v2580
        %v2582 = vpop.f32.mrf.mxu0
        %v2583 = vadd.f32 %v2524, %v2582
        %2584 = vmatmul.bf16.gmra.mxu0 %v1100
        %v2585 = vpop.f32.mrf.mxu0
        %v2586 = vadd.f32 %v2527, %v2585
        %v2587 = vpop.f32.mrf.mxu0
        %v2588 = vadd.f32 %v2529, %v2587
        %2589 = vmatmul.bf16.gmra.mxu0 %v1112
        %v2590 = vpop.f32.mrf.mxu0
        %v2591 = vadd.f32 %v2532, %v2590
        %v2592 = vpop.f32.mrf.mxu0
        %v2593 = vadd.f32 %v2534, %v2592
        %2594 = vmatmul.bf16.gmra.mxu0 %v1124
        %v2595 = vpop.f32.mrf.mxu0
        %v2596 = vadd.f32 %v2537, %v2595
        %v2597 = vpop.f32.mrf.mxu0
        %v2598 = vadd.f32 %v2539, %v2597
        %2599 = vmatmul.bf16.gmra.mxu0 %v1136
        %v2600 = vpop.f32.mrf.mxu0
        %v2601 = vadd.f32 %v2542, %v2600
        %v2602 = vpop.f32.mrf.mxu0
        %v2603 = vadd.f32 %v2544, %v2602
        %2604 = vmatmul.bf16.gmra.mxu0 %v1148
        %v2605 = vpop.f32.mrf.mxu0
        %v2606 = vadd.f32 %v2547, %v2605
        %v2607 = vpop.f32.mrf.mxu0
        %v2608 = vadd.f32 %v2549, %v2607
        %2609 = vmatmul.bf16.gmra.mxu0 %v1160
        %v2610 = vpop.f32.mrf.mxu0
        %v2611 = vadd.f32 %v2552, %v2610
        %v2612 = vpop.f32.mrf.mxu0
        %v2613 = vadd.f32 %v2554, %v2612
        %2614 = vmatmul.bf16.gmra.mxu0 %v1172
        %v2615 = vpop.f32.mrf.mxu0
        %v2616 = vadd.f32 %v2557, %v2615
        %v2617 = vpop.f32.mrf.mxu0
        %v2618 = vadd.f32 %v2559, %v2617
        %2619 = vmatmul.bf16.gmra.mxu0 %v1184
        %v2620 = vpop.f32.mrf.mxu0
        %v2621 = vadd.f32 %v2562, %v2620
        %v2622 = vpop.f32.mrf.mxu0
        %v2623 = vadd.f32 %v2564, %v2622
        %2624 = vdwg.mxu0
        %2625 = vmatpush.bf16.msra.mxu0 %v1997
        %2626 = vmatpush.bf16.msra.mxu0 %v1995
        %2627 = vmatpush.bf16.msra.mxu0 %v1993
        %2628 = vmatpush.bf16.msra.mxu0 %v1991
        %2629 = vmatpush.bf16.msra.mxu0 %v1989
        %2630 = vmatpush.bf16.msra.mxu0 %v1987
        %2631 = vmatpush.bf16.msra.mxu0 %v1985
        %2632 = vmatpush.bf16.msra.mxu0 %v1983
        %2633 = vmatmul.bf16.gmra.mxu0 %v1077
        %v2634 = vpop.f32.mrf.mxu0
        %v2635 = vadd.f32 %v2576, %v2634
        %v2636 = vpop.f32.mrf.mxu0
        %v2637 = vadd.f32 %v2578, %v2636
        %2638 = vmatmul.bf16.gmra.mxu0 %v1089
        %v2639 = vpop.f32.mrf.mxu0
        %v2640 = vadd.f32 %v2581, %v2639
        %v2641 = vpop.f32.mrf.mxu0
        %v2642 = vadd.f32 %v2583, %v2641
        %2643 = vmatmul.bf16.gmra.mxu0 %v1101
        %v2644 = vpop.f32.mrf.mxu0
        %v2645 = vadd.f32 %v2586, %v2644
        %v2646 = vpop.f32.mrf.mxu0
        %v2647 = vadd.f32 %v2588, %v2646
        %2648 = vmatmul.bf16.gmra.mxu0 %v1113
        %v2649 = vpop.f32.mrf.mxu0
        %v2650 = vadd.f32 %v2591, %v2649
        %v2651 = vpop.f32.mrf.mxu0
        %v2652 = vadd.f32 %v2593, %v2651
        %2653 = vmatmul.bf16.gmra.mxu0 %v1125
        %v2654 = vpop.f32.mrf.mxu0
        %v2655 = vadd.f32 %v2596, %v2654
        %v2656 = vpop.f32.mrf.mxu0
        %v2657 = vadd.f32 %v2598, %v2656
        %2658 = vmatmul.bf16.gmra.mxu0 %v1137
        %v2659 = vpop.f32.mrf.mxu0
        %v2660 = vadd.f32 %v2601, %v2659
        %v2661 = vpop.f32.mrf.mxu0
        %v2662 = vadd.f32 %v2603, %v2661
        %2663 = vmatmul.bf16.gmra.mxu0 %v1149
        %v2664 = vpop.f32.mrf.mxu0
        %v2665 = vadd.f32 %v2606, %v2664
        %v2666 = vpop.f32.mrf.mxu0
        %v2667 = vadd.f32 %v2608, %v2666
        %2668 = vmatmul.bf16.gmra.mxu0 %v1161
        %v2669 = vpop.f32.mrf.mxu0
        %v2670 = vadd.f32 %v2611, %v2669
        %v2671 = vpop.f32.mrf.mxu0
        %v2672 = vadd.f32 %v2613, %v2671
        %2673 = vmatmul.bf16.gmra.mxu0 %v1173
        %v2674 = vpop.f32.mrf.mxu0
        %v2675 = vadd.f32 %v2616, %v2674
        %v2676 = vpop.f32.mrf.mxu0
        %v2677 = vadd.f32 %v2618, %v2676
        %2678 = vmatmul.bf16.gmra.mxu0 %v1185
        %v2679 = vpop.f32.mrf.mxu0
        %v2680 = vadd.f32 %v2621, %v2679
        %v2681 = vpop.f32.mrf.mxu0
        %v2682 = vadd.f32 %v2623, %v2681
        %2683 = vdwg.mxu0
        %2684 = vmatpush.bf16.msra.mxu0 %v2013
        %2685 = vmatpush.bf16.msra.mxu0 %v2011
        %2686 = vmatpush.bf16.msra.mxu0 %v2009
        %2687 = vmatpush.bf16.msra.mxu0 %v2007
        %2688 = vmatpush.bf16.msra.mxu0 %v2005
        %2689 = vmatpush.bf16.msra.mxu0 %v2003
        %2690 = vmatpush.bf16.msra.mxu0 %v2001
        %2691 = vmatpush.bf16.msra.mxu0 %v1999
        %2692 = vmatmul.bf16.gmra.mxu0 %v1078
        %v2693 = vpop.f32.mrf.mxu0
        %v2694 = vadd.f32 %v2635, %v2693
        %v2695 = vpop.f32.mrf.mxu0
        %v2696 = vadd.f32 %v2637, %v2695
        %2697 = vmatmul.bf16.gmra.mxu0 %v1090
        %v2698 = vpop.f32.mrf.mxu0
        %v2699 = vadd.f32 %v2640, %v2698
        %v2700 = vpop.f32.mrf.mxu0
        %v2701 = vadd.f32 %v2642, %v2700
        %2702 = vmatmul.bf16.gmra.mxu0 %v1102
        %v2703 = vpop.f32.mrf.mxu0
        %v2704 = vadd.f32 %v2645, %v2703
        %v2705 = vpop.f32.mrf.mxu0
        %v2706 = vadd.f32 %v2647, %v2705
        %2707 = vmatmul.bf16.gmra.mxu0 %v1114
        %v2708 = vpop.f32.mrf.mxu0
        %v2709 = vadd.f32 %v2650, %v2708
        %v2710 = vpop.f32.mrf.mxu0
        %v2711 = vadd.f32 %v2652, %v2710
        %2712 = vmatmul.bf16.gmra.mxu0 %v1126
        %v2713 = vpop.f32.mrf.mxu0
        %v2714 = vadd.f32 %v2655, %v2713
        %v2715 = vpop.f32.mrf.mxu0
        %v2716 = vadd.f32 %v2657, %v2715
        %2717 = vmatmul.bf16.gmra.mxu0 %v1138
        %v2718 = vpop.f32.mrf.mxu0
        %v2719 = vadd.f32 %v2660, %v2718
        %v2720 = vpop.f32.mrf.mxu0
        %v2721 = vadd.f32 %v2662, %v2720
        %2722 = vmatmul.bf16.gmra.mxu0 %v1150
        %v2723 = vpop.f32.mrf.mxu0
        %v2724 = vadd.f32 %v2665, %v2723
        %v2725 = vpop.f32.mrf.mxu0
        %v2726 = vadd.f32 %v2667, %v2725
        %2727 = vmatmul.bf16.gmra.mxu0 %v1162
        %v2728 = vpop.f32.mrf.mxu0
        %v2729 = vadd.f32 %v2670, %v2728
        %v2730 = vpop.f32.mrf.mxu0
        %v2731 = vadd.f32 %v2672, %v2730
        %2732 = vmatmul.bf16.gmra.mxu0 %v1174
        %v2733 = vpop.f32.mrf.mxu0
        %v2734 = vadd.f32 %v2675, %v2733
        %v2735 = vpop.f32.mrf.mxu0
        %v2736 = vadd.f32 %v2677, %v2735
        %2737 = vmatmul.bf16.gmra.mxu0 %v1186
        %v2738 = vpop.f32.mrf.mxu0
        %v2739 = vadd.f32 %v2680, %v2738
        %v2740 = vpop.f32.mrf.mxu0
        %v2741 = vadd.f32 %v2682, %v2740
        %2742 = vdwg.mxu0
        %2743 = vmatpush.bf16.msra.mxu0 %v2029
        %2744 = vmatpush.bf16.msra.mxu0 %v2027
        %2745 = vmatpush.bf16.msra.mxu0 %v2025
        %2746 = vmatpush.bf16.msra.mxu0 %v2023
        %2747 = vmatpush.bf16.msra.mxu0 %v2021
        %2748 = vmatpush.bf16.msra.mxu0 %v2019
        %2749 = vmatpush.bf16.msra.mxu0 %v2017
        %2750 = vmatpush.bf16.msra.mxu0 %v2015
        %2751 = vmatmul.bf16.gmra.mxu0 %v1079
        %v2752 = vpop.f32.mrf.mxu0
        %v2753 = vadd.f32 %v2694, %v2752
        %v2754 = vpop.f32.mrf.mxu0
        %v2755 = vadd.f32 %v2696, %v2754
        %2756 = vmatmul.bf16.gmra.mxu0 %v1091
        %v2757 = vpop.f32.mrf.mxu0
        %v2758 = vadd.f32 %v2699, %v2757
        %v2759 = vpop.f32.mrf.mxu0
        %v2760 = vadd.f32 %v2701, %v2759
        %2761 = vmatmul.bf16.gmra.mxu0 %v1103
        %v2762 = vpop.f32.mrf.mxu0
        %v2763 = vadd.f32 %v2704, %v2762
        %v2764 = vpop.f32.mrf.mxu0
        %v2765 = vadd.f32 %v2706, %v2764
        %2766 = vmatmul.bf16.gmra.mxu0 %v1115
        %v2767 = vpop.f32.mrf.mxu0
        %v2768 = vadd.f32 %v2709, %v2767
        %v2769 = vpop.f32.mrf.mxu0
        %v2770 = vadd.f32 %v2711, %v2769
        %2771 = vmatmul.bf16.gmra.mxu0 %v1127
        %v2772 = vpop.f32.mrf.mxu0
        %v2773 = vadd.f32 %v2714, %v2772
        %v2774 = vpop.f32.mrf.mxu0
        %v2775 = vadd.f32 %v2716, %v2774
        %2776 = vmatmul.bf16.gmra.mxu0 %v1139
        %v2777 = vpop.f32.mrf.mxu0
        %v2778 = vadd.f32 %v2719, %v2777
        %v2779 = vpop.f32.mrf.mxu0
        %v2780 = vadd.f32 %v2721, %v2779
        %2781 = vmatmul.bf16.gmra.mxu0 %v1151
        %v2782 = vpop.f32.mrf.mxu0
        %v2783 = vadd.f32 %v2724, %v2782
        %v2784 = vpop.f32.mrf.mxu0
        %v2785 = vadd.f32 %v2726, %v2784
        %2786 = vmatmul.bf16.gmra.mxu0 %v1163
        %v2787 = vpop.f32.mrf.mxu0
        %v2788 = vadd.f32 %v2729, %v2787
        %v2789 = vpop.f32.mrf.mxu0
        %v2790 = vadd.f32 %v2731, %v2789
        %2791 = vmatmul.bf16.gmra.mxu0 %v1175
        %v2792 = vpop.f32.mrf.mxu0
        %v2793 = vadd.f32 %v2734, %v2792
        %v2794 = vpop.f32.mrf.mxu0
        %v2795 = vadd.f32 %v2736, %v2794
        %2796 = vmatmul.bf16.gmra.mxu0 %v1187
        %v2797 = vpop.f32.mrf.mxu0
        %v2798 = vadd.f32 %v2739, %v2797
        %v2799 = vpop.f32.mrf.mxu0
        %v2800 = vadd.f32 %v2741, %v2799
        %2801 = vdwg.mxu0
        %2802 = vmatpush.bf16.msra.mxu0 %v2045
        %2803 = vmatpush.bf16.msra.mxu0 %v2043
        %2804 = vmatpush.bf16.msra.mxu0 %v2041
        %2805 = vmatpush.bf16.msra.mxu0 %v2039
        %2806 = vmatpush.bf16.msra.mxu0 %v2037
        %2807 = vmatpush.bf16.msra.mxu0 %v2035
        %2808 = vmatpush.bf16.msra.mxu0 %v2033
        %2809 = vmatpush.bf16.msra.mxu0 %v2031
        %2810 = vmatmul.bf16.gmra.mxu0 %v1080
        %v2811 = vpop.f32.mrf.mxu0
        %v2812 = vadd.f32 %v2753, %v2811
        %v2813 = vpop.f32.mrf.mxu0
        %v2814 = vadd.f32 %v2755, %v2813
        %2815 = vmatmul.bf16.gmra.mxu0 %v1092
        %v2816 = vpop.f32.mrf.mxu0
        %v2817 = vadd.f32 %v2758, %v2816
        %v2818 = vpop.f32.mrf.mxu0
        %v2819 = vadd.f32 %v2760, %v2818
        %2820 = vmatmul.bf16.gmra.mxu0 %v1104
        %v2821 = vpop.f32.mrf.mxu0
        %v2822 = vadd.f32 %v2763, %v2821
        %v2823 = vpop.f32.mrf.mxu0
        %v2824 = vadd.f32 %v2765, %v2823
        %2825 = vmatmul.bf16.gmra.mxu0 %v1116
        %v2826 = vpop.f32.mrf.mxu0
        %v2827 = vadd.f32 %v2768, %v2826
        %v2828 = vpop.f32.mrf.mxu0
        %v2829 = vadd.f32 %v2770, %v2828
        %2830 = vmatmul.bf16.gmra.mxu0 %v1128
        %v2831 = vpop.f32.mrf.mxu0
        %v2832 = vadd.f32 %v2773, %v2831
        %v2833 = vpop.f32.mrf.mxu0
        %v2834 = vadd.f32 %v2775, %v2833
        %2835 = vmatmul.bf16.gmra.mxu0 %v1140
        %v2836 = vpop.f32.mrf.mxu0
        %v2837 = vadd.f32 %v2778, %v2836
        %v2838 = vpop.f32.mrf.mxu0
        %v2839 = vadd.f32 %v2780, %v2838
        %2840 = vmatmul.bf16.gmra.mxu0 %v1152
        %v2841 = vpop.f32.mrf.mxu0
        %v2842 = vadd.f32 %v2783, %v2841
        %v2843 = vpop.f32.mrf.mxu0
        %v2844 = vadd.f32 %v2785, %v2843
        %2845 = vmatmul.bf16.gmra.mxu0 %v1164
        %v2846 = vpop.f32.mrf.mxu0
        %v2847 = vadd.f32 %v2788, %v2846
        %v2848 = vpop.f32.mrf.mxu0
        %v2849 = vadd.f32 %v2790, %v2848
        %2850 = vmatmul.bf16.gmra.mxu0 %v1176
        %v2851 = vpop.f32.mrf.mxu0
        %v2852 = vadd.f32 %v2793, %v2851
        %v2853 = vpop.f32.mrf.mxu0
        %v2854 = vadd.f32 %v2795, %v2853
        %2855 = vmatmul.bf16.gmra.mxu0 %v1188
        %v2856 = vpop.f32.mrf.mxu0
        %v2857 = vadd.f32 %v2798, %v2856
        %v2858 = vpop.f32.mrf.mxu0
        %v2859 = vadd.f32 %v2800, %v2858
        %2860 = vdwg.mxu0
        %2861 = vmatpush.bf16.msra.mxu0 %v2061
        %2862 = vmatpush.bf16.msra.mxu0 %v2059
        %2863 = vmatpush.bf16.msra.mxu0 %v2057
        %2864 = vmatpush.bf16.msra.mxu0 %v2055
        %2865 = vmatpush.bf16.msra.mxu0 %v2053
        %2866 = vmatpush.bf16.msra.mxu0 %v2051
        %2867 = vmatpush.bf16.msra.mxu0 %v2049
        %2868 = vmatpush.bf16.msra.mxu0 %v2047
        %2869 = vmatmul.bf16.gmra.mxu0 %v1081
        %v2870 = vpop.f32.mrf.mxu0
        %v2871 = vadd.f32 %v2812, %v2870
        %v2872 = vpop.f32.mrf.mxu0
        %v2873 = vadd.f32 %v2814, %v2872
        %2874 = vmatmul.bf16.gmra.mxu0 %v1093
        %v2875 = vpop.f32.mrf.mxu0
        %v2876 = vadd.f32 %v2817, %v2875
        %v2877 = vpop.f32.mrf.mxu0
        %v2878 = vadd.f32 %v2819, %v2877
        %2879 = vmatmul.bf16.gmra.mxu0 %v1105
        %v2880 = vpop.f32.mrf.mxu0
        %v2881 = vadd.f32 %v2822, %v2880
        %v2882 = vpop.f32.mrf.mxu0
        %v2883 = vadd.f32 %v2824, %v2882
        %2884 = vmatmul.bf16.gmra.mxu0 %v1117
        %v2885 = vpop.f32.mrf.mxu0
        %v2886 = vadd.f32 %v2827, %v2885
        %v2887 = vpop.f32.mrf.mxu0
        %v2888 = vadd.f32 %v2829, %v2887
        %2889 = vmatmul.bf16.gmra.mxu0 %v1129
        %v2890 = vpop.f32.mrf.mxu0
        %v2891 = vadd.f32 %v2832, %v2890
        %v2892 = vpop.f32.mrf.mxu0
        %v2893 = vadd.f32 %v2834, %v2892
        %2894 = vmatmul.bf16.gmra.mxu0 %v1141
        %v2895 = vpop.f32.mrf.mxu0
        %v2896 = vadd.f32 %v2837, %v2895
        %v2897 = vpop.f32.mrf.mxu0
        %v2898 = vadd.f32 %v2839, %v2897
        %2899 = vmatmul.bf16.gmra.mxu0 %v1153
        %v2900 = vpop.f32.mrf.mxu0
        %v2901 = vadd.f32 %v2842, %v2900
        %v2902 = vpop.f32.mrf.mxu0
        %v2903 = vadd.f32 %v2844, %v2902
        %2904 = vmatmul.bf16.gmra.mxu0 %v1165
        %v2905 = vpop.f32.mrf.mxu0
        %v2906 = vadd.f32 %v2847, %v2905
        %v2907 = vpop.f32.mrf.mxu0
        %v2908 = vadd.f32 %v2849, %v2907
        %2909 = vmatmul.bf16.gmra.mxu0 %v1177
        %v2910 = vpop.f32.mrf.mxu0
        %v2911 = vadd.f32 %v2852, %v2910
        %v2912 = vpop.f32.mrf.mxu0
        %v2913 = vadd.f32 %v2854, %v2912
        %2914 = vmatmul.bf16.gmra.mxu0 %v1189
        %v2915 = vpop.f32.mrf.mxu0
        %v2916 = vadd.f32 %v2857, %v2915
        %v2917 = vpop.f32.mrf.mxu0
        %v2918 = vadd.f32 %v2859, %v2917
        %2919 = vdwg.mxu0
        %2920 = vmatpush.bf16.msra.mxu0 %v2077
        %2921 = vmatpush.bf16.msra.mxu0 %v2075
        %2922 = vmatpush.bf16.msra.mxu0 %v2073
        %2923 = vmatpush.bf16.msra.mxu0 %v2071
        %2924 = vmatpush.bf16.msra.mxu0 %v2069
        %2925 = vmatpush.bf16.msra.mxu0 %v2067
        %2926 = vmatpush.bf16.msra.mxu0 %v2065
        %2927 = vmatpush.bf16.msra.mxu0 %v2063
        %2928 = vmatmul.bf16.gmra.mxu0 %v1082
        %v2929 = vpop.f32.mrf.mxu0
        %v2930 = vadd.f32 %v2871, %v2929
        %v2931 = vpop.f32.mrf.mxu0
        %v2932 = vadd.f32 %v2873, %v2931
        %2933 = vmatmul.bf16.gmra.mxu0 %v1094
        %v2934 = vpop.f32.mrf.mxu0
        %v2935 = vadd.f32 %v2876, %v2934
        %v2936 = vpop.f32.mrf.mxu0
        %v2937 = vadd.f32 %v2878, %v2936
        %2938 = vmatmul.bf16.gmra.mxu0 %v1106
        %v2939 = vpop.f32.mrf.mxu0
        %v2940 = vadd.f32 %v2881, %v2939
        %v2941 = vpop.f32.mrf.mxu0
        %v2942 = vadd.f32 %v2883, %v2941
        %2943 = vmatmul.bf16.gmra.mxu0 %v1118
        %v2944 = vpop.f32.mrf.mxu0
        %v2945 = vadd.f32 %v2886, %v2944
        %v2946 = vpop.f32.mrf.mxu0
        %v2947 = vadd.f32 %v2888, %v2946
        %2948 = vmatmul.bf16.gmra.mxu0 %v1130
        %v2949 = vpop.f32.mrf.mxu0
        %v2950 = vadd.f32 %v2891, %v2949
        %v2951 = vpop.f32.mrf.mxu0
        %v2952 = vadd.f32 %v2893, %v2951
        %2953 = vmatmul.bf16.gmra.mxu0 %v1142
        %v2954 = vpop.f32.mrf.mxu0
        %v2955 = vadd.f32 %v2896, %v2954
        %v2956 = vpop.f32.mrf.mxu0
        %v2957 = vadd.f32 %v2898, %v2956
        %2958 = vmatmul.bf16.gmra.mxu0 %v1154
        %v2959 = vpop.f32.mrf.mxu0
        %v2960 = vadd.f32 %v2901, %v2959
        %v2961 = vpop.f32.mrf.mxu0
        %v2962 = vadd.f32 %v2903, %v2961
        %2963 = vmatmul.bf16.gmra.mxu0 %v1166
        %v2964 = vpop.f32.mrf.mxu0
        %v2965 = vadd.f32 %v2906, %v2964
        %v2966 = vpop.f32.mrf.mxu0
        %v2967 = vadd.f32 %v2908, %v2966
        %2968 = vmatmul.bf16.gmra.mxu0 %v1178
        %v2969 = vpop.f32.mrf.mxu0
        %v2970 = vadd.f32 %v2911, %v2969
        %v2971 = vpop.f32.mrf.mxu0
        %v2972 = vadd.f32 %v2913, %v2971
        %2973 = vmatmul.bf16.gmra.mxu0 %v1190
        %v2974 = vpop.f32.mrf.mxu0
        %v2975 = vadd.f32 %v2916, %v2974
        %v2976 = vpop.f32.mrf.mxu0
        %v2977 = vadd.f32 %v2918, %v2976
        %2978 = vdwg.mxu0
        %2979 = vmatpush.bf16.msra.mxu0 %v1902
        %2980 = vmatpush.bf16.msra.mxu0 %v1900
        %2981 = vmatpush.bf16.msra.mxu0 %v1898
        %2982 = vmatpush.bf16.msra.mxu0 %v1896
        %2983 = vmatpush.bf16.msra.mxu0 %v1894
        %2984 = vmatpush.bf16.msra.mxu0 %v1892
        %2985 = vmatpush.bf16.msra.mxu0 %v1890
        %2986 = vmatpush.bf16.msra.mxu0 %v1888
        %2987 = vmatmul.bf16.gmra.mxu0 %v1071
        %v2988 = vpop.f32.mrf.mxu0
        %v2989 = vadd.f32 %v708, %v2988
        %v2990 = vpop.f32.mrf.mxu0
        %v2991 = vadd.f32 %v708, %v2990
        %2992 = vmatmul.bf16.gmra.mxu0 %v1083
        %v2993 = vpop.f32.mrf.mxu0
        %v2994 = vadd.f32 %v708, %v2993
        %v2995 = vpop.f32.mrf.mxu0
        %v2996 = vadd.f32 %v708, %v2995
        %2997 = vmatmul.bf16.gmra.mxu0 %v1095
        %v2998 = vpop.f32.mrf.mxu0
        %v2999 = vadd.f32 %v708, %v2998
        %v3000 = vpop.f32.mrf.mxu0
        %v3001 = vadd.f32 %v708, %v3000
        %3002 = vmatmul.bf16.gmra.mxu0 %v1107
        %v3003 = vpop.f32.mrf.mxu0
        %v3004 = vadd.f32 %v708, %v3003
        %v3005 = vpop.f32.mrf.mxu0
        %v3006 = vadd.f32 %v708, %v3005
        %3007 = vmatmul.bf16.gmra.mxu0 %v1119
        %v3008 = vpop.f32.mrf.mxu0
        %v3009 = vadd.f32 %v708, %v3008
        %v3010 = vpop.f32.mrf.mxu0
        %v3011 = vadd.f32 %v708, %v3010
        %3012 = vmatmul.bf16.gmra.mxu0 %v1131
        %v3013 = vpop.f32.mrf.mxu0
        %v3014 = vadd.f32 %v708, %v3013
        %v3015 = vpop.f32.mrf.mxu0
        %v3016 = vadd.f32 %v708, %v3015
        %3017 = vmatmul.bf16.gmra.mxu0 %v1143
        %v3018 = vpop.f32.mrf.mxu0
        %v3019 = vadd.f32 %v708, %v3018
        %v3020 = vpop.f32.mrf.mxu0
        %v3021 = vadd.f32 %v708, %v3020
        %3022 = vmatmul.bf16.gmra.mxu0 %v1155
        %v3023 = vpop.f32.mrf.mxu0
        %v3024 = vadd.f32 %v708, %v3023
        %v3025 = vpop.f32.mrf.mxu0
        %v3026 = vadd.f32 %v708, %v3025
        %3027 = vmatmul.bf16.gmra.mxu0 %v1167
        %v3028 = vpop.f32.mrf.mxu0
        %v3029 = vadd.f32 %v708, %v3028
        %v3030 = vpop.f32.mrf.mxu0
        %v3031 = vadd.f32 %v708, %v3030
        %3032 = vmatmul.bf16.gmra.mxu0 %v1179
        %v3033 = vpop.f32.mrf.mxu0
        %v3034 = vadd.f32 %v708, %v3033
        %v3035 = vpop.f32.mrf.mxu0
        %v3036 = vadd.f32 %v708, %v3035
        %3037 = vdwg.mxu0
        %3038 = vmatpush.bf16.msra.mxu0 %v1918
        %3039 = vmatpush.bf16.msra.mxu0 %v1916
        %3040 = vmatpush.bf16.msra.mxu0 %v1914
        %3041 = vmatpush.bf16.msra.mxu0 %v1912
        %3042 = vmatpush.bf16.msra.mxu0 %v1910
        %3043 = vmatpush.bf16.msra.mxu0 %v1908
        %3044 = vmatpush.bf16.msra.mxu0 %v1906
        %3045 = vmatpush.bf16.msra.mxu0 %v1904
        %3046 = vmatmul.bf16.gmra.mxu0 %v1072
        %v3047 = vpop.f32.mrf.mxu0
        %v3048 = vadd.f32 %v2989, %v3047
        %v3049 = vpop.f32.mrf.mxu0
        %v3050 = vadd.f32 %v2991, %v3049
        %3051 = vmatmul.bf16.gmra.mxu0 %v1084
        %v3052 = vpop.f32.mrf.mxu0
        %v3053 = vadd.f32 %v2994, %v3052
        %v3054 = vpop.f32.mrf.mxu0
        %v3055 = vadd.f32 %v2996, %v3054
        %3056 = vmatmul.bf16.gmra.mxu0 %v1096
        %v3057 = vpop.f32.mrf.mxu0
        %v3058 = vadd.f32 %v2999, %v3057
        %v3059 = vpop.f32.mrf.mxu0
        %v3060 = vadd.f32 %v3001, %v3059
        %3061 = vmatmul.bf16.gmra.mxu0 %v1108
        %v3062 = vpop.f32.mrf.mxu0
        %v3063 = vadd.f32 %v3004, %v3062
        %v3064 = vpop.f32.mrf.mxu0
        %v3065 = vadd.f32 %v3006, %v3064
        %3066 = vmatmul.bf16.gmra.mxu0 %v1120
        %v3067 = vpop.f32.mrf.mxu0
        %v3068 = vadd.f32 %v3009, %v3067
        %v3069 = vpop.f32.mrf.mxu0
        %v3070 = vadd.f32 %v3011, %v3069
        %3071 = vmatmul.bf16.gmra.mxu0 %v1132
        %v3072 = vpop.f32.mrf.mxu0
        %v3073 = vadd.f32 %v3014, %v3072
        %v3074 = vpop.f32.mrf.mxu0
        %v3075 = vadd.f32 %v3016, %v3074
        %3076 = vmatmul.bf16.gmra.mxu0 %v1144
        %v3077 = vpop.f32.mrf.mxu0
        %v3078 = vadd.f32 %v3019, %v3077
        %v3079 = vpop.f32.mrf.mxu0
        %v3080 = vadd.f32 %v3021, %v3079
        %3081 = vmatmul.bf16.gmra.mxu0 %v1156
        %v3082 = vpop.f32.mrf.mxu0
        %v3083 = vadd.f32 %v3024, %v3082
        %v3084 = vpop.f32.mrf.mxu0
        %v3085 = vadd.f32 %v3026, %v3084
        %3086 = vmatmul.bf16.gmra.mxu0 %v1168
        %v3087 = vpop.f32.mrf.mxu0
        %v3088 = vadd.f32 %v3029, %v3087
        %v3089 = vpop.f32.mrf.mxu0
        %v3090 = vadd.f32 %v3031, %v3089
        %3091 = vmatmul.bf16.gmra.mxu0 %v1180
        %v3092 = vpop.f32.mrf.mxu0
        %v3093 = vadd.f32 %v3034, %v3092
        %v3094 = vpop.f32.mrf.mxu0
        %v3095 = vadd.f32 %v3036, %v3094
        %3096 = vdwg.mxu0
        %3097 = vmatpush.bf16.msra.mxu0 %v1934
        %3098 = vmatpush.bf16.msra.mxu0 %v1932
        %3099 = vmatpush.bf16.msra.mxu0 %v1930
        %3100 = vmatpush.bf16.msra.mxu0 %v1928
        %3101 = vmatpush.bf16.msra.mxu0 %v1926
        %3102 = vmatpush.bf16.msra.mxu0 %v1924
        %3103 = vmatpush.bf16.msra.mxu0 %v1922
        %3104 = vmatpush.bf16.msra.mxu0 %v1920
        %3105 = vmatmul.bf16.gmra.mxu0 %v1073
        %v3106 = vpop.f32.mrf.mxu0
        %v3107 = vadd.f32 %v3048, %v3106
        %v3108 = vpop.f32.mrf.mxu0
        %v3109 = vadd.f32 %v3050, %v3108
        %3110 = vmatmul.bf16.gmra.mxu0 %v1085
        %v3111 = vpop.f32.mrf.mxu0
        %v3112 = vadd.f32 %v3053, %v3111
        %v3113 = vpop.f32.mrf.mxu0
        %v3114 = vadd.f32 %v3055, %v3113
        %3115 = vmatmul.bf16.gmra.mxu0 %v1097
        %v3116 = vpop.f32.mrf.mxu0
        %v3117 = vadd.f32 %v3058, %v3116
        %v3118 = vpop.f32.mrf.mxu0
        %v3119 = vadd.f32 %v3060, %v3118
        %3120 = vmatmul.bf16.gmra.mxu0 %v1109
        %v3121 = vpop.f32.mrf.mxu0
        %v3122 = vadd.f32 %v3063, %v3121
        %v3123 = vpop.f32.mrf.mxu0
        %v3124 = vadd.f32 %v3065, %v3123
        %3125 = vmatmul.bf16.gmra.mxu0 %v1121
        %v3126 = vpop.f32.mrf.mxu0
        %v3127 = vadd.f32 %v3068, %v3126
        %v3128 = vpop.f32.mrf.mxu0
        %v3129 = vadd.f32 %v3070, %v3128
        %3130 = vmatmul.bf16.gmra.mxu0 %v1133
        %v3131 = vpop.f32.mrf.mxu0
        %v3132 = vadd.f32 %v3073, %v3131
        %v3133 = vpop.f32.mrf.mxu0
        %v3134 = vadd.f32 %v3075, %v3133
        %3135 = vmatmul.bf16.gmra.mxu0 %v1145
        %v3136 = vpop.f32.mrf.mxu0
        %v3137 = vadd.f32 %v3078, %v3136
        %v3138 = vpop.f32.mrf.mxu0
        %v3139 = vadd.f32 %v3080, %v3138
        %3140 = vmatmul.bf16.gmra.mxu0 %v1157
        %v3141 = vpop.f32.mrf.mxu0
        %v3142 = vadd.f32 %v3083, %v3141
        %v3143 = vpop.f32.mrf.mxu0
        %v3144 = vadd.f32 %v3085, %v3143
        %3145 = vmatmul.bf16.gmra.mxu0 %v1169
        %v3146 = vpop.f32.mrf.mxu0
        %v3147 = vadd.f32 %v3088, %v3146
        %v3148 = vpop.f32.mrf.mxu0
        %v3149 = vadd.f32 %v3090, %v3148
        %3150 = vmatmul.bf16.gmra.mxu0 %v1181
        %v3151 = vpop.f32.mrf.mxu0
        %v3152 = vadd.f32 %v3093, %v3151
        %v3153 = vpop.f32.mrf.mxu0
        %v3154 = vadd.f32 %v3095, %v3153
        %3155 = vdwg.mxu0
        %3156 = vmatpush.bf16.msra.mxu0 %v1950
        %3157 = vmatpush.bf16.msra.mxu0 %v1948
        %3158 = vmatpush.bf16.msra.mxu0 %v1946
        %3159 = vmatpush.bf16.msra.mxu0 %v1944
        %3160 = vmatpush.bf16.msra.mxu0 %v1942
        %3161 = vmatpush.bf16.msra.mxu0 %v1940
        %3162 = vmatpush.bf16.msra.mxu0 %v1938
        %3163 = vmatpush.bf16.msra.mxu0 %v1936
        %3164 = vmatmul.bf16.gmra.mxu0 %v1074
        %v3165 = vpop.f32.mrf.mxu0
        %v3166 = vadd.f32 %v3107, %v3165
        %v3167 = vpop.f32.mrf.mxu0
        %v3168 = vadd.f32 %v3109, %v3167
        %3169 = vmatmul.bf16.gmra.mxu0 %v1086
        %v3170 = vpop.f32.mrf.mxu0
        %v3171 = vadd.f32 %v3112, %v3170
        %v3172 = vpop.f32.mrf.mxu0
        %v3173 = vadd.f32 %v3114, %v3172
        %3174 = vmatmul.bf16.gmra.mxu0 %v1098
        %v3175 = vpop.f32.mrf.mxu0
        %v3176 = vadd.f32 %v3117, %v3175
        %v3177 = vpop.f32.mrf.mxu0
        %v3178 = vadd.f32 %v3119, %v3177
        %3179 = vmatmul.bf16.gmra.mxu0 %v1110
        %v3180 = vpop.f32.mrf.mxu0
        %v3181 = vadd.f32 %v3122, %v3180
        %v3182 = vpop.f32.mrf.mxu0
        %v3183 = vadd.f32 %v3124, %v3182
        %3184 = vmatmul.bf16.gmra.mxu0 %v1122
        %v3185 = vpop.f32.mrf.mxu0
        %v3186 = vadd.f32 %v3127, %v3185
        %v3187 = vpop.f32.mrf.mxu0
        %v3188 = vadd.f32 %v3129, %v3187
        %3189 = vmatmul.bf16.gmra.mxu0 %v1134
        %v3190 = vpop.f32.mrf.mxu0
        %v3191 = vadd.f32 %v3132, %v3190
        %v3192 = vpop.f32.mrf.mxu0
        %v3193 = vadd.f32 %v3134, %v3192
        %3194 = vmatmul.bf16.gmra.mxu0 %v1146
        %v3195 = vpop.f32.mrf.mxu0
        %v3196 = vadd.f32 %v3137, %v3195
        %v3197 = vpop.f32.mrf.mxu0
        %v3198 = vadd.f32 %v3139, %v3197
        %3199 = vmatmul.bf16.gmra.mxu0 %v1158
        %v3200 = vpop.f32.mrf.mxu0
        %v3201 = vadd.f32 %v3142, %v3200
        %v3202 = vpop.f32.mrf.mxu0
        %v3203 = vadd.f32 %v3144, %v3202
        %3204 = vmatmul.bf16.gmra.mxu0 %v1170
        %v3205 = vpop.f32.mrf.mxu0
        %v3206 = vadd.f32 %v3147, %v3205
        %v3207 = vpop.f32.mrf.mxu0
        %v3208 = vadd.f32 %v3149, %v3207
        %3209 = vmatmul.bf16.gmra.mxu0 %v1182
        %v3210 = vpop.f32.mrf.mxu0
        %v3211 = vadd.f32 %v3152, %v3210
        %v3212 = vpop.f32.mrf.mxu0
        %v3213 = vadd.f32 %v3154, %v3212
        %3214 = vdwg.mxu0
        %3215 = vmatpush.bf16.msra.mxu0 %v1966
        %3216 = vmatpush.bf16.msra.mxu0 %v1964
        %3217 = vmatpush.bf16.msra.mxu0 %v1962
        %3218 = vmatpush.bf16.msra.mxu0 %v1960
        %3219 = vmatpush.bf16.msra.mxu0 %v1958
        %3220 = vmatpush.bf16.msra.mxu0 %v1956
        %3221 = vmatpush.bf16.msra.mxu0 %v1954
        %3222 = vmatpush.bf16.msra.mxu0 %v1952
        %3223 = vmatmul.bf16.gmra.mxu0 %v1075
        %v3224 = vpop.f32.mrf.mxu0
        %v3225 = vadd.f32 %v3166, %v3224
        %v3226 = vpop.f32.mrf.mxu0
        %v3227 = vadd.f32 %v3168, %v3226
        %3228 = vmatmul.bf16.gmra.mxu0 %v1087
        %v3229 = vpop.f32.mrf.mxu0
        %v3230 = vadd.f32 %v3171, %v3229
        %v3231 = vpop.f32.mrf.mxu0
        %v3232 = vadd.f32 %v3173, %v3231
        %3233 = vmatmul.bf16.gmra.mxu0 %v1099
        %v3234 = vpop.f32.mrf.mxu0
        %v3235 = vadd.f32 %v3176, %v3234
        %v3236 = vpop.f32.mrf.mxu0
        %v3237 = vadd.f32 %v3178, %v3236
        %3238 = vmatmul.bf16.gmra.mxu0 %v1111
        %v3239 = vpop.f32.mrf.mxu0
        %v3240 = vadd.f32 %v3181, %v3239
        %v3241 = vpop.f32.mrf.mxu0
        %v3242 = vadd.f32 %v3183, %v3241
        %3243 = vmatmul.bf16.gmra.mxu0 %v1123
        %v3244 = vpop.f32.mrf.mxu0
        %v3245 = vadd.f32 %v3186, %v3244
        %v3246 = vpop.f32.mrf.mxu0
        %v3247 = vadd.f32 %v3188, %v3246
        %3248 = vmatmul.bf16.gmra.mxu0 %v1135
        %v3249 = vpop.f32.mrf.mxu0
        %v3250 = vadd.f32 %v3191, %v3249
        %v3251 = vpop.f32.mrf.mxu0
        %v3252 = vadd.f32 %v3193, %v3251
        %3253 = vmatmul.bf16.gmra.mxu0 %v1147
        %v3254 = vpop.f32.mrf.mxu0
        %v3255 = vadd.f32 %v3196, %v3254
        %v3256 = vpop.f32.mrf.mxu0
        %v3257 = vadd.f32 %v3198, %v3256
        %3258 = vmatmul.bf16.gmra.mxu0 %v1159
        %v3259 = vpop.f32.mrf.mxu0
        %v3260 = vadd.f32 %v3201, %v3259
        %v3261 = vpop.f32.mrf.mxu0
        %v3262 = vadd.f32 %v3203, %v3261
        %3263 = vmatmul.bf16.gmra.mxu0 %v1171
        %v3264 = vpop.f32.mrf.mxu0
        %v3265 = vadd.f32 %v3206, %v3264
        %v3266 = vpop.f32.mrf.mxu0
        %v3267 = vadd.f32 %v3208, %v3266
        %3268 = vmatmul.bf16.gmra.mxu0 %v1183
        %v3269 = vpop.f32.mrf.mxu0
        %v3270 = vadd.f32 %v3211, %v3269
        %v3271 = vpop.f32.mrf.mxu0
        %v3272 = vadd.f32 %v3213, %v3271
        %3273 = vdwg.mxu0
        %3274 = vmatpush.bf16.msra.mxu0 %v1982
        %3275 = vmatpush.bf16.msra.mxu0 %v1980
        %3276 = vmatpush.bf16.msra.mxu0 %v1978
        %3277 = vmatpush.bf16.msra.mxu0 %v1976
        %3278 = vmatpush.bf16.msra.mxu0 %v1974
        %3279 = vmatpush.bf16.msra.mxu0 %v1972
        %3280 = vmatpush.bf16.msra.mxu0 %v1970
        %3281 = vmatpush.bf16.msra.mxu0 %v1968
        %3282 = vmatmul.bf16.gmra.mxu0 %v1076
        %v3283 = vpop.f32.mrf.mxu0
        %v3284 = vadd.f32 %v3225, %v3283
        %v3285 = vpop.f32.mrf.mxu0
        %v3286 = vadd.f32 %v3227, %v3285
        %3287 = vmatmul.bf16.gmra.mxu0 %v1088
        %v3288 = vpop.f32.mrf.mxu0
        %v3289 = vadd.f32 %v3230, %v3288
        %v3290 = vpop.f32.mrf.mxu0
        %v3291 = vadd.f32 %v3232, %v3290
        %3292 = vmatmul.bf16.gmra.mxu0 %v1100
        %v3293 = vpop.f32.mrf.mxu0
        %v3294 = vadd.f32 %v3235, %v3293
        %v3295 = vpop.f32.mrf.mxu0
        %v3296 = vadd.f32 %v3237, %v3295
        %3297 = vmatmul.bf16.gmra.mxu0 %v1112
        %v3298 = vpop.f32.mrf.mxu0
        %v3299 = vadd.f32 %v3240, %v3298
        %v3300 = vpop.f32.mrf.mxu0
        %v3301 = vadd.f32 %v3242, %v3300
        %3302 = vmatmul.bf16.gmra.mxu0 %v1124
        %v3303 = vpop.f32.mrf.mxu0
        %v3304 = vadd.f32 %v3245, %v3303
        %v3305 = vpop.f32.mrf.mxu0
        %v3306 = vadd.f32 %v3247, %v3305
        %3307 = vmatmul.bf16.gmra.mxu0 %v1136
        %v3308 = vpop.f32.mrf.mxu0
        %v3309 = vadd.f32 %v3250, %v3308
        %v3310 = vpop.f32.mrf.mxu0
        %v3311 = vadd.f32 %v3252, %v3310
        %3312 = vmatmul.bf16.gmra.mxu0 %v1148
        %v3313 = vpop.f32.mrf.mxu0
        %v3314 = vadd.f32 %v3255, %v3313
        %v3315 = vpop.f32.mrf.mxu0
        %v3316 = vadd.f32 %v3257, %v3315
        %3317 = vmatmul.bf16.gmra.mxu0 %v1160
        %v3318 = vpop.f32.mrf.mxu0
        %v3319 = vadd.f32 %v3260, %v3318
        %v3320 = vpop.f32.mrf.mxu0
        %v3321 = vadd.f32 %v3262, %v3320
        %3322 = vmatmul.bf16.gmra.mxu0 %v1172
        %v3323 = vpop.f32.mrf.mxu0
        %v3324 = vadd.f32 %v3265, %v3323
        %v3325 = vpop.f32.mrf.mxu0
        %v3326 = vadd.f32 %v3267, %v3325
        %3327 = vmatmul.bf16.gmra.mxu0 %v1184
        %v3328 = vpop.f32.mrf.mxu0
        %v3329 = vadd.f32 %v3270, %v3328
        %v3330 = vpop.f32.mrf.mxu0
        %v3331 = vadd.f32 %v3272, %v3330
        %3332 = vdwg.mxu0
        %3333 = vmatpush.bf16.msra.mxu0 %v1998
        %3334 = vmatpush.bf16.msra.mxu0 %v1996
        %3335 = vmatpush.bf16.msra.mxu0 %v1994
        %3336 = vmatpush.bf16.msra.mxu0 %v1992
        %3337 = vmatpush.bf16.msra.mxu0 %v1990
        %3338 = vmatpush.bf16.msra.mxu0 %v1988
        %3339 = vmatpush.bf16.msra.mxu0 %v1986
        %3340 = vmatpush.bf16.msra.mxu0 %v1984
        %3341 = vmatmul.bf16.gmra.mxu0 %v1077
        %v3342 = vpop.f32.mrf.mxu0
        %v3343 = vadd.f32 %v3284, %v3342
        %v3344 = vpop.f32.mrf.mxu0
        %v3345 = vadd.f32 %v3286, %v3344
        %3346 = vmatmul.bf16.gmra.mxu0 %v1089
        %v3347 = vpop.f32.mrf.mxu0
        %v3348 = vadd.f32 %v3289, %v3347
        %v3349 = vpop.f32.mrf.mxu0
        %v3350 = vadd.f32 %v3291, %v3349
        %3351 = vmatmul.bf16.gmra.mxu0 %v1101
        %v3352 = vpop.f32.mrf.mxu0
        %v3353 = vadd.f32 %v3294, %v3352
        %v3354 = vpop.f32.mrf.mxu0
        %v3355 = vadd.f32 %v3296, %v3354
        %3356 = vmatmul.bf16.gmra.mxu0 %v1113
        %v3357 = vpop.f32.mrf.mxu0
        %v3358 = vadd.f32 %v3299, %v3357
        %v3359 = vpop.f32.mrf.mxu0
        %v3360 = vadd.f32 %v3301, %v3359
        %3361 = vmatmul.bf16.gmra.mxu0 %v1125
        %v3362 = vpop.f32.mrf.mxu0
        %v3363 = vadd.f32 %v3304, %v3362
        %v3364 = vpop.f32.mrf.mxu0
        %v3365 = vadd.f32 %v3306, %v3364
        %3366 = vmatmul.bf16.gmra.mxu0 %v1137
        %v3367 = vpop.f32.mrf.mxu0
        %v3368 = vadd.f32 %v3309, %v3367
        %v3369 = vpop.f32.mrf.mxu0
        %v3370 = vadd.f32 %v3311, %v3369
        %3371 = vmatmul.bf16.gmra.mxu0 %v1149
        %v3372 = vpop.f32.mrf.mxu0
        %v3373 = vadd.f32 %v3314, %v3372
        %v3374 = vpop.f32.mrf.mxu0
        %v3375 = vadd.f32 %v3316, %v3374
        %3376 = vmatmul.bf16.gmra.mxu0 %v1161
        %v3377 = vpop.f32.mrf.mxu0
        %v3378 = vadd.f32 %v3319, %v3377
        %v3379 = vpop.f32.mrf.mxu0
        %v3380 = vadd.f32 %v3321, %v3379
        %3381 = vmatmul.bf16.gmra.mxu0 %v1173
        %v3382 = vpop.f32.mrf.mxu0
        %v3383 = vadd.f32 %v3324, %v3382
        %v3384 = vpop.f32.mrf.mxu0
        %v3385 = vadd.f32 %v3326, %v3384
        %3386 = vmatmul.bf16.gmra.mxu0 %v1185
        %v3387 = vpop.f32.mrf.mxu0
        %v3388 = vadd.f32 %v3329, %v3387
        %v3389 = vpop.f32.mrf.mxu0
        %v3390 = vadd.f32 %v3331, %v3389
        %3391 = vdwg.mxu0
        %3392 = vmatpush.bf16.msra.mxu0 %v2014
        %3393 = vmatpush.bf16.msra.mxu0 %v2012
        %3394 = vmatpush.bf16.msra.mxu0 %v2010
        %3395 = vmatpush.bf16.msra.mxu0 %v2008
        %3396 = vmatpush.bf16.msra.mxu0 %v2006
        %3397 = vmatpush.bf16.msra.mxu0 %v2004
        %3398 = vmatpush.bf16.msra.mxu0 %v2002
        %3399 = vmatpush.bf16.msra.mxu0 %v2000
        %3400 = vmatmul.bf16.gmra.mxu0 %v1078
        %v3401 = vpop.f32.mrf.mxu0
        %v3402 = vadd.f32 %v3343, %v3401
        %v3403 = vpop.f32.mrf.mxu0
        %v3404 = vadd.f32 %v3345, %v3403
        %3405 = vmatmul.bf16.gmra.mxu0 %v1090
        %v3406 = vpop.f32.mrf.mxu0
        %v3407 = vadd.f32 %v3348, %v3406
        %v3408 = vpop.f32.mrf.mxu0
        %v3409 = vadd.f32 %v3350, %v3408
        %3410 = vmatmul.bf16.gmra.mxu0 %v1102
        %v3411 = vpop.f32.mrf.mxu0
        %v3412 = vadd.f32 %v3353, %v3411
        %v3413 = vpop.f32.mrf.mxu0
        %v3414 = vadd.f32 %v3355, %v3413
        %3415 = vmatmul.bf16.gmra.mxu0 %v1114
        %v3416 = vpop.f32.mrf.mxu0
        %v3417 = vadd.f32 %v3358, %v3416
        %v3418 = vpop.f32.mrf.mxu0
        %v3419 = vadd.f32 %v3360, %v3418
        %3420 = vmatmul.bf16.gmra.mxu0 %v1126
        %v3421 = vpop.f32.mrf.mxu0
        %v3422 = vadd.f32 %v3363, %v3421
        %v3423 = vpop.f32.mrf.mxu0
        %v3424 = vadd.f32 %v3365, %v3423
        %3425 = vmatmul.bf16.gmra.mxu0 %v1138
        %v3426 = vpop.f32.mrf.mxu0
        %v3427 = vadd.f32 %v3368, %v3426
        %v3428 = vpop.f32.mrf.mxu0
        %v3429 = vadd.f32 %v3370, %v3428
        %3430 = vmatmul.bf16.gmra.mxu0 %v1150
        %v3431 = vpop.f32.mrf.mxu0
        %v3432 = vadd.f32 %v3373, %v3431
        %v3433 = vpop.f32.mrf.mxu0
        %v3434 = vadd.f32 %v3375, %v3433
        %3435 = vmatmul.bf16.gmra.mxu0 %v1162
        %v3436 = vpop.f32.mrf.mxu0
        %v3437 = vadd.f32 %v3378, %v3436
        %v3438 = vpop.f32.mrf.mxu0
        %v3439 = vadd.f32 %v3380, %v3438
        %3440 = vmatmul.bf16.gmra.mxu0 %v1174
        %v3441 = vpop.f32.mrf.mxu0
        %v3442 = vadd.f32 %v3383, %v3441
        %v3443 = vpop.f32.mrf.mxu0
        %v3444 = vadd.f32 %v3385, %v3443
        %3445 = vmatmul.bf16.gmra.mxu0 %v1186
        %v3446 = vpop.f32.mrf.mxu0
        %v3447 = vadd.f32 %v3388, %v3446
        %v3448 = vpop.f32.mrf.mxu0
        %v3449 = vadd.f32 %v3390, %v3448
        %3450 = vdwg.mxu0
        %3451 = vmatpush.bf16.msra.mxu0 %v2030
        %3452 = vmatpush.bf16.msra.mxu0 %v2028
        %3453 = vmatpush.bf16.msra.mxu0 %v2026
        %3454 = vmatpush.bf16.msra.mxu0 %v2024
        %3455 = vmatpush.bf16.msra.mxu0 %v2022
        %3456 = vmatpush.bf16.msra.mxu0 %v2020
        %3457 = vmatpush.bf16.msra.mxu0 %v2018
        %3458 = vmatpush.bf16.msra.mxu0 %v2016
        %3459 = vmatmul.bf16.gmra.mxu0 %v1079
        %v3460 = vpop.f32.mrf.mxu0
        %v3461 = vadd.f32 %v3402, %v3460
        %v3462 = vpop.f32.mrf.mxu0
        %v3463 = vadd.f32 %v3404, %v3462
        %3464 = vmatmul.bf16.gmra.mxu0 %v1091
        %v3465 = vpop.f32.mrf.mxu0
        %v3466 = vadd.f32 %v3407, %v3465
        %v3467 = vpop.f32.mrf.mxu0
        %v3468 = vadd.f32 %v3409, %v3467
        %3469 = vmatmul.bf16.gmra.mxu0 %v1103
        %v3470 = vpop.f32.mrf.mxu0
        %v3471 = vadd.f32 %v3412, %v3470
        %v3472 = vpop.f32.mrf.mxu0
        %v3473 = vadd.f32 %v3414, %v3472
        %3474 = vmatmul.bf16.gmra.mxu0 %v1115
        %v3475 = vpop.f32.mrf.mxu0
        %v3476 = vadd.f32 %v3417, %v3475
        %v3477 = vpop.f32.mrf.mxu0
        %v3478 = vadd.f32 %v3419, %v3477
        %3479 = vmatmul.bf16.gmra.mxu0 %v1127
        %v3480 = vpop.f32.mrf.mxu0
        %v3481 = vadd.f32 %v3422, %v3480
        %v3482 = vpop.f32.mrf.mxu0
        %v3483 = vadd.f32 %v3424, %v3482
        %3484 = vmatmul.bf16.gmra.mxu0 %v1139
        %v3485 = vpop.f32.mrf.mxu0
        %v3486 = vadd.f32 %v3427, %v3485
        %v3487 = vpop.f32.mrf.mxu0
        %v3488 = vadd.f32 %v3429, %v3487
        %3489 = vmatmul.bf16.gmra.mxu0 %v1151
        %v3490 = vpop.f32.mrf.mxu0
        %v3491 = vadd.f32 %v3432, %v3490
        %v3492 = vpop.f32.mrf.mxu0
        %v3493 = vadd.f32 %v3434, %v3492
        %3494 = vmatmul.bf16.gmra.mxu0 %v1163
        %v3495 = vpop.f32.mrf.mxu0
        %v3496 = vadd.f32 %v3437, %v3495
        %v3497 = vpop.f32.mrf.mxu0
        %v3498 = vadd.f32 %v3439, %v3497
        %3499 = vmatmul.bf16.gmra.mxu0 %v1175
        %v3500 = vpop.f32.mrf.mxu0
        %v3501 = vadd.f32 %v3442, %v3500
        %v3502 = vpop.f32.mrf.mxu0
        %v3503 = vadd.f32 %v3444, %v3502
        %3504 = vmatmul.bf16.gmra.mxu0 %v1187
        %v3505 = vpop.f32.mrf.mxu0
        %v3506 = vadd.f32 %v3447, %v3505
        %v3507 = vpop.f32.mrf.mxu0
        %v3508 = vadd.f32 %v3449, %v3507
        %3509 = vdwg.mxu0
        %3510 = vmatpush.bf16.msra.mxu0 %v2046
        %3511 = vmatpush.bf16.msra.mxu0 %v2044
        %3512 = vmatpush.bf16.msra.mxu0 %v2042
        %3513 = vmatpush.bf16.msra.mxu0 %v2040
        %3514 = vmatpush.bf16.msra.mxu0 %v2038
        %3515 = vmatpush.bf16.msra.mxu0 %v2036
        %3516 = vmatpush.bf16.msra.mxu0 %v2034
        %3517 = vmatpush.bf16.msra.mxu0 %v2032
        %3518 = vmatmul.bf16.gmra.mxu0 %v1080
        %v3519 = vpop.f32.mrf.mxu0
        %v3520 = vadd.f32 %v3461, %v3519
        %v3521 = vpop.f32.mrf.mxu0
        %v3522 = vadd.f32 %v3463, %v3521
        %3523 = vmatmul.bf16.gmra.mxu0 %v1092
        %v3524 = vpop.f32.mrf.mxu0
        %v3525 = vadd.f32 %v3466, %v3524
        %v3526 = vpop.f32.mrf.mxu0
        %v3527 = vadd.f32 %v3468, %v3526
        %3528 = vmatmul.bf16.gmra.mxu0 %v1104
        %v3529 = vpop.f32.mrf.mxu0
        %v3530 = vadd.f32 %v3471, %v3529
        %v3531 = vpop.f32.mrf.mxu0
        %v3532 = vadd.f32 %v3473, %v3531
        %3533 = vmatmul.bf16.gmra.mxu0 %v1116
        %v3534 = vpop.f32.mrf.mxu0
        %v3535 = vadd.f32 %v3476, %v3534
        %v3536 = vpop.f32.mrf.mxu0
        %v3537 = vadd.f32 %v3478, %v3536
        %3538 = vmatmul.bf16.gmra.mxu0 %v1128
        %v3539 = vpop.f32.mrf.mxu0
        %v3540 = vadd.f32 %v3481, %v3539
        %v3541 = vpop.f32.mrf.mxu0
        %v3542 = vadd.f32 %v3483, %v3541
        %3543 = vmatmul.bf16.gmra.mxu0 %v1140
        %v3544 = vpop.f32.mrf.mxu0
        %v3545 = vadd.f32 %v3486, %v3544
        %v3546 = vpop.f32.mrf.mxu0
        %v3547 = vadd.f32 %v3488, %v3546
        %3548 = vmatmul.bf16.gmra.mxu0 %v1152
        %v3549 = vpop.f32.mrf.mxu0
        %v3550 = vadd.f32 %v3491, %v3549
        %v3551 = vpop.f32.mrf.mxu0
        %v3552 = vadd.f32 %v3493, %v3551
        %3553 = vmatmul.bf16.gmra.mxu0 %v1164
        %v3554 = vpop.f32.mrf.mxu0
        %v3555 = vadd.f32 %v3496, %v3554
        %v3556 = vpop.f32.mrf.mxu0
        %v3557 = vadd.f32 %v3498, %v3556
        %3558 = vmatmul.bf16.gmra.mxu0 %v1176
        %v3559 = vpop.f32.mrf.mxu0
        %v3560 = vadd.f32 %v3501, %v3559
        %v3561 = vpop.f32.mrf.mxu0
        %v3562 = vadd.f32 %v3503, %v3561
        %3563 = vmatmul.bf16.gmra.mxu0 %v1188
        %v3564 = vpop.f32.mrf.mxu0
        %v3565 = vadd.f32 %v3506, %v3564
        %v3566 = vpop.f32.mrf.mxu0
        %v3567 = vadd.f32 %v3508, %v3566
        %3568 = vdwg.mxu0
        %3569 = vmatpush.bf16.msra.mxu0 %v2062
        %3570 = vmatpush.bf16.msra.mxu0 %v2060
        %3571 = vmatpush.bf16.msra.mxu0 %v2058
        %3572 = vmatpush.bf16.msra.mxu0 %v2056
        %3573 = vmatpush.bf16.msra.mxu0 %v2054
        %3574 = vmatpush.bf16.msra.mxu0 %v2052
        %3575 = vmatpush.bf16.msra.mxu0 %v2050
        %3576 = vmatpush.bf16.msra.mxu0 %v2048
        %3577 = vmatmul.bf16.gmra.mxu0 %v1081
        %v3578 = vpop.f32.mrf.mxu0
        %v3579 = vadd.f32 %v3520, %v3578
        %v3580 = vpop.f32.mrf.mxu0
        %v3581 = vadd.f32 %v3522, %v3580
        %3582 = vmatmul.bf16.gmra.mxu0 %v1093
        %v3583 = vpop.f32.mrf.mxu0
        %v3584 = vadd.f32 %v3525, %v3583
        %v3585 = vpop.f32.mrf.mxu0
        %v3586 = vadd.f32 %v3527, %v3585
        %3587 = vmatmul.bf16.gmra.mxu0 %v1105
        %v3588 = vpop.f32.mrf.mxu0
        %v3589 = vadd.f32 %v3530, %v3588
        %v3590 = vpop.f32.mrf.mxu0
        %v3591 = vadd.f32 %v3532, %v3590
        %3592 = vmatmul.bf16.gmra.mxu0 %v1117
        %v3593 = vpop.f32.mrf.mxu0
        %v3594 = vadd.f32 %v3535, %v3593
        %v3595 = vpop.f32.mrf.mxu0
        %v3596 = vadd.f32 %v3537, %v3595
        %3597 = vmatmul.bf16.gmra.mxu0 %v1129
        %v3598 = vpop.f32.mrf.mxu0
        %v3599 = vadd.f32 %v3540, %v3598
        %v3600 = vpop.f32.mrf.mxu0
        %v3601 = vadd.f32 %v3542, %v3600
        %3602 = vmatmul.bf16.gmra.mxu0 %v1141
        %v3603 = vpop.f32.mrf.mxu0
        %v3604 = vadd.f32 %v3545, %v3603
        %v3605 = vpop.f32.mrf.mxu0
        %v3606 = vadd.f32 %v3547, %v3605
        %3607 = vmatmul.bf16.gmra.mxu0 %v1153
        %v3608 = vpop.f32.mrf.mxu0
        %v3609 = vadd.f32 %v3550, %v3608
        %v3610 = vpop.f32.mrf.mxu0
        %v3611 = vadd.f32 %v3552, %v3610
        %3612 = vmatmul.bf16.gmra.mxu0 %v1165
        %v3613 = vpop.f32.mrf.mxu0
        %v3614 = vadd.f32 %v3555, %v3613
        %v3615 = vpop.f32.mrf.mxu0
        %v3616 = vadd.f32 %v3557, %v3615
        %3617 = vmatmul.bf16.gmra.mxu0 %v1177
        %v3618 = vpop.f32.mrf.mxu0
        %v3619 = vadd.f32 %v3560, %v3618
        %v3620 = vpop.f32.mrf.mxu0
        %v3621 = vadd.f32 %v3562, %v3620
        %3622 = vmatmul.bf16.gmra.mxu0 %v1189
        %v3623 = vpop.f32.mrf.mxu0
        %v3624 = vadd.f32 %v3565, %v3623
        %v3625 = vpop.f32.mrf.mxu0
        %v3626 = vadd.f32 %v3567, %v3625
        %3627 = vdwg.mxu0
        %3628 = vmatpush.bf16.msra.mxu0 %v2078
        %3629 = vmatpush.bf16.msra.mxu0 %v2076
        %3630 = vmatpush.bf16.msra.mxu0 %v2074
        %3631 = vmatpush.bf16.msra.mxu0 %v2072
        %3632 = vmatpush.bf16.msra.mxu0 %v2070
        %3633 = vmatpush.bf16.msra.mxu0 %v2068
        %3634 = vmatpush.bf16.msra.mxu0 %v2066
        %3635 = vmatpush.bf16.msra.mxu0 %v2064
        %3636 = vmatmul.bf16.gmra.mxu0 %v1082
        %v3637 = vpop.f32.mrf.mxu0
        %v3638 = vadd.f32 %v3579, %v3637
        %v3639 = vpop.f32.mrf.mxu0
        %v3640 = vadd.f32 %v3581, %v3639
        %3641 = vmatmul.bf16.gmra.mxu0 %v1094
        %v3642 = vpop.f32.mrf.mxu0
        %v3643 = vadd.f32 %v3584, %v3642
        %v3644 = vpop.f32.mrf.mxu0
        %v3645 = vadd.f32 %v3586, %v3644
        %3646 = vmatmul.bf16.gmra.mxu0 %v1106
        %v3647 = vpop.f32.mrf.mxu0
        %v3648 = vadd.f32 %v3589, %v3647
        %v3649 = vpop.f32.mrf.mxu0
        %v3650 = vadd.f32 %v3591, %v3649
        %3651 = vmatmul.bf16.gmra.mxu0 %v1118
        %v3652 = vpop.f32.mrf.mxu0
        %v3653 = vadd.f32 %v3594, %v3652
        %v3654 = vpop.f32.mrf.mxu0
        %v3655 = vadd.f32 %v3596, %v3654
        %3656 = vmatmul.bf16.gmra.mxu0 %v1130
        %v3657 = vpop.f32.mrf.mxu0
        %v3658 = vadd.f32 %v3599, %v3657
        %v3659 = vpop.f32.mrf.mxu0
        %v3660 = vadd.f32 %v3601, %v3659
        %3661 = vmatmul.bf16.gmra.mxu0 %v1142
        %v3662 = vpop.f32.mrf.mxu0
        %v3663 = vadd.f32 %v3604, %v3662
        %v3664 = vpop.f32.mrf.mxu0
        %v3665 = vadd.f32 %v3606, %v3664
        %3666 = vmatmul.bf16.gmra.mxu0 %v1154
        %v3667 = vpop.f32.mrf.mxu0
        %v3668 = vadd.f32 %v3609, %v3667
        %v3669 = vpop.f32.mrf.mxu0
        %v3670 = vadd.f32 %v3611, %v3669
        %3671 = vmatmul.bf16.gmra.mxu0 %v1166
        %v3672 = vpop.f32.mrf.mxu0
        %v3673 = vadd.f32 %v3614, %v3672
        %v3674 = vpop.f32.mrf.mxu0
        %v3675 = vadd.f32 %v3616, %v3674
        %3676 = vmatmul.bf16.gmra.mxu0 %v1178
        %v3677 = vpop.f32.mrf.mxu0
        %v3678 = vadd.f32 %v3619, %v3677
        %v3679 = vpop.f32.mrf.mxu0
        %v3680 = vadd.f32 %v3621, %v3679
        %3681 = vmatmul.bf16.gmra.mxu0 %v1190
        %v3682 = vpop.f32.mrf.mxu0
        %v3683 = vadd.f32 %v3624, %v3682
        %v3684 = vpop.f32.mrf.mxu0
        %v3685 = vadd.f32 %v3626, %v3684
        %3686 = vdwg.mxu0
        %vm3687 = vcmp.gt.f32.partialorder %v2930, 0.0
        %vm3688 = vcmp.gt.f32.partialorder %v3638, 0.0
        %vm3689 = vcmp.gt.f32.partialorder %v2932, 0.0
        %vm3690 = vcmp.gt.f32.partialorder %v3640, 0.0
        %vm3691 = vcmp.gt.f32.partialorder %v2935, 0.0
        %vm3692 = vcmp.gt.f32.partialorder %v3643, 0.0
        %vm3693 = vcmp.gt.f32.partialorder %v2937, 0.0
        %vm3694 = vcmp.gt.f32.partialorder %v3645, 0.0
        %vm3695 = vcmp.gt.f32.partialorder %v2940, 0.0
        %vm3696 = vcmp.gt.f32.partialorder %v3648, 0.0
        %vm3697 = vcmp.gt.f32.partialorder %v2942, 0.0
        %vm3698 = vcmp.gt.f32.partialorder %v3650, 0.0
        %vm3699 = vcmp.gt.f32.partialorder %v2945, 0.0
        %vm3700 = vcmp.gt.f32.partialorder %v3653, 0.0
        %vm3701 = vcmp.gt.f32.partialorder %v2947, 0.0
        %vm3702 = vcmp.gt.f32.partialorder %v3655, 0.0
        %vm3703 = vcmp.gt.f32.partialorder %v2950, 0.0
        %vm3704 = vcmp.gt.f32.partialorder %v3658, 0.0
        %vm3705 = vcmp.gt.f32.partialorder %v2952, 0.0
        %vm3706 = vcmp.gt.f32.partialorder %v3660, 0.0
        %vm3707 = vcmp.gt.f32.partialorder %v2955, 0.0
        %vm3708 = vcmp.gt.f32.partialorder %v3663, 0.0
        %vm3709 = vcmp.gt.f32.partialorder %v2957, 0.0
        %vm3710 = vcmp.gt.f32.partialorder %v3665, 0.0
        %vm3711 = vcmp.gt.f32.partialorder %v2960, 0.0
        %vm3712 = vcmp.gt.f32.partialorder %v3668, 0.0
        %vm3713 = vcmp.gt.f32.partialorder %v2962, 0.0
        %vm3714 = vcmp.gt.f32.partialorder %v3670, 0.0
        %vm3715 = vcmp.gt.f32.partialorder %v2965, 0.0
        %vm3716 = vcmp.gt.f32.partialorder %v3673, 0.0
        %vm3717 = vcmp.gt.f32.partialorder %v2967, 0.0
        %vm3718 = vcmp.gt.f32.partialorder %v3675, 0.0
        %vm3719 = vcmp.gt.f32.partialorder %v2970, 0.0
        %vm3720 = vcmp.gt.f32.partialorder %v3678, 0.0
        %vm3721 = vcmp.gt.f32.partialorder %v2972, 0.0
        %vm3722 = vcmp.gt.f32.partialorder %v3680, 0.0
        %vm3723 = vcmp.gt.f32.partialorder %v2975, 0.0
        %vm3724 = vcmp.gt.f32.partialorder %v3683, 0.0
        %vm3725 = vcmp.gt.f32.partialorder %v2977, 0.0
        %vm3726 = vcmp.gt.f32.partialorder %v3685, 0.0
        %v3727 = vmul.f32 %v2930, 1.442695
        %v3728 = vpow.pop %v3727
        %v3729 = vmul.f32 %v3638, 1.442695
        %v3730 = vpow.pop %v3729
        %v3731 = vmul.f32 %v2932, 1.442695
        %v3732 = vpow.pop %v3731
        %v3733 = vmul.f32 %v3640, 1.442695
        %v3734 = vpow.pop %v3733
        %v3735 = vmul.f32 %v2935, 1.442695
        %v3736 = vpow.pop %v3735
        %v3737 = vmul.f32 %v3643, 1.442695
        %v3738 = vpow.pop %v3737
        %v3739 = vmul.f32 %v2937, 1.442695
        %v3740 = vpow.pop %v3739
        %v3741 = vmul.f32 %v3645, 1.442695
        %v3742 = vpow.pop %v3741
        %v3743 = vmul.f32 %v2940, 1.442695
        %v3744 = vpow.pop %v3743
        %v3745 = vmul.f32 %v3648, 1.442695
        %v3746 = vpow.pop %v3745
        %v3747 = vmul.f32 %v2942, 1.442695
        %v3748 = vpow.pop %v3747
        %v3749 = vmul.f32 %v3650, 1.442695
        %v3750 = vpow.pop %v3749
        %v3751 = vmul.f32 %v2945, 1.442695
        %v3752 = vpow.pop %v3751
        %v3753 = vmul.f32 %v3653, 1.442695
        %v3754 = vpow.pop %v3753
        %v3755 = vmul.f32 %v2947, 1.442695
        %v3756 = vpow.pop %v3755
        %v3757 = vmul.f32 %v3655, 1.442695
        %v3758 = vpow.pop %v3757
        %v3759 = vmul.f32 %v2950, 1.442695
        %v3760 = vpow.pop %v3759
        %v3761 = vmul.f32 %v3658, 1.442695
        %v3762 = vpow.pop %v3761
        %v3763 = vmul.f32 %v2952, 1.442695
        %v3764 = vpow.pop %v3763
        %v3765 = vmul.f32 %v3660, 1.442695
        %v3766 = vpow.pop %v3765
        %v3767 = vmul.f32 %v2955, 1.442695
        %v3768 = vpow.pop %v3767
        %v3769 = vmul.f32 %v3663, 1.442695
        %v3770 = vpow.pop %v3769
        %v3771 = vmul.f32 %v2957, 1.442695
        %v3772 = vpow.pop %v3771
        %v3773 = vmul.f32 %v3665, 1.442695
        %v3774 = vpow.pop %v3773
        %v3775 = vmul.f32 %v2960, 1.442695
        %v3776 = vpow.pop %v3775
        %v3777 = vmul.f32 %v3668, 1.442695
        %v3778 = vpow.pop %v3777
        %v3779 = vmul.f32 %v2962, 1.442695
        %v3780 = vpow.pop %v3779
        %v3781 = vmul.f32 %v3670, 1.442695
        %v3782 = vpow.pop %v3781
        %v3783 = vmul.f32 %v2965, 1.442695
        %v3784 = vpow.pop %v3783
        %v3785 = vmul.f32 %v3673, 1.442695
        %v3786 = vpow.pop %v3785
        %v3787 = vmul.f32 %v2967, 1.442695
        %v3788 = vpow.pop %v3787
        %v3789 = vmul.f32 %v3675, 1.442695
        %v3790 = vpow.pop %v3789
        %v3791 = vmul.f32 %v2970, 1.442695
        %v3792 = vpow.pop %v3791
        %v3793 = vmul.f32 %v3678, 1.442695
        %v3794 = vpow.pop %v3793
        %v3795 = vmul.f32 %v2972, 1.442695
        %v3796 = vpow.pop %v3795
        %v3797 = vmul.f32 %v3680, 1.442695
        %v3798 = vpow.pop %v3797
        %v3799 = vmul.f32 %v2975, 1.442695
        %v3800 = vpow.pop %v3799
        %v3801 = vmul.f32 %v3683, 1.442695
        %v3802 = vpow.pop %v3801
        %v3803 = vmul.f32 %v2977, 1.442695
        %v3804 = vpow.pop %v3803
        %v3805 = vmul.f32 %v3685, 1.442695
        %v3806 = vpow.pop %v3805
        %v3807 = vsub.f32 %v3728, 1.0
        %v3808 = vsub.f32 %v3730, 1.0
        %v3809 = vsub.f32 %v3732, 1.0
        %v3810 = vsub.f32 %v3734, 1.0
        %v3811 = vsub.f32 %v3736, 1.0
        %v3812 = vsub.f32 %v3738, 1.0
        %v3813 = vsub.f32 %v3740, 1.0
        %v3814 = vsub.f32 %v3742, 1.0
        %v3815 = vsub.f32 %v3744, 1.0
        %v3816 = vsub.f32 %v3746, 1.0
        %v3817 = vsub.f32 %v3748, 1.0
        %v3818 = vsub.f32 %v3750, 1.0
        %v3819 = vsub.f32 %v3752, 1.0
        %v3820 = vsub.f32 %v3754, 1.0
        %v3821 = vsub.f32 %v3756, 1.0
        %v3822 = vsub.f32 %v3758, 1.0
        %v3823 = vsub.f32 %v3760, 1.0
        %v3824 = vsub.f32 %v3762, 1.0
        %v3825 = vsub.f32 %v3764, 1.0
        %v3826 = vsub.f32 %v3766, 1.0
        %v3827 = vsub.f32 %v3768, 1.0
        %v3828 = vsub.f32 %v3770, 1.0
        %v3829 = vsub.f32 %v3772, 1.0
        %v3830 = vsub.f32 %v3774, 1.0
        %v3831 = vsub.f32 %v3776, 1.0
        %v3832 = vsub.f32 %v3778, 1.0
        %v3833 = vsub.f32 %v3780, 1.0
        %v3834 = vsub.f32 %v3782, 1.0
        %v3835 = vsub.f32 %v3784, 1.0
        %v3836 = vsub.f32 %v3786, 1.0
        %v3837 = vsub.f32 %v3788, 1.0
        %v3838 = vsub.f32 %v3790, 1.0
        %v3839 = vsub.f32 %v3792, 1.0
        %v3840 = vsub.f32 %v3794, 1.0
        %v3841 = vsub.f32 %v3796, 1.0
        %v3842 = vsub.f32 %v3798, 1.0
        %v3843 = vsub.f32 %v3800, 1.0
        %v3844 = vsub.f32 %v3802, 1.0
        %v3845 = vsub.f32 %v3804, 1.0
        %v3846 = vsub.f32 %v3806, 1.0
        %v3847 = vsel %vm3687, %v2930, %v3807
        %v3848 = vsel %vm3688, %v3638, %v3808
        %v3849 = vsel %vm3689, %v2932, %v3809
        %v3850 = vsel %vm3690, %v3640, %v3810
        %v3851 = vsel %vm3691, %v2935, %v3811
        %v3852 = vsel %vm3692, %v3643, %v3812
        %v3853 = vsel %vm3693, %v2937, %v3813
        %v3854 = vsel %vm3694, %v3645, %v3814
        %v3855 = vsel %vm3695, %v2940, %v3815
        %v3856 = vsel %vm3696, %v3648, %v3816
        %v3857 = vsel %vm3697, %v2942, %v3817
        %v3858 = vsel %vm3698, %v3650, %v3818
        %v3859 = vsel %vm3699, %v2945, %v3819
        %v3860 = vsel %vm3700, %v3653, %v3820
        %v3861 = vsel %vm3701, %v2947, %v3821
        %v3862 = vsel %vm3702, %v3655, %v3822
        %v3863 = vsel %vm3703, %v2950, %v3823
        %v3864 = vsel %vm3704, %v3658, %v3824
        %v3865 = vsel %vm3705, %v2952, %v3825
        %v3866 = vsel %vm3706, %v3660, %v3826
        %v3867 = vsel %vm3707, %v2955, %v3827
        %v3868 = vsel %vm3708, %v3663, %v3828
        %v3869 = vsel %vm3709, %v2957, %v3829
        %v3870 = vsel %vm3710, %v3665, %v3830
        %v3871 = vsel %vm3711, %v2960, %v3831
        %v3872 = vsel %vm3712, %v3668, %v3832
        %v3873 = vsel %vm3713, %v2962, %v3833
        %v3874 = vsel %vm3714, %v3670, %v3834
        %v3875 = vsel %vm3715, %v2965, %v3835
        %v3876 = vsel %vm3716, %v3673, %v3836
        %v3877 = vsel %vm3717, %v2967, %v3837
        %v3878 = vsel %vm3718, %v3675, %v3838
        %v3879 = vsel %vm3719, %v2970, %v3839
        %v3880 = vsel %vm3720, %v3678, %v3840
        %v3881 = vsel %vm3721, %v2972, %v3841
        %v3882 = vsel %vm3722, %v3680, %v3842
        %v3883 = vsel %vm3723, %v2975, %v3843
        %v3884 = vsel %vm3724, %v3683, %v3844
        %v3885 = vsel %vm3725, %v2977, %v3845
        %v3886 = vsel %vm3726, %v3685, %v3846
        %v3887 = vpack.c.bf16 %v3849, %v3847
        %v3888 = vpack.c.bf16 %v3850, %v3848
        %v3889 = vpack.c.bf16 %v3853, %v3851
        %v3890 = vpack.c.bf16 %v3854, %v3852
        %v3891 = vpack.c.bf16 %v3857, %v3855
        %v3892 = vpack.c.bf16 %v3858, %v3856
        %v3893 = vpack.c.bf16 %v3861, %v3859
        %v3894 = vpack.c.bf16 %v3862, %v3860
        %v3895 = vpack.c.bf16 %v3865, %v3863
        %v3896 = vpack.c.bf16 %v3866, %v3864
        %v3897 = vpack.c.bf16 %v3869, %v3867
        %v3898 = vpack.c.bf16 %v3870, %v3868
        %v3899 = vpack.c.bf16 %v3873, %v3871
        %v3900 = vpack.c.bf16 %v3874, %v3872
        %v3901 = vpack.c.bf16 %v3877, %v3875
        %v3902 = vpack.c.bf16 %v3878, %v3876
        %v3903 = vpack.c.bf16 %v3881, %v3879
        %v3904 = vpack.c.bf16 %v3882, %v3880
        %v3905 = vpack.c.bf16 %v3885, %v3883
        %v3906 = vpack.c.bf16 %v3886, %v3884
        %v3907 = vld [vmem:[#allocation7] sm:$0xff]
        %v3908 = vld [vmem:[#allocation7 + $0x8] sm:$0xff]
        %v3909 = vld [vmem:[#allocation7 + $0x10] sm:$0xff]
        %v3910 = vld [vmem:[#allocation7 + $0x18] sm:$0xff]
        %v3911 = vld [vmem:[#allocation7 + $0x20] sm:$0xff]
        %v3912 = vld [vmem:[#allocation7 + $0x28] sm:$0xff]
        %v3913 = vld [vmem:[#allocation7 + $0x30] sm:$0xff]
        %v3914 = vld [vmem:[#allocation7 + $0x38] sm:$0xff]
        %v3915 = vld [vmem:[#allocation7 + $0x40] sm:$0xff]
        %v3916 = vld [vmem:[#allocation7 + $0x48] sm:$0xff]
        %v3917 = vld [vmem:[#allocation7 + $0x50] sm:$0xff]
        %v3918 = vld [vmem:[#allocation7 + $0x58] sm:$0xff]
        %v3919 = vld [vmem:[#allocation7 + $0x60] sm:$0xff]
        %v3920 = vld [vmem:[#allocation7 + $0x68] sm:$0xff]
        %v3921 = vld [vmem:[#allocation7 + $0x70] sm:$0xff]
        %v3922 = vld [vmem:[#allocation7 + $0x78] sm:$0xff]
        %v3923 = vld [vmem:[#allocation7 + $0x80] sm:$0xff]
        %v3924 = vld [vmem:[#allocation7 + $0x88] sm:$0xff]
        %v3925 = vld [vmem:[#allocation7 + $0x90] sm:$0xff]
        %v3926 = vld [vmem:[#allocation7 + $0x98] sm:$0xff]
        %v3927 = vld [vmem:[#allocation7 + $0xa0] sm:$0xff]
        %v3928 = vld [vmem:[#allocation7 + $0xa8] sm:$0xff]
        %v3929 = vld [vmem:[#allocation7 + $0xb0] sm:$0xff]
        %v3930 = vld [vmem:[#allocation7 + $0xb8] sm:$0xff]
        %v3931 = vld [vmem:[#allocation7 + $0xc0] sm:$0xff]
        %v3932 = vld [vmem:[#allocation7 + $0xc8] sm:$0xff]
        %v3933 = vld [vmem:[#allocation7 + $0xd0] sm:$0xff]
        %v3934 = vld [vmem:[#allocation7 + $0xd8] sm:$0xff]
        %v3935 = vld [vmem:[#allocation7 + $0xe0] sm:$0xff]
        %v3936 = vld [vmem:[#allocation7 + $0xe8] sm:$0xff]
        %v3937 = vld [vmem:[#allocation7 + $0xf0] sm:$0xff]
        %v3938 = vld [vmem:[#allocation7 + $0xf8] sm:$0xff]
        %v3939 = vld [vmem:[%s4] sm:$0x3]
        %v3941 = vperm.slane %v3939, 0
        %v3942 = vperm.slane %v3939, 1
        %v3977 = vunpack.c.l.b16 %v3907
        %v3978 = vunpack.c.h.b16 %v3907
        %v3979 = vunpack.c.l.b16 %v3908
        %v3980 = vunpack.c.h.b16 %v3908
        %v3981 = vunpack.c.l.b16 %v3909
        %v3982 = vunpack.c.h.b16 %v3909
        %v3983 = vunpack.c.l.b16 %v3910
        %v3984 = vunpack.c.h.b16 %v3910
        %v3985 = vunpack.c.l.b16 %v3911
        %v3986 = vunpack.c.h.b16 %v3911
        %v3987 = vunpack.c.l.b16 %v3912
        %v3988 = vunpack.c.h.b16 %v3912
        %v3989 = vunpack.c.l.b16 %v3913
        %v3990 = vunpack.c.h.b16 %v3913
        %v3991 = vunpack.c.l.b16 %v3914
        %v3992 = vunpack.c.h.b16 %v3914
        %v3993 = vunpack.c.l.b16 %v3915
        %v3994 = vunpack.c.h.b16 %v3915
        %v3995 = vunpack.c.l.b16 %v3916
        %v3996 = vunpack.c.h.b16 %v3916
        %v3997 = vunpack.c.l.b16 %v3917
        %v3998 = vunpack.c.h.b16 %v3917
        %v3999 = vunpack.c.l.b16 %v3918
        %v4000 = vunpack.c.h.b16 %v3918
        %v4001 = vunpack.c.l.b16 %v3919
        %v4002 = vunpack.c.h.b16 %v3919
        %v4003 = vunpack.c.l.b16 %v3920
        %v4004 = vunpack.c.h.b16 %v3920
        %v4005 = vunpack.c.l.b16 %v3921
        %v4006 = vunpack.c.h.b16 %v3921
        %v4007 = vunpack.c.l.b16 %v3922
        %v4008 = vunpack.c.h.b16 %v3922
        %v4009 = vunpack.c.l.b16 %v3923
        %v4010 = vunpack.c.h.b16 %v3923
        %v4011 = vunpack.c.l.b16 %v3924
        %v4012 = vunpack.c.h.b16 %v3924
        %v4013 = vunpack.c.l.b16 %v3925
        %v4014 = vunpack.c.h.b16 %v3925
        %v4015 = vunpack.c.l.b16 %v3926
        %v4016 = vunpack.c.h.b16 %v3926
        %v4017 = vunpack.c.l.b16 %v3927
        %v4018 = vunpack.c.h.b16 %v3927
        %v4019 = vunpack.c.l.b16 %v3928
        %v4020 = vunpack.c.h.b16 %v3928
        %v4021 = vunpack.c.l.b16 %v3929
        %v4022 = vunpack.c.h.b16 %v3929
        %v4023 = vunpack.c.l.b16 %v3930
        %v4024 = vunpack.c.h.b16 %v3930
        %v4025 = vunpack.c.l.b16 %v3931
        %v4026 = vunpack.c.h.b16 %v3931
        %v4027 = vunpack.c.l.b16 %v3932
        %v4028 = vunpack.c.h.b16 %v3932
        %v4029 = vunpack.c.l.b16 %v3933
        %v4030 = vunpack.c.h.b16 %v3933
        %v4031 = vunpack.c.l.b16 %v3934
        %v4032 = vunpack.c.h.b16 %v3934
        %v4033 = vunpack.c.l.b16 %v3935
        %v4034 = vunpack.c.h.b16 %v3935
        %v4035 = vunpack.c.l.b16 %v3936
        %v4036 = vunpack.c.h.b16 %v3936
        %v4037 = vunpack.c.l.b16 %v3937
        %v4038 = vunpack.c.h.b16 %v3937
        %v4039 = vunpack.c.l.b16 %v3938
        %v4040 = vunpack.c.h.b16 %v3938
        %v4041 = vpack.c.b16 %v3979, %v3977
        %v4042 = vpack.c.b16 %v3980, %v3978
        %v4043 = vpack.c.b16 %v3983, %v3981
        %v4044 = vpack.c.b16 %v3984, %v3982
        %v4045 = vpack.c.b16 %v3987, %v3985
        %v4046 = vpack.c.b16 %v3988, %v3986
        %v4047 = vpack.c.b16 %v3991, %v3989
        %v4048 = vpack.c.b16 %v3992, %v3990
        %v4049 = vpack.c.b16 %v3995, %v3993
        %v4050 = vpack.c.b16 %v3996, %v3994
        %v4051 = vpack.c.b16 %v3999, %v3997
        %v4052 = vpack.c.b16 %v4000, %v3998
        %v4053 = vpack.c.b16 %v4003, %v4001
        %v4054 = vpack.c.b16 %v4004, %v4002
        %v4055 = vpack.c.b16 %v4007, %v4005
        %v4056 = vpack.c.b16 %v4008, %v4006
        %v4057 = vpack.c.b16 %v4011, %v4009
        %v4058 = vpack.c.b16 %v4012, %v4010
        %v4059 = vpack.c.b16 %v4015, %v4013
        %v4060 = vpack.c.b16 %v4016, %v4014
        %v4061 = vpack.c.b16 %v4019, %v4017
        %v4062 = vpack.c.b16 %v4020, %v4018
        %v4063 = vpack.c.b16 %v4023, %v4021
        %v4064 = vpack.c.b16 %v4024, %v4022
        %v4065 = vpack.c.b16 %v4027, %v4025
        %v4066 = vpack.c.b16 %v4028, %v4026
        %v4067 = vpack.c.b16 %v4031, %v4029
        %v4068 = vpack.c.b16 %v4032, %v4030
        %v4069 = vpack.c.b16 %v4035, %v4033
        %v4070 = vpack.c.b16 %v4036, %v4034
        %v4071 = vpack.c.b16 %v4039, %v4037
        %v4072 = vpack.c.b16 %v4040, %v4038
        %4105 = vmatpush.bf16.msra.mxu0 %v4055
        %4106 = vmatpush.bf16.msra.mxu0 %v4053
        %4107 = vmatpush.bf16.msra.mxu0 %v4051
        %4108 = vmatpush.bf16.msra.mxu0 %v4049
        %4109 = vmatpush.bf16.msra.mxu0 %v4047
        %4110 = vmatpush.bf16.msra.mxu0 %v4045
        %4111 = vmatpush.bf16.msra.mxu0 %v4043
        %4112 = vmatpush.bf16.msra.mxu0 %v4041
        %4113 = vmatmul.bf16.gmra.mxu0 %v3887
        %v4114 = vpop.f32.mrf.mxu0
        %v4115 = vadd.f32 %v3941, %v4114
        %v4116 = vpop.f32.mrf.mxu0
        %v4117 = vadd.f32 %v3941, %v4116
        %4118 = vmatmul.bf16.gmra.mxu0 %v3889
        %v4119 = vpop.f32.mrf.mxu0
        %v4120 = vadd.f32 %v3941, %v4119
        %v4121 = vpop.f32.mrf.mxu0
        %v4122 = vadd.f32 %v3941, %v4121
        %4123 = vmatmul.bf16.gmra.mxu0 %v3891
        %v4124 = vpop.f32.mrf.mxu0
        %v4125 = vadd.f32 %v3941, %v4124
        %v4126 = vpop.f32.mrf.mxu0
        %v4127 = vadd.f32 %v3941, %v4126
        %4128 = vmatmul.bf16.gmra.mxu0 %v3893
        %v4129 = vpop.f32.mrf.mxu0
        %v4130 = vadd.f32 %v3941, %v4129
        %v4131 = vpop.f32.mrf.mxu0
        %v4132 = vadd.f32 %v3941, %v4131
        %4133 = vmatmul.bf16.gmra.mxu0 %v3895
        %v4134 = vpop.f32.mrf.mxu0
        %v4135 = vadd.f32 %v3941, %v4134
        %v4136 = vpop.f32.mrf.mxu0
        %v4137 = vadd.f32 %v3941, %v4136
        %4138 = vmatmul.bf16.gmra.mxu0 %v3897
        %v4139 = vpop.f32.mrf.mxu0
        %v4140 = vadd.f32 %v3941, %v4139
        %v4141 = vpop.f32.mrf.mxu0
        %v4142 = vadd.f32 %v3941, %v4141
        %4143 = vmatmul.bf16.gmra.mxu0 %v3899
        %v4144 = vpop.f32.mrf.mxu0
        %v4145 = vadd.f32 %v3941, %v4144
        %v4146 = vpop.f32.mrf.mxu0
        %v4147 = vadd.f32 %v3941, %v4146
        %4148 = vmatmul.bf16.gmra.mxu0 %v3901
        %v4149 = vpop.f32.mrf.mxu0
        %v4150 = vadd.f32 %v3941, %v4149
        %v4151 = vpop.f32.mrf.mxu0
        %v4152 = vadd.f32 %v3941, %v4151
        %4153 = vmatmul.bf16.gmra.mxu0 %v3903
        %v4154 = vpop.f32.mrf.mxu0
        %v4155 = vadd.f32 %v3941, %v4154
        %v4156 = vpop.f32.mrf.mxu0
        %v4157 = vadd.f32 %v3941, %v4156
        %4158 = vmatmul.bf16.gmra.mxu0 %v3905
        %v4159 = vpop.f32.mrf.mxu0
        %v4160 = vadd.f32 %v3941, %v4159
        %v4161 = vpop.f32.mrf.mxu0
        %v4162 = vadd.f32 %v3941, %v4161
        %4163 = vdwg.mxu0
        %4164 = vmatpush.bf16.msra.mxu0 %v4071
        %4165 = vmatpush.bf16.msra.mxu0 %v4069
        %4166 = vmatpush.bf16.msra.mxu0 %v4067
        %4167 = vmatpush.bf16.msra.mxu0 %v4065
        %4168 = vmatpush.bf16.msra.mxu0 %v4063
        %4169 = vmatpush.bf16.msra.mxu0 %v4061
        %4170 = vmatpush.bf16.msra.mxu0 %v4059
        %4171 = vmatpush.bf16.msra.mxu0 %v4057
        %4172 = vmatmul.bf16.gmra.mxu0 %v3888
        %v4173 = vpop.f32.mrf.mxu0
        %v4174 = vadd.f32 %v4115, %v4173
        %v4175 = vpop.f32.mrf.mxu0
        %v4176 = vadd.f32 %v4117, %v4175
        %4177 = vmatmul.bf16.gmra.mxu0 %v3890
        %v4178 = vpop.f32.mrf.mxu0
        %v4179 = vadd.f32 %v4120, %v4178
        %v4180 = vpop.f32.mrf.mxu0
        %v4181 = vadd.f32 %v4122, %v4180
        %4182 = vmatmul.bf16.gmra.mxu0 %v3892
        %v4183 = vpop.f32.mrf.mxu0
        %v4184 = vadd.f32 %v4125, %v4183
        %v4185 = vpop.f32.mrf.mxu0
        %v4186 = vadd.f32 %v4127, %v4185
        %4187 = vmatmul.bf16.gmra.mxu0 %v3894
        %v4188 = vpop.f32.mrf.mxu0
        %v4189 = vadd.f32 %v4130, %v4188
        %v4190 = vpop.f32.mrf.mxu0
        %v4191 = vadd.f32 %v4132, %v4190
        %4192 = vmatmul.bf16.gmra.mxu0 %v3896
        %v4193 = vpop.f32.mrf.mxu0
        %v4194 = vadd.f32 %v4135, %v4193
        %v4195 = vpop.f32.mrf.mxu0
        %v4196 = vadd.f32 %v4137, %v4195
        %4197 = vmatmul.bf16.gmra.mxu0 %v3898
        %v4198 = vpop.f32.mrf.mxu0
        %v4199 = vadd.f32 %v4140, %v4198
        %v4200 = vpop.f32.mrf.mxu0
        %v4201 = vadd.f32 %v4142, %v4200
        %4202 = vmatmul.bf16.gmra.mxu0 %v3900
        %v4203 = vpop.f32.mrf.mxu0
        %v4204 = vadd.f32 %v4145, %v4203
        %v4205 = vpop.f32.mrf.mxu0
        %v4206 = vadd.f32 %v4147, %v4205
        %4207 = vmatmul.bf16.gmra.mxu0 %v3902
        %v4208 = vpop.f32.mrf.mxu0
        %v4209 = vadd.f32 %v4150, %v4208
        %v4210 = vpop.f32.mrf.mxu0
        %v4211 = vadd.f32 %v4152, %v4210
        %4212 = vmatmul.bf16.gmra.mxu0 %v3904
        %v4213 = vpop.f32.mrf.mxu0
        %v4214 = vadd.f32 %v4155, %v4213
        %v4215 = vpop.f32.mrf.mxu0
        %v4216 = vadd.f32 %v4157, %v4215
        %4217 = vmatmul.bf16.gmra.mxu0 %v3906
        %v4218 = vpop.f32.mrf.mxu0
        %v4219 = vadd.f32 %v4160, %v4218
        %v4220 = vpop.f32.mrf.mxu0
        %v4221 = vadd.f32 %v4162, %v4220
        %4222 = vdwg.mxu0
        %4223 = vmatpush.bf16.msra.mxu0 %v4056
        %4224 = vmatpush.bf16.msra.mxu0 %v4054
        %4225 = vmatpush.bf16.msra.mxu0 %v4052
        %4226 = vmatpush.bf16.msra.mxu0 %v4050
        %4227 = vmatpush.bf16.msra.mxu0 %v4048
        %4228 = vmatpush.bf16.msra.mxu0 %v4046
        %4229 = vmatpush.bf16.msra.mxu0 %v4044
        %4230 = vmatpush.bf16.msra.mxu0 %v4042
        %4231 = vmatmul.bf16.gmra.mxu0 %v3887
        %v4232 = vpop.f32.mrf.mxu0
        %v4233 = vadd.f32 %v3942, %v4232
        %v4234 = vpop.f32.mrf.mxu0
        %v4235 = vadd.f32 %v3942, %v4234
        %4236 = vmatmul.bf16.gmra.mxu0 %v3889
        %v4237 = vpop.f32.mrf.mxu0
        %v4238 = vadd.f32 %v3942, %v4237
        %v4239 = vpop.f32.mrf.mxu0
        %v4240 = vadd.f32 %v3942, %v4239
        %4241 = vmatmul.bf16.gmra.mxu0 %v3891
        %v4242 = vpop.f32.mrf.mxu0
        %v4243 = vadd.f32 %v3942, %v4242
        %v4244 = vpop.f32.mrf.mxu0
        %v4245 = vadd.f32 %v3942, %v4244
        %4246 = vmatmul.bf16.gmra.mxu0 %v3893
        %v4247 = vpop.f32.mrf.mxu0
        %v4248 = vadd.f32 %v3942, %v4247
        %v4249 = vpop.f32.mrf.mxu0
        %v4250 = vadd.f32 %v3942, %v4249
        %4251 = vmatmul.bf16.gmra.mxu0 %v3895
        %v4252 = vpop.f32.mrf.mxu0
        %v4253 = vadd.f32 %v3942, %v4252
        %v4254 = vpop.f32.mrf.mxu0
        %v4255 = vadd.f32 %v3942, %v4254
        %4256 = vmatmul.bf16.gmra.mxu0 %v3897
        %v4257 = vpop.f32.mrf.mxu0
        %v4258 = vadd.f32 %v3942, %v4257
        %v4259 = vpop.f32.mrf.mxu0
        %v4260 = vadd.f32 %v3942, %v4259
        %4261 = vmatmul.bf16.gmra.mxu0 %v3899
        %v4262 = vpop.f32.mrf.mxu0
        %v4263 = vadd.f32 %v3942, %v4262
        %v4264 = vpop.f32.mrf.mxu0
        %v4265 = vadd.f32 %v3942, %v4264
        %4266 = vmatmul.bf16.gmra.mxu0 %v3901
        %v4267 = vpop.f32.mrf.mxu0
        %v4268 = vadd.f32 %v3942, %v4267
        %v4269 = vpop.f32.mrf.mxu0
        %v4270 = vadd.f32 %v3942, %v4269
        %4271 = vmatmul.bf16.gmra.mxu0 %v3903
        %v4272 = vpop.f32.mrf.mxu0
        %v4273 = vadd.f32 %v3942, %v4272
        %v4274 = vpop.f32.mrf.mxu0
        %v4275 = vadd.f32 %v3942, %v4274
        %4276 = vmatmul.bf16.gmra.mxu0 %v3905
        %v4277 = vpop.f32.mrf.mxu0
        %v4278 = vadd.f32 %v3942, %v4277
        %v4279 = vpop.f32.mrf.mxu0
        %v4280 = vadd.f32 %v3942, %v4279
        %4281 = vdwg.mxu0
        %4282 = vmatpush.bf16.msra.mxu0 %v4072
        %4283 = vmatpush.bf16.msra.mxu0 %v4070
        %4284 = vmatpush.bf16.msra.mxu0 %v4068
        %4285 = vmatpush.bf16.msra.mxu0 %v4066
        %4286 = vmatpush.bf16.msra.mxu0 %v4064
        %4287 = vmatpush.bf16.msra.mxu0 %v4062
        %4288 = vmatpush.bf16.msra.mxu0 %v4060
        %4289 = vmatpush.bf16.msra.mxu0 %v4058
        %4290 = vmatmul.bf16.gmra.mxu0 %v3888
        %v4291 = vpop.f32.mrf.mxu0
        %v4292 = vadd.f32 %v4233, %v4291
        %v4293 = vpop.f32.mrf.mxu0
        %v4294 = vadd.f32 %v4235, %v4293
        %4295 = vmatmul.bf16.gmra.mxu0 %v3890
        %v4296 = vpop.f32.mrf.mxu0
        %v4297 = vadd.f32 %v4238, %v4296
        %v4298 = vpop.f32.mrf.mxu0
        %v4299 = vadd.f32 %v4240, %v4298
        %4300 = vmatmul.bf16.gmra.mxu0 %v3892
        %v4301 = vpop.f32.mrf.mxu0
        %v4302 = vadd.f32 %v4243, %v4301
        %v4303 = vpop.f32.mrf.mxu0
        %v4304 = vadd.f32 %v4245, %v4303
        %4305 = vmatmul.bf16.gmra.mxu0 %v3894
        %v4306 = vpop.f32.mrf.mxu0
        %v4307 = vadd.f32 %v4248, %v4306
        %v4308 = vpop.f32.mrf.mxu0
        %v4309 = vadd.f32 %v4250, %v4308
        %4310 = vmatmul.bf16.gmra.mxu0 %v3896
        %v4311 = vpop.f32.mrf.mxu0
        %v4312 = vadd.f32 %v4253, %v4311
        %v4313 = vpop.f32.mrf.mxu0
        %v4314 = vadd.f32 %v4255, %v4313
        %4315 = vmatmul.bf16.gmra.mxu0 %v3898
        %v4316 = vpop.f32.mrf.mxu0
        %v4317 = vadd.f32 %v4258, %v4316
        %v4318 = vpop.f32.mrf.mxu0
        %v4319 = vadd.f32 %v4260, %v4318
        %4320 = vmatmul.bf16.gmra.mxu0 %v3900
        %v4321 = vpop.f32.mrf.mxu0
        %v4322 = vadd.f32 %v4263, %v4321
        %v4323 = vpop.f32.mrf.mxu0
        %v4324 = vadd.f32 %v4265, %v4323
        %4325 = vmatmul.bf16.gmra.mxu0 %v3902
        %v4326 = vpop.f32.mrf.mxu0
        %v4327 = vadd.f32 %v4268, %v4326
        %v4328 = vpop.f32.mrf.mxu0
        %v4329 = vadd.f32 %v4270, %v4328
        %4330 = vmatmul.bf16.gmra.mxu0 %v3904
        %v4331 = vpop.f32.mrf.mxu0
        %v4332 = vadd.f32 %v4273, %v4331
        %v4333 = vpop.f32.mrf.mxu0
        %v4334 = vadd.f32 %v4275, %v4333
        %4335 = vmatmul.bf16.gmra.mxu0 %v3906
        %v4336 = vpop.f32.mrf.mxu0
        %v4337 = vadd.f32 %v4278, %v4336
        %v4338 = vpop.f32.mrf.mxu0
        %v4339 = vadd.f32 %v4280, %v4338
        %4340 = vdwg.mxu0
        %vm4341 = vcmp.gt.f32.partialorder %v4174, 0.0
        %vm4342 = vcmp.gt.f32.partialorder %v4292, 0.0
        %vm4343 = vcmp.gt.f32.partialorder %v4176, 0.0
        %vm4344 = vcmp.gt.f32.partialorder %v4294, 0.0
        %vm4345 = vcmp.gt.f32.partialorder %v4179, 0.0
        %vm4346 = vcmp.gt.f32.partialorder %v4297, 0.0
        %vm4347 = vcmp.gt.f32.partialorder %v4181, 0.0
        %vm4348 = vcmp.gt.f32.partialorder %v4299, 0.0
        %vm4349 = vcmp.gt.f32.partialorder %v4184, 0.0
        %vm4350 = vcmp.gt.f32.partialorder %v4302, 0.0
        %vm4351 = vcmp.gt.f32.partialorder %v4186, 0.0
        %vm4352 = vcmp.gt.f32.partialorder %v4304, 0.0
        %vm4353 = vcmp.gt.f32.partialorder %v4189, 0.0
        %vm4354 = vcmp.gt.f32.partialorder %v4307, 0.0
        %vm4355 = vcmp.gt.f32.partialorder %v4191, 0.0
        %vm4356 = vcmp.gt.f32.partialorder %v4309, 0.0
        %vm4357 = vcmp.gt.f32.partialorder %v4194, 0.0
        %vm4358 = vcmp.gt.f32.partialorder %v4312, 0.0
        %vm4359 = vcmp.gt.f32.partialorder %v4196, 0.0
        %vm4360 = vcmp.gt.f32.partialorder %v4314, 0.0
        %vm4361 = vcmp.gt.f32.partialorder %v4199, 0.0
        %vm4362 = vcmp.gt.f32.partialorder %v4317, 0.0
        %vm4363 = vcmp.gt.f32.partialorder %v4201, 0.0
        %vm4364 = vcmp.gt.f32.partialorder %v4319, 0.0
        %vm4365 = vcmp.gt.f32.partialorder %v4204, 0.0
        %vm4366 = vcmp.gt.f32.partialorder %v4322, 0.0
        %vm4367 = vcmp.gt.f32.partialorder %v4206, 0.0
        %vm4368 = vcmp.gt.f32.partialorder %v4324, 0.0
        %vm4369 = vcmp.gt.f32.partialorder %v4209, 0.0
        %vm4370 = vcmp.gt.f32.partialorder %v4327, 0.0
        %vm4371 = vcmp.gt.f32.partialorder %v4211, 0.0
        %vm4372 = vcmp.gt.f32.partialorder %v4329, 0.0
        %vm4373 = vcmp.gt.f32.partialorder %v4214, 0.0
        %vm4374 = vcmp.gt.f32.partialorder %v4332, 0.0
        %vm4375 = vcmp.gt.f32.partialorder %v4216, 0.0
        %vm4376 = vcmp.gt.f32.partialorder %v4334, 0.0
        %vm4377 = vcmp.gt.f32.partialorder %v4219, 0.0
        %vm4378 = vcmp.gt.f32.partialorder %v4337, 0.0
        %vm4379 = vcmp.gt.f32.partialorder %v4221, 0.0
        %vm4380 = vcmp.gt.f32.partialorder %v4339, 0.0
        %v4381 = vmul.f32 %v4174, 1.442695
        %v4382 = vpow.pop %v4381
        %v4383 = vmul.f32 %v4292, 1.442695
        %v4384 = vpow.pop %v4383
        %v4385 = vmul.f32 %v4176, 1.442695
        %v4386 = vpow.pop %v4385
        %v4387 = vmul.f32 %v4294, 1.442695
        %v4388 = vpow.pop %v4387
        %v4389 = vmul.f32 %v4179, 1.442695
        %v4390 = vpow.pop %v4389
        %v4391 = vmul.f32 %v4297, 1.442695
        %v4392 = vpow.pop %v4391
        %v4393 = vmul.f32 %v4181, 1.442695
        %v4394 = vpow.pop %v4393
        %v4395 = vmul.f32 %v4299, 1.442695
        %v4396 = vpow.pop %v4395
        %v4397 = vmul.f32 %v4184, 1.442695
        %v4398 = vpow.pop %v4397
        %v4399 = vmul.f32 %v4302, 1.442695
        %v4400 = vpow.pop %v4399
        %v4401 = vmul.f32 %v4186, 1.442695
        %v4402 = vpow.pop %v4401
        %v4403 = vmul.f32 %v4304, 1.442695
        %v4404 = vpow.pop %v4403
        %v4405 = vmul.f32 %v4189, 1.442695
        %v4406 = vpow.pop %v4405
        %v4407 = vmul.f32 %v4307, 1.442695
        %v4408 = vpow.pop %v4407
        %v4409 = vmul.f32 %v4191, 1.442695
        %v4410 = vpow.pop %v4409
        %v4411 = vmul.f32 %v4309, 1.442695
        %v4412 = vpow.pop %v4411
        %v4413 = vmul.f32 %v4194, 1.442695
        %v4414 = vpow.pop %v4413
        %v4415 = vmul.f32 %v4312, 1.442695
        %v4416 = vpow.pop %v4415
        %v4417 = vmul.f32 %v4196, 1.442695
        %v4418 = vpow.pop %v4417
        %v4419 = vmul.f32 %v4314, 1.442695
        %v4420 = vpow.pop %v4419
        %v4421 = vmul.f32 %v4199, 1.442695
        %v4422 = vpow.pop %v4421
        %v4423 = vmul.f32 %v4317, 1.442695
        %v4424 = vpow.pop %v4423
        %v4425 = vmul.f32 %v4201, 1.442695
        %v4426 = vpow.pop %v4425
        %v4427 = vmul.f32 %v4319, 1.442695
        %v4428 = vpow.pop %v4427
        %v4429 = vmul.f32 %v4204, 1.442695
        %v4430 = vpow.pop %v4429
        %v4431 = vmul.f32 %v4322, 1.442695
        %v4432 = vpow.pop %v4431
        %v4433 = vmul.f32 %v4206, 1.442695
        %v4434 = vpow.pop %v4433
        %v4435 = vmul.f32 %v4324, 1.442695
        %v4436 = vpow.pop %v4435
        %v4437 = vmul.f32 %v4209, 1.442695
        %v4438 = vpow.pop %v4437
        %v4439 = vmul.f32 %v4327, 1.442695
        %v4440 = vpow.pop %v4439
        %v4441 = vmul.f32 %v4211, 1.442695
        %v4442 = vpow.pop %v4441
        %v4443 = vmul.f32 %v4329, 1.442695
        %v4444 = vpow.pop %v4443
        %v4445 = vmul.f32 %v4214, 1.442695
        %v4446 = vpow.pop %v4445
        %v4447 = vmul.f32 %v4332, 1.442695
        %v4448 = vpow.pop %v4447
        %v4449 = vmul.f32 %v4216, 1.442695
        %v4450 = vpow.pop %v4449
        %v4451 = vmul.f32 %v4334, 1.442695
        %v4452 = vpow.pop %v4451
        %v4453 = vmul.f32 %v4219, 1.442695
        %v4454 = vpow.pop %v4453
        %v4455 = vmul.f32 %v4337, 1.442695
        %v4456 = vpow.pop %v4455
        %v4457 = vmul.f32 %v4221, 1.442695
        %v4458 = vpow.pop %v4457
        %v4459 = vmul.f32 %v4339, 1.442695
        %v4460 = vpow.pop %v4459
        %v4461 = vsub.f32 %v4382, 1.0
        %v4462 = vsub.f32 %v4384, 1.0
        %v4463 = vsub.f32 %v4386, 1.0
        %v4464 = vsub.f32 %v4388, 1.0
        %v4465 = vsub.f32 %v4390, 1.0
        %v4466 = vsub.f32 %v4392, 1.0
        %v4467 = vsub.f32 %v4394, 1.0
        %v4468 = vsub.f32 %v4396, 1.0
        %v4469 = vsub.f32 %v4398, 1.0
        %v4470 = vsub.f32 %v4400, 1.0
        %v4471 = vsub.f32 %v4402, 1.0
        %v4472 = vsub.f32 %v4404, 1.0
        %v4473 = vsub.f32 %v4406, 1.0
        %v4474 = vsub.f32 %v4408, 1.0
        %v4475 = vsub.f32 %v4410, 1.0
        %v4476 = vsub.f32 %v4412, 1.0
        %v4477 = vsub.f32 %v4414, 1.0
        %v4478 = vsub.f32 %v4416, 1.0
        %v4479 = vsub.f32 %v4418, 1.0
        %v4480 = vsub.f32 %v4420, 1.0
        %v4481 = vsub.f32 %v4422, 1.0
        %v4482 = vsub.f32 %v4424, 1.0
        %v4483 = vsub.f32 %v4426, 1.0
        %v4484 = vsub.f32 %v4428, 1.0
        %v4485 = vsub.f32 %v4430, 1.0
        %v4486 = vsub.f32 %v4432, 1.0
        %v4487 = vsub.f32 %v4434, 1.0
        %v4488 = vsub.f32 %v4436, 1.0
        %v4489 = vsub.f32 %v4438, 1.0
        %v4490 = vsub.f32 %v4440, 1.0
        %v4491 = vsub.f32 %v4442, 1.0
        %v4492 = vsub.f32 %v4444, 1.0
        %v4493 = vsub.f32 %v4446, 1.0
        %v4494 = vsub.f32 %v4448, 1.0
        %v4495 = vsub.f32 %v4450, 1.0
        %v4496 = vsub.f32 %v4452, 1.0
        %v4497 = vsub.f32 %v4454, 1.0
        %v4498 = vsub.f32 %v4456, 1.0
        %v4499 = vsub.f32 %v4458, 1.0
        %v4500 = vsub.f32 %v4460, 1.0
        %v4501 = vsel %vm4341, %v4174, %v4461
        %v4502 = vsel %vm4342, %v4292, %v4462
        %v4503 = vsel %vm4343, %v4176, %v4463
        %v4504 = vsel %vm4344, %v4294, %v4464
        %v4505 = vsel %vm4345, %v4179, %v4465
        %v4506 = vsel %vm4346, %v4297, %v4466
        %v4507 = vsel %vm4347, %v4181, %v4467
        %v4508 = vsel %vm4348, %v4299, %v4468
        %v4509 = vsel %vm4349, %v4184, %v4469
        %v4510 = vsel %vm4350, %v4302, %v4470
        %v4511 = vsel %vm4351, %v4186, %v4471
        %v4512 = vsel %vm4352, %v4304, %v4472
        %v4513 = vsel %vm4353, %v4189, %v4473
        %v4514 = vsel %vm4354, %v4307, %v4474
        %v4515 = vsel %vm4355, %v4191, %v4475
        %v4516 = vsel %vm4356, %v4309, %v4476
        %v4517 = vsel %vm4357, %v4194, %v4477
        %v4518 = vsel %vm4358, %v4312, %v4478
        %v4519 = vsel %vm4359, %v4196, %v4479
        %v4520 = vsel %vm4360, %v4314, %v4480
        %v4521 = vsel %vm4361, %v4199, %v4481
        %v4522 = vsel %vm4362, %v4317, %v4482
        %v4523 = vsel %vm4363, %v4201, %v4483
        %v4524 = vsel %vm4364, %v4319, %v4484
        %v4525 = vsel %vm4365, %v4204, %v4485
        %v4526 = vsel %vm4366, %v4322, %v4486
        %v4527 = vsel %vm4367, %v4206, %v4487
        %v4528 = vsel %vm4368, %v4324, %v4488
        %v4529 = vsel %vm4369, %v4209, %v4489
        %v4530 = vsel %vm4370, %v4327, %v4490
        %v4531 = vsel %vm4371, %v4211, %v4491
        %v4532 = vsel %vm4372, %v4329, %v4492
        %v4533 = vsel %vm4373, %v4214, %v4493
        %v4534 = vsel %vm4374, %v4332, %v4494
        %v4535 = vsel %vm4375, %v4216, %v4495
        %v4536 = vsel %vm4376, %v4334, %v4496
        %v4537 = vsel %vm4377, %v4219, %v4497
        %v4538 = vsel %vm4378, %v4337, %v4498
        %v4539 = vsel %vm4379, %v4221, %v4499
        %v4540 = vsel %vm4380, %v4339, %v4500
        %v4541 = vpack.c.bf16 %v4503, %v4501
        %v4542 = vpack.c.bf16 %v4504, %v4502
        %v4543 = vpack.c.bf16 %v4507, %v4505
        %v4544 = vpack.c.bf16 %v4508, %v4506
        %v4545 = vpack.c.bf16 %v4511, %v4509
        %v4546 = vpack.c.bf16 %v4512, %v4510
        %v4547 = vpack.c.bf16 %v4515, %v4513
        %v4548 = vpack.c.bf16 %v4516, %v4514
        %v4549 = vpack.c.bf16 %v4519, %v4517
        %v4550 = vpack.c.bf16 %v4520, %v4518
        %v4551 = vpack.c.bf16 %v4523, %v4521
        %v4552 = vpack.c.bf16 %v4524, %v4522
        %v4553 = vpack.c.bf16 %v4527, %v4525
        %v4554 = vpack.c.bf16 %v4528, %v4526
        %v4555 = vpack.c.bf16 %v4531, %v4529
        %v4556 = vpack.c.bf16 %v4532, %v4530
        %v4557 = vpack.c.bf16 %v4535, %v4533
        %v4558 = vpack.c.bf16 %v4536, %v4534
        %v4559 = vpack.c.bf16 %v4539, %v4537
        %v4560 = vpack.c.bf16 %v4540, %v4538
        %v4561 = vld [vmem:[%s5] sm:$0xf]
        %v4562 = vld [vmem:[%s5 + $0x4] sm:$0xf]
        %v4563 = vld [vmem:[%s5 + $0x8] sm:$0xf]
        %v4564 = vld [vmem:[%s5 + $0xc] sm:$0xf]
        %v4565 = vld [vmem:[%s5 + $0x10] sm:$0xf]
        %v4566 = vld [vmem:[%s5 + $0x14] sm:$0xf]
        %v4567 = vld [vmem:[%s5 + $0x18] sm:$0xf]
        %v4568 = vld [vmem:[%s5 + $0x1c] sm:$0xf]
        %v4569 = vld [vmem:[%s5 + $0x20] sm:$0xf]
        %v4570 = vld [vmem:[%s5 + $0x24] sm:$0xf]
        %v4571 = vld [vmem:[%s5 + $0x28] sm:$0xf]
        %v4572 = vld [vmem:[%s5 + $0x2c] sm:$0xf]
        %v4573 = vld [vmem:[%s5 + $0x30] sm:$0xf]
        %v4574 = vld [vmem:[%s5 + $0x34] sm:$0xf]
        %v4575 = vld [vmem:[%s5 + $0x38] sm:$0xf]
        %v4576 = vld [vmem:[%s5 + $0x3c] sm:$0xf]
        %v4577 = vld [vmem:[%s5 + $0x40] sm:$0xf]
        %v4578 = vld [vmem:[%s5 + $0x44] sm:$0xf]
        %v4579 = vld [vmem:[%s5 + $0x48] sm:$0xf]
        %v4580 = vld [vmem:[%s5 + $0x4c] sm:$0xf]
        %v4581 = vld [vmem:[%s5 + $0x50] sm:$0xf]
        %v4582 = vld [vmem:[%s5 + $0x54] sm:$0xf]
        %v4583 = vld [vmem:[%s5 + $0x58] sm:$0xf]
        %v4584 = vld [vmem:[%s5 + $0x5c] sm:$0xf]
        %v4585 = vld [vmem:[%s5 + $0x60] sm:$0xf]
        %v4586 = vld [vmem:[%s5 + $0x64] sm:$0xf]
        %v4587 = vld [vmem:[%s5 + $0x68] sm:$0xf]
        %v4588 = vld [vmem:[%s5 + $0x6c] sm:$0xf]
        %v4589 = vld [vmem:[%s5 + $0x70] sm:$0xf]
        %v4590 = vld [vmem:[%s5 + $0x74] sm:$0xf]
        %v4591 = vld [vmem:[%s5 + $0x78] sm:$0xf]
        %v4592 = vld [vmem:[%s5 + $0x7c] sm:$0xf]
        %v4593 = vld [vmem:[%s6] sm:$0x1]
        %v4595 = vperm.slane %v4593, 0
        %v4629 = vunpack.c.l.b16 %v4561
        %v4630 = vunpack.c.l.b16 %v4562
        %v4631 = vunpack.c.l.b16 %v4563
        %v4632 = vunpack.c.l.b16 %v4564
        %v4633 = vunpack.c.l.b16 %v4565
        %v4634 = vunpack.c.l.b16 %v4566
        %v4635 = vunpack.c.l.b16 %v4567
        %v4636 = vunpack.c.l.b16 %v4568
        %v4637 = vunpack.c.l.b16 %v4569
        %v4638 = vunpack.c.l.b16 %v4570
        %v4639 = vunpack.c.l.b16 %v4571
        %v4640 = vunpack.c.l.b16 %v4572
        %v4641 = vunpack.c.l.b16 %v4573
        %v4642 = vunpack.c.l.b16 %v4574
        %v4643 = vunpack.c.l.b16 %v4575
        %v4644 = vunpack.c.l.b16 %v4576
        %v4645 = vunpack.c.l.b16 %v4577
        %v4646 = vunpack.c.l.b16 %v4578
        %v4647 = vunpack.c.l.b16 %v4579
        %v4648 = vunpack.c.l.b16 %v4580
        %v4649 = vunpack.c.l.b16 %v4581
        %v4650 = vunpack.c.l.b16 %v4582
        %v4651 = vunpack.c.l.b16 %v4583
        %v4652 = vunpack.c.l.b16 %v4584
        %v4653 = vunpack.c.l.b16 %v4585
        %v4654 = vunpack.c.l.b16 %v4586
        %v4655 = vunpack.c.l.b16 %v4587
        %v4656 = vunpack.c.l.b16 %v4588
        %v4657 = vunpack.c.l.b16 %v4589
        %v4658 = vunpack.c.l.b16 %v4590
        %v4659 = vunpack.c.l.b16 %v4591
        %v4660 = vunpack.c.l.b16 %v4592
        %v4661 = vpack.c.b16 %v4630, %v4629
        %v4662 = vpack.c.b16 %v4632, %v4631
        %v4663 = vpack.c.b16 %v4634, %v4633
        %v4664 = vpack.c.b16 %v4636, %v4635
        %v4665 = vpack.c.b16 %v4638, %v4637
        %v4666 = vpack.c.b16 %v4640, %v4639
        %v4667 = vpack.c.b16 %v4642, %v4641
        %v4668 = vpack.c.b16 %v4644, %v4643
        %v4669 = vpack.c.b16 %v4646, %v4645
        %v4670 = vpack.c.b16 %v4648, %v4647
        %v4671 = vpack.c.b16 %v4650, %v4649
        %v4672 = vpack.c.b16 %v4652, %v4651
        %v4673 = vpack.c.b16 %v4654, %v4653
        %v4674 = vpack.c.b16 %v4656, %v4655
        %v4675 = vpack.c.b16 %v4658, %v4657
        %v4676 = vpack.c.b16 %v4660, %v4659
        %4693 = vmatpush.bf16.msra.mxu0 %v4668
        %4694 = vmatpush.bf16.msra.mxu0 %v4667
        %4695 = vmatpush.bf16.msra.mxu0 %v4666
        %4696 = vmatpush.bf16.msra.mxu0 %v4665
        %4697 = vmatpush.bf16.msra.mxu0 %v4664
        %4698 = vmatpush.bf16.msra.mxu0 %v4663
        %4699 = vmatpush.bf16.msra.mxu0 %v4662
        %4700 = vmatpush.bf16.msra.mxu0 %v4661
        %4701 = vmatmul.bf16.gmra.mxu0 %v4541
        %v4702 = vpop.f32.mrf.mxu0
        %v4703 = vadd.f32 %v4595, %v4702
        %v4704 = vpop.f32.mrf.mxu0
        %v4705 = vadd.f32 %v4595, %v4704
        %4706 = vmatmul.bf16.gmra.mxu0 %v4543
        %v4707 = vpop.f32.mrf.mxu0
        %v4708 = vadd.f32 %v4595, %v4707
        %v4709 = vpop.f32.mrf.mxu0
        %v4710 = vadd.f32 %v4595, %v4709
        %4711 = vmatmul.bf16.gmra.mxu0 %v4545
        %v4712 = vpop.f32.mrf.mxu0
        %v4713 = vadd.f32 %v4595, %v4712
        %v4714 = vpop.f32.mrf.mxu0
        %v4715 = vadd.f32 %v4595, %v4714
        %4716 = vmatmul.bf16.gmra.mxu0 %v4547
        %v4717 = vpop.f32.mrf.mxu0
        %v4718 = vadd.f32 %v4595, %v4717
        %v4719 = vpop.f32.mrf.mxu0
        %v4720 = vadd.f32 %v4595, %v4719
        %4721 = vmatmul.bf16.gmra.mxu0 %v4549
        %v4722 = vpop.f32.mrf.mxu0
        %v4723 = vadd.f32 %v4595, %v4722
        %v4724 = vpop.f32.mrf.mxu0
        %v4725 = vadd.f32 %v4595, %v4724
        %4726 = vmatmul.bf16.gmra.mxu0 %v4551
        %v4727 = vpop.f32.mrf.mxu0
        %v4728 = vadd.f32 %v4595, %v4727
        %v4729 = vpop.f32.mrf.mxu0
        %v4730 = vadd.f32 %v4595, %v4729
        %4731 = vmatmul.bf16.gmra.mxu0 %v4553
        %v4732 = vpop.f32.mrf.mxu0
        %v4733 = vadd.f32 %v4595, %v4732
        %v4734 = vpop.f32.mrf.mxu0
        %v4735 = vadd.f32 %v4595, %v4734
        %4736 = vmatmul.bf16.gmra.mxu0 %v4555
        %v4737 = vpop.f32.mrf.mxu0
        %v4738 = vadd.f32 %v4595, %v4737
        %v4739 = vpop.f32.mrf.mxu0
        %v4740 = vadd.f32 %v4595, %v4739
        %4741 = vmatmul.bf16.gmra.mxu0 %v4557
        %v4742 = vpop.f32.mrf.mxu0
        %v4743 = vadd.f32 %v4595, %v4742
        %v4744 = vpop.f32.mrf.mxu0
        %v4745 = vadd.f32 %v4595, %v4744
        %4746 = vmatmul.bf16.gmra.mxu0 %v4559
        %v4747 = vpop.f32.mrf.mxu0
        %v4748 = vadd.f32 %v4595, %v4747
        %v4749 = vpop.f32.mrf.mxu0
        %v4750 = vadd.f32 %v4595, %v4749
        %4751 = vdwg.mxu0
        %4752 = vmatpush.bf16.msra.mxu0 %v4676
        %4753 = vmatpush.bf16.msra.mxu0 %v4675
        %4754 = vmatpush.bf16.msra.mxu0 %v4674
        %4755 = vmatpush.bf16.msra.mxu0 %v4673
        %4756 = vmatpush.bf16.msra.mxu0 %v4672
        %4757 = vmatpush.bf16.msra.mxu0 %v4671
        %4758 = vmatpush.bf16.msra.mxu0 %v4670
        %4759 = vmatpush.bf16.msra.mxu0 %v4669
        %4760 = vmatmul.bf16.gmra.mxu0 %v4542
        %v4761 = vpop.f32.mrf.mxu0
        %v4762 = vadd.f32 %v4703, %v4761
        %v4763 = vpop.f32.mrf.mxu0
        %v4764 = vadd.f32 %v4705, %v4763
        %4765 = vmatmul.bf16.gmra.mxu0 %v4544
        %v4766 = vpop.f32.mrf.mxu0
        %v4767 = vadd.f32 %v4708, %v4766
        %v4768 = vpop.f32.mrf.mxu0
        %v4769 = vadd.f32 %v4710, %v4768
        %4770 = vmatmul.bf16.gmra.mxu0 %v4546
        %v4771 = vpop.f32.mrf.mxu0
        %v4772 = vadd.f32 %v4713, %v4771
        %v4773 = vpop.f32.mrf.mxu0
        %v4774 = vadd.f32 %v4715, %v4773
        %4775 = vmatmul.bf16.gmra.mxu0 %v4548
        %v4776 = vpop.f32.mrf.mxu0
        %v4777 = vadd.f32 %v4718, %v4776
        %v4778 = vpop.f32.mrf.mxu0
        %v4779 = vadd.f32 %v4720, %v4778
        %4780 = vmatmul.bf16.gmra.mxu0 %v4550
        %v4781 = vpop.f32.mrf.mxu0
        %v4782 = vadd.f32 %v4723, %v4781
        %v4783 = vpop.f32.mrf.mxu0
        %v4784 = vadd.f32 %v4725, %v4783
        %4785 = vmatmul.bf16.gmra.mxu0 %v4552
        %v4786 = vpop.f32.mrf.mxu0
        %v4787 = vadd.f32 %v4728, %v4786
        %v4788 = vpop.f32.mrf.mxu0
        %v4789 = vadd.f32 %v4730, %v4788
        %4790 = vmatmul.bf16.gmra.mxu0 %v4554
        %v4791 = vpop.f32.mrf.mxu0
        %v4792 = vadd.f32 %v4733, %v4791
        %v4793 = vpop.f32.mrf.mxu0
        %v4794 = vadd.f32 %v4735, %v4793
        %4795 = vmatmul.bf16.gmra.mxu0 %v4556
        %v4796 = vpop.f32.mrf.mxu0
        %v4797 = vadd.f32 %v4738, %v4796
        %v4798 = vpop.f32.mrf.mxu0
        %v4799 = vadd.f32 %v4740, %v4798
        %4800 = vmatmul.bf16.gmra.mxu0 %v4558
        %v4801 = vpop.f32.mrf.mxu0
        %v4802 = vadd.f32 %v4743, %v4801
        %v4803 = vpop.f32.mrf.mxu0
        %v4804 = vadd.f32 %v4745, %v4803
        %4805 = vmatmul.bf16.gmra.mxu0 %v4560
        %v4806 = vpop.f32.mrf.mxu0
        %v4807 = vadd.f32 %v4748, %v4806
        %v4808 = vpop.f32.mrf.mxu0
        %v4809 = vadd.f32 %v4750, %v4808
        %4810 = vdwg.mxu0
        %vm4811 = vcmp.gt.f32.partialorder %v4762, 0.0
        %vm4812 = vcmp.gt.f32.partialorder %v4764, 0.0
        %vm4813 = vcmp.gt.f32.partialorder %v4767, 0.0
        %vm4814 = vcmp.gt.f32.partialorder %v4769, 0.0
        %vm4815 = vcmp.gt.f32.partialorder %v4772, 0.0
        %vm4816 = vcmp.gt.f32.partialorder %v4774, 0.0
        %vm4817 = vcmp.gt.f32.partialorder %v4777, 0.0
        %vm4818 = vcmp.gt.f32.partialorder %v4779, 0.0
        %vm4819 = vcmp.gt.f32.partialorder %v4782, 0.0
        %vm4820 = vcmp.gt.f32.partialorder %v4784, 0.0
        %vm4821 = vcmp.gt.f32.partialorder %v4787, 0.0
        %vm4822 = vcmp.gt.f32.partialorder %v4789, 0.0
        %vm4823 = vcmp.gt.f32.partialorder %v4792, 0.0
        %vm4824 = vcmp.gt.f32.partialorder %v4794, 0.0
        %vm4825 = vcmp.gt.f32.partialorder %v4797, 0.0
        %vm4826 = vcmp.gt.f32.partialorder %v4799, 0.0
        %vm4827 = vcmp.gt.f32.partialorder %v4802, 0.0
        %vm4828 = vcmp.gt.f32.partialorder %v4804, 0.0
        %vm4829 = vcmp.gt.f32.partialorder %v4807, 0.0
        %vm4830 = vcmp.gt.f32.partialorder %v4809, 0.0
        %v4831 = vmul.f32 %v4762, 1.442695
        %v4832 = vpow.pop %v4831
        %v4833 = vmul.f32 %v4764, 1.442695
        %v4834 = vpow.pop %v4833
        %v4835 = vmul.f32 %v4767, 1.442695
        %v4836 = vpow.pop %v4835
        %v4837 = vmul.f32 %v4769, 1.442695
        %v4838 = vpow.pop %v4837
        %v4839 = vmul.f32 %v4772, 1.442695
        %v4840 = vpow.pop %v4839
        %v4841 = vmul.f32 %v4774, 1.442695
        %v4842 = vpow.pop %v4841
        %v4843 = vmul.f32 %v4777, 1.442695
        %v4844 = vpow.pop %v4843
        %v4845 = vmul.f32 %v4779, 1.442695
        %v4846 = vpow.pop %v4845
        %v4847 = vmul.f32 %v4782, 1.442695
        %v4848 = vpow.pop %v4847
        %v4849 = vmul.f32 %v4784, 1.442695
        %v4850 = vpow.pop %v4849
        %v4851 = vmul.f32 %v4787, 1.442695
        %v4852 = vpow.pop %v4851
        %v4853 = vmul.f32 %v4789, 1.442695
        %v4854 = vpow.pop %v4853
        %v4855 = vmul.f32 %v4792, 1.442695
        %v4856 = vpow.pop %v4855
        %v4857 = vmul.f32 %v4794, 1.442695
        %v4858 = vpow.pop %v4857
        %v4859 = vmul.f32 %v4797, 1.442695
        %v4860 = vpow.pop %v4859
        %v4861 = vmul.f32 %v4799, 1.442695
        %v4862 = vpow.pop %v4861
        %v4863 = vmul.f32 %v4802, 1.442695
        %v4864 = vpow.pop %v4863
        %v4865 = vmul.f32 %v4804, 1.442695
        %v4866 = vpow.pop %v4865
        %v4867 = vmul.f32 %v4807, 1.442695
        %v4868 = vpow.pop %v4867
        %v4869 = vmul.f32 %v4809, 1.442695
        %v4870 = vpow.pop %v4869
        %v4871 = vsub.f32 %v4832, 1.0
        %v4872 = vsub.f32 %v4834, 1.0
        %v4873 = vsub.f32 %v4836, 1.0
        %v4874 = vsub.f32 %v4838, 1.0
        %v4875 = vsub.f32 %v4840, 1.0
        %v4876 = vsub.f32 %v4842, 1.0
        %v4877 = vsub.f32 %v4844, 1.0
        %v4878 = vsub.f32 %v4846, 1.0
        %v4879 = vsub.f32 %v4848, 1.0
        %v4880 = vsub.f32 %v4850, 1.0
        %v4881 = vsub.f32 %v4852, 1.0
        %v4882 = vsub.f32 %v4854, 1.0
        %v4883 = vsub.f32 %v4856, 1.0
        %v4884 = vsub.f32 %v4858, 1.0
        %v4885 = vsub.f32 %v4860, 1.0
        %v4886 = vsub.f32 %v4862, 1.0
        %v4887 = vsub.f32 %v4864, 1.0
        %v4888 = vsub.f32 %v4866, 1.0
        %v4889 = vsub.f32 %v4868, 1.0
        %v4890 = vsub.f32 %v4870, 1.0
        %v4891 = vsel %vm4811, %v4762, %v4871
        %v4892 = vsel %vm4812, %v4764, %v4872
        %v4893 = vsel %vm4813, %v4767, %v4873
        %v4894 = vsel %vm4814, %v4769, %v4874
        %v4895 = vsel %vm4815, %v4772, %v4875
        %v4896 = vsel %vm4816, %v4774, %v4876
        %v4897 = vsel %vm4817, %v4777, %v4877
        %v4898 = vsel %vm4818, %v4779, %v4878
        %v4899 = vsel %vm4819, %v4782, %v4879
        %v4900 = vsel %vm4820, %v4784, %v4880
        %v4901 = vsel %vm4821, %v4787, %v4881
        %v4902 = vsel %vm4822, %v4789, %v4882
        %v4903 = vsel %vm4823, %v4792, %v4883
        %v4904 = vsel %vm4824, %v4794, %v4884
        %v4905 = vsel %vm4825, %v4797, %v4885
        %v4906 = vsel %vm4826, %v4799, %v4886
        %v4907 = vsel %vm4827, %v4802, %v4887
        %v4908 = vsel %vm4828, %v4804, %v4888
        %v4909 = vsel %vm4829, %v4807, %v4889
        %v4910 = vsel %vm4830, %v4809, %v4890
        %v4911 = vld [vmem:[%s7] sm:$0x1]
        %v4913 = vperm.slane %v4911, 0
        %v4915 = vmul.f32 %v4891, %v4913
        %v4916 = vmul.f32 %v4892, %v4913
        %v4917 = vmul.f32 %v4893, %v4913
        %v4918 = vmul.f32 %v4894, %v4913
        %v4919 = vmul.f32 %v4895, %v4913
        %v4920 = vmul.f32 %v4896, %v4913
        %v4921 = vmul.f32 %v4897, %v4913
        %v4922 = vmul.f32 %v4898, %v4913
        %v4923 = vmul.f32 %v4899, %v4913
        %v4924 = vmul.f32 %v4900, %v4913
        %v4925 = vmul.f32 %v4901, %v4913
        %v4926 = vmul.f32 %v4902, %v4913
        %v4927 = vmul.f32 %v4903, %v4913
        %v4928 = vmul.f32 %v4904, %v4913
        %v4929 = vmul.f32 %v4905, %v4913
        %v4930 = vmul.f32 %v4906, %v4913
        %v4931 = vmul.f32 %v4907, %v4913
        %v4932 = vmul.f32 %v4908, %v4913
        %v4933 = vmul.f32 %v4909, %v4913
        %v4934 = vmul.f32 %v4910, %v4913
        %vm4935 = vcmask 523264
        %v4936 = vsel %vm4935, %v4915, 0.0
        %4937 = vadd.xlane.f32.xlu0 %v4936
        %v4938 = vpop.xlane.xlu0 %4937
        %v4939 = vsel %vm4935, %v4916, 0.0
        %4940 = vadd.xlane.f32.xlu0 %v4939
        %v4941 = vpop.xlane.xlu0 %4940
        %v4942 = vsel %vm4935, %v4917, 0.0
        %4943 = vadd.xlane.f32.xlu0 %v4942
        %v4944 = vpop.xlane.xlu0 %4943
        %v4945 = vsel %vm4935, %v4918, 0.0
        %4946 = vadd.xlane.f32.xlu0 %v4945
        %v4947 = vpop.xlane.xlu0 %4946
        %v4948 = vsel %vm4935, %v4919, 0.0
        %4949 = vadd.xlane.f32.xlu0 %v4948
        %v4950 = vpop.xlane.xlu0 %4949
        %v4951 = vsel %vm4935, %v4920, 0.0
        %4952 = vadd.xlane.f32.xlu0 %v4951
        %v4953 = vpop.xlane.xlu0 %4952
        %v4954 = vsel %vm4935, %v4921, 0.0
        %4955 = vadd.xlane.f32.xlu0 %v4954
        %v4956 = vpop.xlane.xlu0 %4955
        %v4957 = vsel %vm4935, %v4922, 0.0
        %4958 = vadd.xlane.f32.xlu0 %v4957
        %v4959 = vpop.xlane.xlu0 %4958
        %v4960 = vsel %vm4935, %v4923, 0.0
        %4961 = vadd.xlane.f32.xlu0 %v4960
        %v4962 = vpop.xlane.xlu0 %4961
        %v4963 = vsel %vm4935, %v4924, 0.0
        %4964 = vadd.xlane.f32.xlu0 %v4963
        %v4965 = vpop.xlane.xlu0 %4964
        %v4966 = vsel %vm4935, %v4925, 0.0
        %4967 = vadd.xlane.f32.xlu0 %v4966
        %v4968 = vpop.xlane.xlu0 %4967
        %v4969 = vsel %vm4935, %v4926, 0.0
        %4970 = vadd.xlane.f32.xlu0 %v4969
        %v4971 = vpop.xlane.xlu0 %4970
        %v4972 = vsel %vm4935, %v4927, 0.0
        %4973 = vadd.xlane.f32.xlu0 %v4972
        %v4974 = vpop.xlane.xlu0 %4973
        %v4975 = vsel %vm4935, %v4928, 0.0
        %4976 = vadd.xlane.f32.xlu0 %v4975
        %v4977 = vpop.xlane.xlu0 %4976
        %v4978 = vsel %vm4935, %v4929, 0.0
        %4979 = vadd.xlane.f32.xlu0 %v4978
        %v4980 = vpop.xlane.xlu0 %4979
        %v4981 = vsel %vm4935, %v4930, 0.0
        %4982 = vadd.xlane.f32.xlu0 %v4981
        %v4983 = vpop.xlane.xlu0 %4982
        %v4984 = vsel %vm4935, %v4931, 0.0
        %4985 = vadd.xlane.f32.xlu0 %v4984
        %v4986 = vpop.xlane.xlu0 %4985
        %v4987 = vsel %vm4935, %v4932, 0.0
        %4988 = vadd.xlane.f32.xlu0 %v4987
        %v4989 = vpop.xlane.xlu0 %4988
        %v4990 = vsel %vm4935, %v4933, 0.0
        %4991 = vadd.xlane.f32.xlu0 %v4990
        %v4992 = vpop.xlane.xlu0 %4991
        %v4993 = vsel %vm4935, %v4934, 0.0
        %4994 = vadd.xlane.f32.xlu0 %v4993
        %v4995 = vpop.xlane.xlu0 %4994
        %v4996 = vld [vmem:[#allocation2] sm:$0x1]
        %v4998 = vperm.slane %v4996, 0
        %v5000 = vadd.f32 %v4938, %v4998
        %v5001 = vadd.f32 %v4941, %v4998
        %v5002 = vadd.f32 %v4944, %v4998
        %v5003 = vadd.f32 %v4947, %v4998
        %v5004 = vadd.f32 %v4950, %v4998
        %v5005 = vadd.f32 %v4953, %v4998
        %v5006 = vadd.f32 %v4956, %v4998
        %v5007 = vadd.f32 %v4959, %v4998
        %v5008 = vadd.f32 %v4962, %v4998
        %v5009 = vadd.f32 %v4965, %v4998
        %v5010 = vadd.f32 %v4968, %v4998
        %v5011 = vadd.f32 %v4971, %v4998
        %v5012 = vadd.f32 %v4974, %v4998
        %v5013 = vadd.f32 %v4977, %v4998
        %v5014 = vadd.f32 %v4980, %v4998
        %v5015 = vadd.f32 %v4983, %v4998
        %v5016 = vadd.f32 %v4986, %v4998
        %v5017 = vadd.f32 %v4989, %v4998
        %v5018 = vadd.f32 %v4992, %v4998
        %v5019 = vadd.f32 %v4995, %v4998
        %v5020 = vsub.f32 0.0, %v5000
        %v5021 = vsub.f32 0.0, %v5001
        %v5022 = vsub.f32 0.0, %v5002
        %v5023 = vsub.f32 0.0, %v5003
        %v5024 = vsub.f32 0.0, %v5004
        %v5025 = vsub.f32 0.0, %v5005
        %v5026 = vsub.f32 0.0, %v5006
        %v5027 = vsub.f32 0.0, %v5007
        %v5028 = vsub.f32 0.0, %v5008
        %v5029 = vsub.f32 0.0, %v5009
        %v5030 = vsub.f32 0.0, %v5010
        %v5031 = vsub.f32 0.0, %v5011
        %v5032 = vsub.f32 0.0, %v5012
        %v5033 = vsub.f32 0.0, %v5013
        %v5034 = vsub.f32 0.0, %v5014
        %v5035 = vsub.f32 0.0, %v5015
        %v5036 = vsub.f32 0.0, %v5016
        %v5037 = vsub.f32 0.0, %v5017
        %v5038 = vsub.f32 0.0, %v5018
        %v5039 = vsub.f32 0.0, %v5019
        %v5040 = vmul.f32 %v5020, 1.442695
        %v5041 = vpow.pop %v5040
        %v5042 = vmul.f32 %v5021, 1.442695
        %v5043 = vpow.pop %v5042
        %v5044 = vmul.f32 %v5022, 1.442695
        %v5045 = vpow.pop %v5044
        %v5046 = vmul.f32 %v5023, 1.442695
        %v5047 = vpow.pop %v5046
        %v5048 = vmul.f32 %v5024, 1.442695
        %v5049 = vpow.pop %v5048
        %v5050 = vmul.f32 %v5025, 1.442695
        %v5051 = vpow.pop %v5050
        %v5052 = vmul.f32 %v5026, 1.442695
        %v5053 = vpow.pop %v5052
        %v5054 = vmul.f32 %v5027, 1.442695
        %v5055 = vpow.pop %v5054
        %v5056 = vmul.f32 %v5028, 1.442695
        %v5057 = vpow.pop %v5056
        %v5058 = vmul.f32 %v5029, 1.442695
        %v5059 = vpow.pop %v5058
        %v5060 = vmul.f32 %v5030, 1.442695
        %v5061 = vpow.pop %v5060
        %v5062 = vmul.f32 %v5031, 1.442695
        %v5063 = vpow.pop %v5062
        %v5064 = vmul.f32 %v5032, 1.442695
        %v5065 = vpow.pop %v5064
        %v5066 = vmul.f32 %v5033, 1.442695
        %v5067 = vpow.pop %v5066
        %v5068 = vmul.f32 %v5034, 1.442695
        %v5069 = vpow.pop %v5068
        %v5070 = vmul.f32 %v5035, 1.442695
        %v5071 = vpow.pop %v5070
        %v5072 = vmul.f32 %v5036, 1.442695
        %v5073 = vpow.pop %v5072
        %v5074 = vmul.f32 %v5037, 1.442695
        %v5075 = vpow.pop %v5074
        %v5076 = vmul.f32 %v5038, 1.442695
        %v5077 = vpow.pop %v5076
        %v5078 = vmul.f32 %v5039, 1.442695
        %v5079 = vpow.pop %v5078
        %v5080 = vadd.f32 %v5041, 1.0
        %v5081 = vadd.f32 %v5043, 1.0
        %v5082 = vadd.f32 %v5045, 1.0
        %v5083 = vadd.f32 %v5047, 1.0
        %v5084 = vadd.f32 %v5049, 1.0
        %v5085 = vadd.f32 %v5051, 1.0
        %v5086 = vadd.f32 %v5053, 1.0
        %v5087 = vadd.f32 %v5055, 1.0
        %v5088 = vadd.f32 %v5057, 1.0
        %v5089 = vadd.f32 %v5059, 1.0
        %v5090 = vadd.f32 %v5061, 1.0
        %v5091 = vadd.f32 %v5063, 1.0
        %v5092 = vadd.f32 %v5065, 1.0
        %v5093 = vadd.f32 %v5067, 1.0
        %v5094 = vadd.f32 %v5069, 1.0
        %v5095 = vadd.f32 %v5071, 1.0
        %v5096 = vadd.f32 %v5073, 1.0
        %v5097 = vadd.f32 %v5075, 1.0
        %v5098 = vadd.f32 %v5077, 1.0
        %v5099 = vadd.f32 %v5079, 1.0
        %v5100 = vrcp.pop %v5080
        %v5101 = vmul.f32 %v5080, %v5100
        %v5102 = vsub.f32 1.0, %v5101
        %v5103 = vmul.f32 %v5100, %v5102
        %v5104 = vadd.f32 %v5100, %v5103
        %vm5105 = vweird.f32 %v5080
        %vm5106 = vweird.f32 %v5100
        %vm5107 = vmor %vm5105, %vm5106
        %v5108 = vsel %vm5107, %v5100, %v5104
        %v5109 = vand.u32 2147483647, %v5080
        %vm5110 = vcmp.eq.f32.partialorder %v5109, 8.507059e+37
        %v5111 = vand.u32 %v5080, 2147483648
        %v5112 = vor.u32 1.1754944e-38, %v5111
        %v5113 = vsel %vm5110, %v5112, %v5108
        %v5114 = vmul.f32 1.0, %v5113
        %v5115 = vrcp.pop %v5081
        %v5116 = vmul.f32 %v5081, %v5115
        %v5117 = vsub.f32 1.0, %v5116
        %v5118 = vmul.f32 %v5115, %v5117
        %v5119 = vadd.f32 %v5115, %v5118
        %vm5120 = vweird.f32 %v5081
        %vm5121 = vweird.f32 %v5115
        %vm5122 = vmor %vm5120, %vm5121
        %v5123 = vsel %vm5122, %v5115, %v5119
        %v5124 = vand.u32 2147483647, %v5081
        %vm5125 = vcmp.eq.f32.partialorder %v5124, 8.507059e+37
        %v5126 = vand.u32 %v5081, 2147483648
        %v5127 = vor.u32 1.1754944e-38, %v5126
        %v5128 = vsel %vm5125, %v5127, %v5123
        %v5129 = vmul.f32 1.0, %v5128
        %v5130 = vrcp.pop %v5082
        %v5131 = vmul.f32 %v5082, %v5130
        %v5132 = vsub.f32 1.0, %v5131
        %v5133 = vmul.f32 %v5130, %v5132
        %v5134 = vadd.f32 %v5130, %v5133
        %vm5135 = vweird.f32 %v5082
        %vm5136 = vweird.f32 %v5130
        %vm5137 = vmor %vm5135, %vm5136
        %v5138 = vsel %vm5137, %v5130, %v5134
        %v5139 = vand.u32 2147483647, %v5082
        %vm5140 = vcmp.eq.f32.partialorder %v5139, 8.507059e+37
        %v5141 = vand.u32 %v5082, 2147483648
        %v5142 = vor.u32 1.1754944e-38, %v5141
        %v5143 = vsel %vm5140, %v5142, %v5138
        %v5144 = vmul.f32 1.0, %v5143
        %v5145 = vrcp.pop %v5083
        %v5146 = vmul.f32 %v5083, %v5145
        %v5147 = vsub.f32 1.0, %v5146
        %v5148 = vmul.f32 %v5145, %v5147
        %v5149 = vadd.f32 %v5145, %v5148
        %vm5150 = vweird.f32 %v5083
        %vm5151 = vweird.f32 %v5145
        %vm5152 = vmor %vm5150, %vm5151
        %v5153 = vsel %vm5152, %v5145, %v5149
        %v5154 = vand.u32 2147483647, %v5083
        %vm5155 = vcmp.eq.f32.partialorder %v5154, 8.507059e+37
        %v5156 = vand.u32 %v5083, 2147483648
        %v5157 = vor.u32 1.1754944e-38, %v5156
        %v5158 = vsel %vm5155, %v5157, %v5153
        %v5159 = vmul.f32 1.0, %v5158
        %v5160 = vrcp.pop %v5084
        %v5161 = vmul.f32 %v5084, %v5160
        %v5162 = vsub.f32 1.0, %v5161
        %v5163 = vmul.f32 %v5160, %v5162
        %v5164 = vadd.f32 %v5160, %v5163
        %vm5165 = vweird.f32 %v5084
        %vm5166 = vweird.f32 %v5160
        %vm5167 = vmor %vm5165, %vm5166
        %v5168 = vsel %vm5167, %v5160, %v5164
        %v5169 = vand.u32 2147483647, %v5084
        %vm5170 = vcmp.eq.f32.partialorder %v5169, 8.507059e+37
        %v5171 = vand.u32 %v5084, 2147483648
        %v5172 = vor.u32 1.1754944e-38, %v5171
        %v5173 = vsel %vm5170, %v5172, %v5168
        %v5174 = vmul.f32 1.0, %v5173
        %v5175 = vrcp.pop %v5085
        %v5176 = vmul.f32 %v5085, %v5175
        %v5177 = vsub.f32 1.0, %v5176
        %v5178 = vmul.f32 %v5175, %v5177
        %v5179 = vadd.f32 %v5175, %v5178
        %vm5180 = vweird.f32 %v5085
        %vm5181 = vweird.f32 %v5175
        %vm5182 = vmor %vm5180, %vm5181
        %v5183 = vsel %vm5182, %v5175, %v5179
        %v5184 = vand.u32 2147483647, %v5085
        %vm5185 = vcmp.eq.f32.partialorder %v5184, 8.507059e+37
        %v5186 = vand.u32 %v5085, 2147483648
        %v5187 = vor.u32 1.1754944e-38, %v5186
        %v5188 = vsel %vm5185, %v5187, %v5183
        %v5189 = vmul.f32 1.0, %v5188
        %v5190 = vrcp.pop %v5086
        %v5191 = vmul.f32 %v5086, %v5190
        %v5192 = vsub.f32 1.0, %v5191
        %v5193 = vmul.f32 %v5190, %v5192
        %v5194 = vadd.f32 %v5190, %v5193
        %vm5195 = vweird.f32 %v5086
        %vm5196 = vweird.f32 %v5190
        %vm5197 = vmor %vm5195, %vm5196
        %v5198 = vsel %vm5197, %v5190, %v5194
        %v5199 = vand.u32 2147483647, %v5086
        %vm5200 = vcmp.eq.f32.partialorder %v5199, 8.507059e+37
        %v5201 = vand.u32 %v5086, 2147483648
        %v5202 = vor.u32 1.1754944e-38, %v5201
        %v5203 = vsel %vm5200, %v5202, %v5198
        %v5204 = vmul.f32 1.0, %v5203
        %v5205 = vrcp.pop %v5087
        %v5206 = vmul.f32 %v5087, %v5205
        %v5207 = vsub.f32 1.0, %v5206
        %v5208 = vmul.f32 %v5205, %v5207
        %v5209 = vadd.f32 %v5205, %v5208
        %vm5210 = vweird.f32 %v5087
        %vm5211 = vweird.f32 %v5205
        %vm5212 = vmor %vm5210, %vm5211
        %v5213 = vsel %vm5212, %v5205, %v5209
        %v5214 = vand.u32 2147483647, %v5087
        %vm5215 = vcmp.eq.f32.partialorder %v5214, 8.507059e+37
        %v5216 = vand.u32 %v5087, 2147483648
        %v5217 = vor.u32 1.1754944e-38, %v5216
        %v5218 = vsel %vm5215, %v5217, %v5213
        %v5219 = vmul.f32 1.0, %v5218
        %v5220 = vrcp.pop %v5088
        %v5221 = vmul.f32 %v5088, %v5220
        %v5222 = vsub.f32 1.0, %v5221
        %v5223 = vmul.f32 %v5220, %v5222
        %v5224 = vadd.f32 %v5220, %v5223
        %vm5225 = vweird.f32 %v5088
        %vm5226 = vweird.f32 %v5220
        %vm5227 = vmor %vm5225, %vm5226
        %v5228 = vsel %vm5227, %v5220, %v5224
        %v5229 = vand.u32 2147483647, %v5088
        %vm5230 = vcmp.eq.f32.partialorder %v5229, 8.507059e+37
        %v5231 = vand.u32 %v5088, 2147483648
        %v5232 = vor.u32 1.1754944e-38, %v5231
        %v5233 = vsel %vm5230, %v5232, %v5228
        %v5234 = vmul.f32 1.0, %v5233
        %v5235 = vrcp.pop %v5089
        %v5236 = vmul.f32 %v5089, %v5235
        %v5237 = vsub.f32 1.0, %v5236
        %v5238 = vmul.f32 %v5235, %v5237
        %v5239 = vadd.f32 %v5235, %v5238
        %vm5240 = vweird.f32 %v5089
        %vm5241 = vweird.f32 %v5235
        %vm5242 = vmor %vm5240, %vm5241
        %v5243 = vsel %vm5242, %v5235, %v5239
        %v5244 = vand.u32 2147483647, %v5089
        %vm5245 = vcmp.eq.f32.partialorder %v5244, 8.507059e+37
        %v5246 = vand.u32 %v5089, 2147483648
        %v5247 = vor.u32 1.1754944e-38, %v5246
        %v5248 = vsel %vm5245, %v5247, %v5243
        %v5249 = vmul.f32 1.0, %v5248
        %v5250 = vrcp.pop %v5090
        %v5251 = vmul.f32 %v5090, %v5250
        %v5252 = vsub.f32 1.0, %v5251
        %v5253 = vmul.f32 %v5250, %v5252
        %v5254 = vadd.f32 %v5250, %v5253
        %vm5255 = vweird.f32 %v5090
        %vm5256 = vweird.f32 %v5250
        %vm5257 = vmor %vm5255, %vm5256
        %v5258 = vsel %vm5257, %v5250, %v5254
        %v5259 = vand.u32 2147483647, %v5090
        %vm5260 = vcmp.eq.f32.partialorder %v5259, 8.507059e+37
        %v5261 = vand.u32 %v5090, 2147483648
        %v5262 = vor.u32 1.1754944e-38, %v5261
        %v5263 = vsel %vm5260, %v5262, %v5258
        %v5264 = vmul.f32 1.0, %v5263
        %v5265 = vrcp.pop %v5091
        %v5266 = vmul.f32 %v5091, %v5265
        %v5267 = vsub.f32 1.0, %v5266
        %v5268 = vmul.f32 %v5265, %v5267
        %v5269 = vadd.f32 %v5265, %v5268
        %vm5270 = vweird.f32 %v5091
        %vm5271 = vweird.f32 %v5265
        %vm5272 = vmor %vm5270, %vm5271
        %v5273 = vsel %vm5272, %v5265, %v5269
        %v5274 = vand.u32 2147483647, %v5091
        %vm5275 = vcmp.eq.f32.partialorder %v5274, 8.507059e+37
        %v5276 = vand.u32 %v5091, 2147483648
        %v5277 = vor.u32 1.1754944e-38, %v5276
        %v5278 = vsel %vm5275, %v5277, %v5273
        %v5279 = vmul.f32 1.0, %v5278
        %v5280 = vrcp.pop %v5092
        %v5281 = vmul.f32 %v5092, %v5280
        %v5282 = vsub.f32 1.0, %v5281
        %v5283 = vmul.f32 %v5280, %v5282
        %v5284 = vadd.f32 %v5280, %v5283
        %vm5285 = vweird.f32 %v5092
        %vm5286 = vweird.f32 %v5280
        %vm5287 = vmor %vm5285, %vm5286
        %v5288 = vsel %vm5287, %v5280, %v5284
        %v5289 = vand.u32 2147483647, %v5092
        %vm5290 = vcmp.eq.f32.partialorder %v5289, 8.507059e+37
        %v5291 = vand.u32 %v5092, 2147483648
        %v5292 = vor.u32 1.1754944e-38, %v5291
        %v5293 = vsel %vm5290, %v5292, %v5288
        %v5294 = vmul.f32 1.0, %v5293
        %v5295 = vrcp.pop %v5093
        %v5296 = vmul.f32 %v5093, %v5295
        %v5297 = vsub.f32 1.0, %v5296
        %v5298 = vmul.f32 %v5295, %v5297
        %v5299 = vadd.f32 %v5295, %v5298
        %vm5300 = vweird.f32 %v5093
        %vm5301 = vweird.f32 %v5295
        %vm5302 = vmor %vm5300, %vm5301
        %v5303 = vsel %vm5302, %v5295, %v5299
        %v5304 = vand.u32 2147483647, %v5093
        %vm5305 = vcmp.eq.f32.partialorder %v5304, 8.507059e+37
        %v5306 = vand.u32 %v5093, 2147483648
        %v5307 = vor.u32 1.1754944e-38, %v5306
        %v5308 = vsel %vm5305, %v5307, %v5303
        %v5309 = vmul.f32 1.0, %v5308
        %v5310 = vrcp.pop %v5094
        %v5311 = vmul.f32 %v5094, %v5310
        %v5312 = vsub.f32 1.0, %v5311
        %v5313 = vmul.f32 %v5310, %v5312
        %v5314 = vadd.f32 %v5310, %v5313
        %vm5315 = vweird.f32 %v5094
        %vm5316 = vweird.f32 %v5310
        %vm5317 = vmor %vm5315, %vm5316
        %v5318 = vsel %vm5317, %v5310, %v5314
        %v5319 = vand.u32 2147483647, %v5094
        %vm5320 = vcmp.eq.f32.partialorder %v5319, 8.507059e+37
        %v5321 = vand.u32 %v5094, 2147483648
        %v5322 = vor.u32 1.1754944e-38, %v5321
        %v5323 = vsel %vm5320, %v5322, %v5318
        %v5324 = vmul.f32 1.0, %v5323
        %v5325 = vrcp.pop %v5095
        %v5326 = vmul.f32 %v5095, %v5325
        %v5327 = vsub.f32 1.0, %v5326
        %v5328 = vmul.f32 %v5325, %v5327
        %v5329 = vadd.f32 %v5325, %v5328
        %vm5330 = vweird.f32 %v5095
        %vm5331 = vweird.f32 %v5325
        %vm5332 = vmor %vm5330, %vm5331
        %v5333 = vsel %vm5332, %v5325, %v5329
        %v5334 = vand.u32 2147483647, %v5095
        %vm5335 = vcmp.eq.f32.partialorder %v5334, 8.507059e+37
        %v5336 = vand.u32 %v5095, 2147483648
        %v5337 = vor.u32 1.1754944e-38, %v5336
        %v5338 = vsel %vm5335, %v5337, %v5333
        %v5339 = vmul.f32 1.0, %v5338
        %v5340 = vrcp.pop %v5096
        %v5341 = vmul.f32 %v5096, %v5340
        %v5342 = vsub.f32 1.0, %v5341
        %v5343 = vmul.f32 %v5340, %v5342
        %v5344 = vadd.f32 %v5340, %v5343
        %vm5345 = vweird.f32 %v5096
        %vm5346 = vweird.f32 %v5340
        %vm5347 = vmor %vm5345, %vm5346
        %v5348 = vsel %vm5347, %v5340, %v5344
        %v5349 = vand.u32 2147483647, %v5096
        %vm5350 = vcmp.eq.f32.partialorder %v5349, 8.507059e+37
        %v5351 = vand.u32 %v5096, 2147483648
        %v5352 = vor.u32 1.1754944e-38, %v5351
        %v5353 = vsel %vm5350, %v5352, %v5348
        %v5354 = vmul.f32 1.0, %v5353
        %v5355 = vrcp.pop %v5097
        %v5356 = vmul.f32 %v5097, %v5355
        %v5357 = vsub.f32 1.0, %v5356
        %v5358 = vmul.f32 %v5355, %v5357
        %v5359 = vadd.f32 %v5355, %v5358
        %vm5360 = vweird.f32 %v5097
        %vm5361 = vweird.f32 %v5355
        %vm5362 = vmor %vm5360, %vm5361
        %v5363 = vsel %vm5362, %v5355, %v5359
        %v5364 = vand.u32 2147483647, %v5097
        %vm5365 = vcmp.eq.f32.partialorder %v5364, 8.507059e+37
        %v5366 = vand.u32 %v5097, 2147483648
        %v5367 = vor.u32 1.1754944e-38, %v5366
        %v5368 = vsel %vm5365, %v5367, %v5363
        %v5369 = vmul.f32 1.0, %v5368
        %v5370 = vrcp.pop %v5098
        %v5371 = vmul.f32 %v5098, %v5370
        %v5372 = vsub.f32 1.0, %v5371
        %v5373 = vmul.f32 %v5370, %v5372
        %v5374 = vadd.f32 %v5370, %v5373
        %vm5375 = vweird.f32 %v5098
        %vm5376 = vweird.f32 %v5370
        %vm5377 = vmor %vm5375, %vm5376
        %v5378 = vsel %vm5377, %v5370, %v5374
        %v5379 = vand.u32 2147483647, %v5098
        %vm5380 = vcmp.eq.f32.partialorder %v5379, 8.507059e+37
        %v5381 = vand.u32 %v5098, 2147483648
        %v5382 = vor.u32 1.1754944e-38, %v5381
        %v5383 = vsel %vm5380, %v5382, %v5378
        %v5384 = vmul.f32 1.0, %v5383
        %v5385 = vrcp.pop %v5099
        %v5386 = vmul.f32 %v5099, %v5385
        %v5387 = vsub.f32 1.0, %v5386
        %v5388 = vmul.f32 %v5385, %v5387
        %v5389 = vadd.f32 %v5385, %v5388
        %vm5390 = vweird.f32 %v5099
        %vm5391 = vweird.f32 %v5385
        %vm5392 = vmor %vm5390, %vm5391
        %v5393 = vsel %vm5392, %v5385, %v5389
        %v5394 = vand.u32 2147483647, %v5099
        %vm5395 = vcmp.eq.f32.partialorder %v5394, 8.507059e+37
        %v5396 = vand.u32 %v5099, 2147483648
        %v5397 = vor.u32 1.1754944e-38, %v5396
        %v5398 = vsel %vm5395, %v5397, %v5393
        %v5399 = vmul.f32 1.0, %v5398
        %vm5400 = vcmask 7168
        %5401 = vst.msk [vmem:[%s391] sm:$0xff] %vm5400, %v5114
        %5402 = vst.msk [vmem:[%s391 + $0x8] sm:$0xff] %vm5400, %v5129
        %5403 = vst.msk [vmem:[%s391 + $0x10] sm:$0xff] %vm5400, %v5144
        %5404 = vst.msk [vmem:[%s391 + $0x18] sm:$0xff] %vm5400, %v5159
        %5405 = vst.msk [vmem:[%s391 + $0x20] sm:$0xff] %vm5400, %v5174
        %5406 = vst.msk [vmem:[%s391 + $0x28] sm:$0xff] %vm5400, %v5189
        %5407 = vst.msk [vmem:[%s391 + $0x30] sm:$0xff] %vm5400, %v5204
        %5408 = vst.msk [vmem:[%s391 + $0x38] sm:$0xff] %vm5400, %v5219
        %5409 = vst.msk [vmem:[%s391 + $0x40] sm:$0xff] %vm5400, %v5234
        %5410 = vst.msk [vmem:[%s391 + $0x48] sm:$0xff] %vm5400, %v5249
        %5411 = vst.msk [vmem:[%s391 + $0x50] sm:$0xff] %vm5400, %v5264
        %5412 = vst.msk [vmem:[%s391 + $0x58] sm:$0xff] %vm5400, %v5279
        %5413 = vst.msk [vmem:[%s391 + $0x60] sm:$0xff] %vm5400, %v5294
        %5414 = vst.msk [vmem:[%s391 + $0x68] sm:$0xff] %vm5400, %v5309
        %5415 = vst.msk [vmem:[%s391 + $0x70] sm:$0xff] %vm5400, %v5324
        %5416 = vst.msk [vmem:[%s391 + $0x78] sm:$0xff] %vm5400, %v5339
        %5417 = vst.msk [vmem:[%s391 + $0x80] sm:$0xff] %vm5400, %v5354
        %5418 = vst.msk [vmem:[%s391 + $0x88] sm:$0xff] %vm5400, %v5369
        %5419 = vst.msk [vmem:[%s391 + $0x90] sm:$0xff] %vm5400, %v5384
        %5420 = vst.msk [vmem:[%s391 + $0x98] sm:$0xff] %vm5400, %v5399
        %s5421 = smul.u32 20, %s26
        %p5422 = scmp.lt.s32.totalorder %s5421, 39
        %s5423 = scalar_select %p5422, %s5421, 39
        %s5424 = smul.addr %s5423, 8
        %s5425 = scalar_lea.vmem %s9, %s5424
        // Predicated region
        $region69: #{tpu_custom_call.1} parent=55 // pred_check
          %p5426 = pneg %p238
        $region70: #{tpu_custom_call.1} parent=55 // pred_check_branch
          %5428 = sbr.rel (%p5426) target = $region72
        $region71: #{tpu_custom_call.1} parent=55 // pred_region
          %s5429 = smul.u32 20, %s26
        $region72: #{tpu_custom_call.1} parent=55 // pred_fallthru
          _
      $region56: #{tpu_custom_call.1} parent=5 // pred_fallthru
        _
      %p5430 = scmp.le.s32.totalorder 2, %s21
      // Predicated region
      $region73: #{tpu_custom_call.1} parent=5 // pred_check
        %p5431 = pneg %p5430
      $region74: #{tpu_custom_call.1} parent=5 // pred_check_branch
        %5433 = sbr.rel (%p5431) target = $region76
      $region75: #{tpu_custom_call.1} parent=5 // pred_region
        %s5434 = ssub.s32 %s21, 2
        // Predicated region
        $region77: #{tpu_custom_call.1} parent=75 // pred_check
          %p5435 = pneg %p244
        $region78: #{tpu_custom_call.1} parent=75 // pred_check_branch
          %5437 = sbr.rel (%p5435) target = $region80
        $region79: #{tpu_custom_call.1} parent=75 // pred_region
          %s5438 = smul.u32 20, %s27
          %p5439 = scmp.lt.s32.totalorder %s5438, 39
          %s5440 = scalar_select %p5439, %s5438, 39
          %s5441 = smul.addr %s5440, 8
          %s5442 = scalar_lea.vmem %s9, %s5441
        $region80: #{tpu_custom_call.1} parent=75 // pred_fallthru
          _
      $region76: #{tpu_custom_call.1} parent=5 // pred_fallthru
        _
    $region6: #{tpu_custom_call.1} parent=1 // loop_footer
      %s25 = sadd.s32 1, %s21
    $region7: #{tpu_custom_call.1} parent=1 // loop_footer_branch
      %20 = sbr.rel target = $region3
    $region8: #{tpu_custom_call.1} parent=1 // loop_exit
      _
    %5443 = vsyncpa [#allocation4], 1
    %s5444 = scalar_lea.sflag [#allocation4], 1
    %5445 = vsyncpa %s5444, 1
    %5446 = vsyncpa [#allocation6], 1

</llo_original>
